<compile_context>
chip_gen: v7x
topology: tpu7x:2x2x1
jax: 0.10.0
libtpu: 0.0.40
codegen_flags: <defaults>
</compile_context>

<pallas_src>
import functools
import math

import jax
import jax.numpy as jnp
from jax.experimental import pallas as pl
from jax.experimental.pallas import tpu as pltpu


CFG = dict(
    vocab_size=100,
    max_pos=16,
    type_vocab=2,
    hidden=32,
    num_heads=4,
    intermediate=64,
    num_layers=2,
    num_labels=3,
    cls_pad=128,        # lane-dense width for the classifier output
)


# ----------------------------- fused Pallas kernel --------------------------

def _fused_bert_kernel(
    emb_ref, mask_ref,
    emb_ln_g_ref, emb_ln_b_ref,
    wqkv_ref, bqkv_ref, wo_ref, bo_ref,
    attn_ln_g_ref, attn_ln_b_ref,
    w1_ref, b1_ref, w2_ref, b2_ref,
    ffn_ln_g_ref, ffn_ln_b_ref,
    pool_w_ref, pool_b_ref, cls_w_ref, cls_b_ref,
    out_ref,
    ctx_ref,
    *, num_layers, num_heads, batch, seq,
):
    """Whole BERT-encoder forward in one kernel. Everything lives in VMEM."""
    H = emb_ref.shape[-1]
    Dh = H // num_heads

    def layernorm(x, g, b):
        mu = jnp.mean(x, axis=-1, keepdims=True)
        d = x - mu
        var = jnp.mean(d * d, axis=-1, keepdims=True)
        return d * jax.lax.rsqrt(var + 1e-12) * g + b

    def gelu(x):
        # TODO(synk): tanh-approximate GELU; HF BERT default is the exact erf GELU.
        return 0.5 * x * (1.0 + jnp.tanh(0.7978845608028654 * (x + 0.044715 * x * x * x)))

    def bdot(a, w):
        # bf16 MXU operands, f32 accumulation.
        return jnp.dot(a.astype(jnp.bfloat16), w, preferred_element_type=jnp.float32)

    def bdot_t(a, b):
        # a @ b^T with bf16 operands, f32 accumulation (attention scores).
        return jax.lax.dot_general(
            a.astype(jnp.bfloat16), b.astype(jnp.bfloat16),
            (((1,), (1,)), ((), ())),
            preferred_element_type=jnp.float32)

    # --- embeddings -> LayerNorm (no residual) ---
    h = layernorm(emb_ref[...], emb_ln_g_ref[...], emb_ln_b_ref[...])   # (B*S, H) f32
    mask_add = mask_ref[...]                                            # (B, S) additive

    # --- encoder layers (statically unrolled) ---
    for l in range(num_layers):
        # fused QKV projection: (B*S, 3H). Q columns are pre-scaled by 1/sqrt(Dh).
        qkv = bdot(h, wqkv_ref[l]) + bqkv_ref[l]

        # multi-head attention, per (batch, head) with static 2-D slices (f32 softmax)
        for b in range(batch):
            r0 = b * seq
            m_row = mask_add[b:b + 1, :]                                # (1, S) key mask
            for hd in range(num_heads):
                c0 = hd * Dh
                q = qkv[r0:r0 + seq, c0:c0 + Dh]                        # (S, Dh)
                k = qkv[r0:r0 + seq, H + c0:H + c0 + Dh]
                v = qkv[r0:r0 + seq, 2 * H + c0:2 * H + c0 + Dh]
                s = bdot_t(q, k) + m_row                                # (S, S) scaled scores
                s = s - jnp.max(s, axis=-1, keepdims=True)
                p = jnp.exp(s)
                p = p * pl.reciprocal(jnp.sum(p, axis=-1, keepdims=True), approx=True)
                ctx_ref[r0:r0 + seq, c0:c0 + Dh] = bdot(p, v.astype(jnp.bfloat16))

        # output projection + fused residual-add + LayerNorm
        attn_out = bdot(ctx_ref[...], wo_ref[l]) + bo_ref[l]
        h = layernorm(attn_out + h, attn_ln_g_ref[l], attn_ln_b_ref[l])

        # feed-forward with fused bias+GELU and residual+LayerNorm epilogues
        ffn = gelu(bdot(h, w1_ref[l]) + b1_ref[l])
        ffn = bdot(ffn, w2_ref[l]) + b2_ref[l]
        h = layernorm(ffn + h, ffn_ln_g_ref[l], ffn_ln_b_ref[l])

    # --- pooler (tanh on the CLS token) + classifier ---
    # Gather CLS rows once -> (B, H), then a single pooler matmul and a single
    # lane-dense (B, 128) classifier matmul + one unmasked full-block store.
    cls_rows = jnp.concatenate(
        [h[b * seq:b * seq + 1, :] for b in range(batch)], axis=0)       # (B, H)
    pooled = jnp.tanh(bdot(cls_rows, pool_w_ref[...]) + pool_b_ref[...])  # (B, H)
    # dropout(p=0.1): identity in eval mode
    out_ref[...] = bdot(pooled, cls_w_ref[...]) + cls_b_ref[...]          # (B, 128)


# ----------------------------- parameters -----------------------------------

def init_params(key):
    H = CFG["hidden"]
    I = CFG["intermediate"]
    L = CFG["num_layers"]
    NP = CFG["cls_pad"]
    Dh = H // CFG["num_heads"]
    q_scale = 1.0 / math.sqrt(Dh)
    std = 0.02

    def nrm(k, shape):
        return std * jax.random.normal(k, shape, dtype=jnp.float32)

    keys = iter(jax.random.split(key, 32))

    p = {
        "word_emb": nrm(next(keys), (CFG["vocab_size"], H)),
        "pos_emb": nrm(next(keys), (CFG["max_pos"], H)),
        "type_emb": nrm(next(keys), (CFG["type_vocab"], H)),
        "emb_ln_g": jnp.ones((1, H), jnp.float32),
        "emb_ln_b": jnp.zeros((1, H), jnp.float32),
        "pool_w": nrm(next(keys), (H, H)).astype(jnp.bfloat16),
        "pool_b": jnp.zeros((1, H), jnp.float32),
    }

    cls_w = nrm(next(keys), (H, CFG["num_labels"]))
    p["cls_w_pad"] = (
        jnp.zeros((H, NP), jnp.float32).at[:, :CFG["num_labels"]].set(cls_w)
    ).astype(jnp.bfloat16)
    p["cls_b_pad"] = jnp.zeros((1, NP), jnp.float32)

    wqkv, bqkv, wo, bo = [], [], [], []
    aln_g, aln_b, w1, b1, w2, b2, fln_g, fln_b = [], [], [], [], [], [], [], []
    for _ in range(L):
        # Fold the 1/sqrt(Dh) attention scale into the Q projection (one-time weight
        # fold; mathematically identical to scaling the scores in the kernel).
        wq_ = nrm(next(keys), (H, H)) * q_scale
        wk_ = nrm(next(keys), (H, H))
        wv_ = nrm(next(keys), (H, H))
        wqkv.append(jnp.concatenate([wq_, wk_, wv_], axis=1))     # (H, 3H)
        bq_ = jnp.zeros((1, H), jnp.float32) * q_scale            # scaled Q bias (zero here)
        bqkv.append(jnp.concatenate(
            [bq_, jnp.zeros((1, H), jnp.float32), jnp.zeros((1, H), jnp.float32)], axis=1))
        wo.append(nrm(next(keys), (H, H)))
        bo.append(jnp.zeros((1, H), jnp.float32))
        aln_g.append(jnp.ones((1, H), jnp.float32))
        aln_b.append(jnp.zeros((1, H), jnp.float32))
        w1.append(nrm(next(keys), (H, I)))
        b1.append(jnp.zeros((1, I), jnp.float32))
        w2.append(nrm(next(keys), (I, H)))
        b2.append(jnp.zeros((1, H), jnp.float32))
        fln_g.append(jnp.ones((1, H), jnp.float32))
        fln_b.append(jnp.zeros((1, H), jnp.float32))

    p["wqkv"] = jnp.stack(wqkv).astype(jnp.bfloat16)   # (L, H, 3H)
    p["bqkv"] = jnp.stack(bqkv)                        # (L, 1, 3H)
    p["wo"] = jnp.stack(wo).astype(jnp.bfloat16)       # (L, H, H)
    p["bo"] = jnp.stack(bo)
    p["attn_ln_g"] = jnp.stack(aln_g)                  # (L, 1, H)
    p["attn_ln_b"] = jnp.stack(aln_b)
    p["w_ffn1"] = jnp.stack(w1).astype(jnp.bfloat16)   # (L, H, I)
    p["b_ffn1"] = jnp.stack(b1)
    p["w_ffn2"] = jnp.stack(w2).astype(jnp.bfloat16)   # (L, I, H)
    p["b_ffn2"] = jnp.stack(b2)
    p["ffn_ln_g"] = jnp.stack(fln_g)
    p["ffn_ln_b"] = jnp.stack(fln_b)
    return p


# ----------------------------- forward pass ----------------------------------

@jax.jit
def dental_forward(params, input_ids, attention_mask):
    """Mirrors DentalRecommendationSystem.forward: bert -> pooler -> dropout -> classifier."""
    B, S = input_ids.shape
    H = CFG["hidden"]

    # embeddings (gather stays in plain-JAX glue — no clean Pallas equivalent needed here)
    word = jnp.take(params["word_emb"], input_ids, axis=0)          # (B, S, H)
    pos = params["pos_emb"][:S][None, :, :]                         # (1, S, H)
    typ = params["type_emb"][0][None, None, :]                      # token_type_ids = 0
    emb = (word + pos + typ).reshape(B * S, H).astype(jnp.float32)

    # additive attention mask, BERT-style: (1 - mask) * -1e9
    mask_add = ((1.0 - attention_mask.astype(jnp.float32)) * -1e9).reshape(B, S)

    kern = functools.partial(
        _fused_bert_kernel,
        num_layers=CFG["num_layers"],
        num_heads=CFG["num_heads"],
        batch=B,
        seq=S,
    )

    vmem = pl.BlockSpec(memory_space=pltpu.MemorySpace.VMEM)
    logits_pad = pl.pallas_call(
        kern,
        out_shape=jax.ShapeDtypeStruct((B, CFG["cls_pad"]), jnp.float32),
        in_specs=[vmem] * 20,
        out_specs=vmem,
        scratch_shapes=[pltpu.VMEM((B * S, H), jnp.float32)],       # attention context
    )(
        emb, mask_add,
        params["emb_ln_g"], params["emb_ln_b"],
        params["wqkv"], params["bqkv"], params["wo"], params["bo"],
        params["attn_ln_g"], params["attn_ln_b"],
        params["w_ffn1"], params["b_ffn1"], params["w_ffn2"], params["b_ffn2"],
        params["ffn_ln_g"], params["ffn_ln_b"],
        params["pool_w"], params["pool_b"], params["cls_w_pad"], params["cls_b_pad"],
    )

    return logits_pad[:, :CFG["num_labels"]]


# ----------------------------- main ------------------------------------------

if __name__ == "__main__":
    key = jax.random.PRNGKey(0)
    k_param, k_ids = jax.random.split(key)

    params = init_params(k_param)

    B, S = 2, 8
    input_ids = jax.random.randint(k_ids, (B, S), 0, CFG["vocab_size"], dtype=jnp.int32)
    attention_mask = jnp.array(
        [[1, 1, 1, 1, 1, 1, 1, 1],
         [1, 1, 1, 1, 1, 0, 0, 0]], dtype=jnp.int32)

    logits = dental_forward(params, input_ids, attention_mask)
    logits = jax.block_until_ready(logits)
    assert logits.shape == (B, CFG["num_labels"])
    assert bool(jnp.all(jnp.isfinite(logits)))
    print("KERNEL_OK")
</pallas_src>

<mosaic_0001>
module attributes {stable_mosaic.version = 11 : i64} {
  func.func @_fused_bert_kernel(%arg0: memref<16x32xf32, #tpu.memory_space<vmem>>, %arg1: memref<2x8xf32, #tpu.memory_space<vmem>>, %arg2: memref<1x32xf32, #tpu.memory_space<vmem>>, %arg3: memref<1x32xf32, #tpu.memory_space<vmem>>, %arg4: memref<2x32x96xbf16, #tpu.memory_space<vmem>>, %arg5: memref<2x1x96xf32, #tpu.memory_space<vmem>>, %arg6: memref<2x32x32xbf16, #tpu.memory_space<vmem>>, %arg7: memref<2x1x32xf32, #tpu.memory_space<vmem>>, %arg8: memref<2x1x32xf32, #tpu.memory_space<vmem>>, %arg9: memref<2x1x32xf32, #tpu.memory_space<vmem>>, %arg10: memref<2x32x64xbf16, #tpu.memory_space<vmem>>, %arg11: memref<2x1x64xf32, #tpu.memory_space<vmem>>, %arg12: memref<2x64x32xbf16, #tpu.memory_space<vmem>>, %arg13: memref<2x1x32xf32, #tpu.memory_space<vmem>>, %arg14: memref<2x1x32xf32, #tpu.memory_space<vmem>>, %arg15: memref<2x1x32xf32, #tpu.memory_space<vmem>>, %arg16: memref<32x32xbf16, #tpu.memory_space<vmem>>, %arg17: memref<1x32xf32, #tpu.memory_space<vmem>>, %arg18: memref<32x128xbf16, #tpu.memory_space<vmem>>, %arg19: memref<1x128xf32, #tpu.memory_space<vmem>>, %arg20: memref<2x128xf32, #tpu.memory_space<vmem>>, %arg21: memref<16x32xf32, #tpu.memory_space<vmem>>) attributes {dimension_semantics = [], scalar_prefetch = 0 : i64, scratch_operands = 1 : i64, tpu.core_type = #tpu.core_type<tc>} {
    %c0 = arith.constant 0 : index
    %c0_0 = arith.constant 0 : index
    %0 = vector.load %arg0[%c0, %c0_0] : memref<16x32xf32, #tpu.memory_space<vmem>>, vector<16x32xf32>
    %c0_1 = arith.constant 0 : index
    %c0_2 = arith.constant 0 : index
    %1 = vector.load %arg2[%c0_1, %c0_2] : memref<1x32xf32, #tpu.memory_space<vmem>>, vector<1x32xf32>
    %c0_3 = arith.constant 0 : index
    %c0_4 = arith.constant 0 : index
    %2 = vector.load %arg3[%c0_3, %c0_4] : memref<1x32xf32, #tpu.memory_space<vmem>>, vector<1x32xf32>
    %cst = arith.constant dense<0.000000e+00> : vector<16xf32>
    %3 = vector.multi_reduction <add>, %0, %cst [1] : vector<16x32xf32> to vector<16xf32>
    %4 = vector.shape_cast %3 : vector<16xf32> to vector<16x1xf32>
    %cst_5 = arith.constant 3.200000e+01 : f32
    %5 = vector.broadcast %cst_5 : f32 to vector<16x1xf32>
    %6 = arith.divf %4, %5 : vector<16x1xf32>
    %7 = vector.broadcast %6 : vector<16x1xf32> to vector<16x32xf32>
    %8 = arith.subf %0, %7 : vector<16x32xf32>
    %9 = arith.mulf %8, %8 : vector<16x32xf32>
    %cst_6 = arith.constant dense<0.000000e+00> : vector<16xf32>
    %10 = vector.multi_reduction <add>, %9, %cst_6 [1] : vector<16x32xf32> to vector<16xf32>
    %11 = vector.shape_cast %10 : vector<16xf32> to vector<16x1xf32>
    %cst_7 = arith.constant 3.200000e+01 : f32
    %12 = vector.broadcast %cst_7 : f32 to vector<16x1xf32>
    %13 = arith.divf %11, %12 : vector<16x1xf32>
    %cst_8 = arith.constant 9.99999996E-13 : f32
    %14 = vector.broadcast %cst_8 : f32 to vector<16x1xf32>
    %15 = arith.addf %13, %14 : vector<16x1xf32>
    %16 = math.rsqrt %15 : vector<16x1xf32>
    %17 = vector.broadcast %16 : vector<16x1xf32> to vector<16x32xf32>
    %18 = arith.mulf %8, %17 : vector<16x32xf32>
    %19 = vector.broadcast %1 : vector<1x32xf32> to vector<16x32xf32>
    %20 = arith.mulf %18, %19 : vector<16x32xf32>
    %21 = vector.broadcast %2 : vector<1x32xf32> to vector<16x32xf32>
    %22 = arith.addf %20, %21 : vector<16x32xf32>
    %c0_9 = arith.constant 0 : index
    %c0_10 = arith.constant 0 : index
    %23 = vector.load %arg1[%c0_9, %c0_10] : memref<2x8xf32, #tpu.memory_space<vmem>>, vector<2x8xf32>
    %c0_11 = arith.constant 0 : index
    %c0_12 = arith.constant 0 : index
    %c0_13 = arith.constant 0 : index
    %24 = vector.load %arg4[%c0_11, %c0_12, %c0_13] : memref<2x32x96xbf16, #tpu.memory_space<vmem>>, vector<1x32x96xbf16>
    %25 = vector.shape_cast %24 : vector<1x32x96xbf16> to vector<32x96xbf16>
    %26 = arith.truncf %22 : vector<16x32xf32> to vector<16x32xbf16>
    %cst_14 = arith.constant dense<0.000000e+00> : vector<16x96xf32>
    %27 = tpu.matmul %26, %25, %cst_14 {dimension_numbers = #tpu.dot_dimension_numbers<[1], [0], [0], [1], [0, 0, 1, 1], [], []>} : vector<16x32xbf16>, vector<32x96xbf16>, vector<16x96xf32> -> vector<16x96xf32>
    %c0_15 = arith.constant 0 : index
    %c0_16 = arith.constant 0 : index
    %c0_17 = arith.constant 0 : index
    %28 = vector.load %arg5[%c0_15, %c0_16, %c0_17] : memref<2x1x96xf32, #tpu.memory_space<vmem>>, vector<1x1x96xf32>
    %29 = vector.shape_cast %28 : vector<1x1x96xf32> to vector<1x96xf32>
    %30 = vector.broadcast %29 : vector<1x96xf32> to vector<16x96xf32>
    %31 = arith.addf %27, %30 : vector<16x96xf32>
    %32 = vector.extract_strided_slice %23 {offsets = [0, 0], sizes = [1, 8], strides = [1, 1]} : vector<2x8xf32> to vector<1x8xf32>
    %33 = vector.extract_strided_slice %31 {offsets = [0, 0], sizes = [8, 8], strides = [1, 1]} : vector<16x96xf32> to vector<8x8xf32>
    %34 = vector.extract_strided_slice %31 {offsets = [0, 32], sizes = [8, 8], strides = [1, 1]} : vector<16x96xf32> to vector<8x8xf32>
    %35 = vector.extract_strided_slice %31 {offsets = [0, 64], sizes = [8, 8], strides = [1, 1]} : vector<16x96xf32> to vector<8x8xf32>
    %36 = arith.truncf %33 : vector<8x8xf32> to vector<8x8xbf16>
    %37 = arith.truncf %34 : vector<8x8xf32> to vector<8x8xbf16>
    %cst_18 = arith.constant dense<0.000000e+00> : vector<8x8xf32>
    %38 = tpu.matmul %36, %37, %cst_18 {dimension_numbers = #tpu.dot_dimension_numbers<[1], [1], [0], [0], [0, 0, 1, 0], [], []>} : vector<8x8xbf16>, vector<8x8xbf16>, vector<8x8xf32> -> vector<8x8xf32>
    %39 = vector.broadcast %32 : vector<1x8xf32> to vector<8x8xf32>
    %40 = arith.addf %38, %39 : vector<8x8xf32>
    %cst_19 = arith.constant dense<0xFF800000> : vector<8xf32>
    %41 = vector.multi_reduction <maximumf>, %40, %cst_19 [1] : vector<8x8xf32> to vector<8xf32>
    %42 = vector.shape_cast %41 : vector<8xf32> to vector<8x1xf32>
    %43 = vector.broadcast %42 : vector<8x1xf32> to vector<8x8xf32>
    %44 = arith.subf %40, %43 : vector<8x8xf32>
    %45 = math.exp %44 : vector<8x8xf32>
    %cst_20 = arith.constant dense<0.000000e+00> : vector<8xf32>
    %46 = vector.multi_reduction <add>, %45, %cst_20 [1] : vector<8x8xf32> to vector<8xf32>
    %47 = vector.shape_cast %46 : vector<8xf32> to vector<8x1xf32>
    %48 = tpu.reciprocal %47 {approx = true} : vector<8x1xf32> -> vector<8x1xf32>
    %49 = vector.broadcast %48 : vector<8x1xf32> to vector<8x8xf32>
    %50 = arith.mulf %45, %49 : vector<8x8xf32>
    %51 = arith.truncf %35 : vector<8x8xf32> to vector<8x8xbf16>
    %52 = arith.truncf %50 : vector<8x8xf32> to vector<8x8xbf16>
    %cst_21 = arith.constant dense<0.000000e+00> : vector<8x8xf32>
    %53 = tpu.matmul %52, %51, %cst_21 {dimension_numbers = #tpu.dot_dimension_numbers<[1], [0], [0], [1], [0, 0, 1, 1], [], []>} : vector<8x8xbf16>, vector<8x8xbf16>, vector<8x8xf32> -> vector<8x8xf32>
    %c0_22 = arith.constant 0 : index
    %c0_23 = arith.constant 0 : index
    %54 = vector.load %arg21[%c0_22, %c0_23] : memref<16x32xf32, #tpu.memory_space<vmem>>, vector<8x8xf32>
    tpu.vector_store %arg21[%c0_22, %c0_23], %53 {strides = array<i32>} : memref<16x32xf32, #tpu.memory_space<vmem>>, vector<8x8xf32>,
    %55 = vector.extract_strided_slice %31 {offsets = [0, 8], sizes = [8, 8], strides = [1, 1]} : vector<16x96xf32> to vector<8x8xf32>
    %56 = vector.extract_strided_slice %31 {offsets = [0, 40], sizes = [8, 8], strides = [1, 1]} : vector<16x96xf32> to vector<8x8xf32>
    %57 = vector.extract_strided_slice %31 {offsets = [0, 72], sizes = [8, 8], strides = [1, 1]} : vector<16x96xf32> to vector<8x8xf32>
    %58 = arith.truncf %55 : vector<8x8xf32> to vector<8x8xbf16>
    %59 = arith.truncf %56 : vector<8x8xf32> to vector<8x8xbf16>
    %cst_24 = arith.constant dense<0.000000e+00> : vector<8x8xf32>
    %60 = tpu.matmul %58, %59, %cst_24 {dimension_numbers = #tpu.dot_dimension_numbers<[1], [1], [0], [0], [0, 0, 1, 0], [], []>} : vector<8x8xbf16>, vector<8x8xbf16>, vector<8x8xf32> -> vector<8x8xf32>
    %61 = vector.broadcast %32 : vector<1x8xf32> to vector<8x8xf32>
    %62 = arith.addf %60, %61 : vector<8x8xf32>
    %cst_25 = arith.constant dense<0xFF800000> : vector<8xf32>
    %63 = vector.multi_reduction <maximumf>, %62, %cst_25 [1] : vector<8x8xf32> to vector<8xf32>
    %64 = vector.shape_cast %63 : vector<8xf32> to vector<8x1xf32>
    %65 = vector.broadcast %64 : vector<8x1xf32> to vector<8x8xf32>
    %66 = arith.subf %62, %65 : vector<8x8xf32>
    %67 = math.exp %66 : vector<8x8xf32>
    %cst_26 = arith.constant dense<0.000000e+00> : vector<8xf32>
    %68 = vector.multi_reduction <add>, %67, %cst_26 [1] : vector<8x8xf32> to vector<8xf32>
    %69 = vector.shape_cast %68 : vector<8xf32> to vector<8x1xf32>
    %70 = tpu.reciprocal %69 {approx = true} : vector<8x1xf32> -> vector<8x1xf32>
    %71 = vector.broadcast %70 : vector<8x1xf32> to vector<8x8xf32>
    %72 = arith.mulf %67, %71 : vector<8x8xf32>
    %73 = arith.truncf %57 : vector<8x8xf32> to vector<8x8xbf16>
    %74 = arith.truncf %72 : vector<8x8xf32> to vector<8x8xbf16>
    %cst_27 = arith.constant dense<0.000000e+00> : vector<8x8xf32>
    %75 = tpu.matmul %74, %73, %cst_27 {dimension_numbers = #tpu.dot_dimension_numbers<[1], [0], [0], [1], [0, 0, 1, 1], [], []>} : vector<8x8xbf16>, vector<8x8xbf16>, vector<8x8xf32> -> vector<8x8xf32>
    %c0_28 = arith.constant 0 : index
    %c8 = arith.constant 8 : index
    %76 = vector.load %arg21[%c0_28, %c8] : memref<16x32xf32, #tpu.memory_space<vmem>>, vector<8x8xf32>
    tpu.vector_store %arg21[%c0_28, %c8], %75 {strides = array<i32>} : memref<16x32xf32, #tpu.memory_space<vmem>>, vector<8x8xf32>,
    %77 = vector.extract_strided_slice %31 {offsets = [0, 16], sizes = [8, 8], strides = [1, 1]} : vector<16x96xf32> to vector<8x8xf32>
    %78 = vector.extract_strided_slice %31 {offsets = [0, 48], sizes = [8, 8], strides = [1, 1]} : vector<16x96xf32> to vector<8x8xf32>
    %79 = vector.extract_strided_slice %31 {offsets = [0, 80], sizes = [8, 8], strides = [1, 1]} : vector<16x96xf32> to vector<8x8xf32>
    %80 = arith.truncf %77 : vector<8x8xf32> to vector<8x8xbf16>
    %81 = arith.truncf %78 : vector<8x8xf32> to vector<8x8xbf16>
    %cst_29 = arith.constant dense<0.000000e+00> : vector<8x8xf32>
    %82 = tpu.matmul %80, %81, %cst_29 {dimension_numbers = #tpu.dot_dimension_numbers<[1], [1], [0], [0], [0, 0, 1, 0], [], []>} : vector<8x8xbf16>, vector<8x8xbf16>, vector<8x8xf32> -> vector<8x8xf32>
    %83 = vector.broadcast %32 : vector<1x8xf32> to vector<8x8xf32>
    %84 = arith.addf %82, %83 : vector<8x8xf32>
    %cst_30 = arith.constant dense<0xFF800000> : vector<8xf32>
    %85 = vector.multi_reduction <maximumf>, %84, %cst_30 [1] : vector<8x8xf32> to vector<8xf32>
    %86 = vector.shape_cast %85 : vector<8xf32> to vector<8x1xf32>
    %87 = vector.broadcast %86 : vector<8x1xf32> to vector<8x8xf32>
    %88 = arith.subf %84, %87 : vector<8x8xf32>
    %89 = math.exp %88 : vector<8x8xf32>
    %cst_31 = arith.constant dense<0.000000e+00> : vector<8xf32>
    %90 = vector.multi_reduction <add>, %89, %cst_31 [1] : vector<8x8xf32> to vector<8xf32>
    %91 = vector.shape_cast %90 : vector<8xf32> to vector<8x1xf32>
    %92 = tpu.reciprocal %91 {approx = true} : vector<8x1xf32> -> vector<8x1xf32>
    %93 = vector.broadcast %92 : vector<8x1xf32> to vector<8x8xf32>
    %94 = arith.mulf %89, %93 : vector<8x8xf32>
    %95 = arith.truncf %79 : vector<8x8xf32> to vector<8x8xbf16>
    %96 = arith.truncf %94 : vector<8x8xf32> to vector<8x8xbf16>
    %cst_32 = arith.constant dense<0.000000e+00> : vector<8x8xf32>
    %97 = tpu.matmul %96, %95, %cst_32 {dimension_numbers = #tpu.dot_dimension_numbers<[1], [0], [0], [1], [0, 0, 1, 1], [], []>} : vector<8x8xbf16>, vector<8x8xbf16>, vector<8x8xf32> -> vector<8x8xf32>
    %c0_33 = arith.constant 0 : index
    %c16 = arith.constant 16 : index
    %98 = vector.load %arg21[%c0_33, %c16] : memref<16x32xf32, #tpu.memory_space<vmem>>, vector<8x8xf32>
    tpu.vector_store %arg21[%c0_33, %c16], %97 {strides = array<i32>} : memref<16x32xf32, #tpu.memory_space<vmem>>, vector<8x8xf32>,
    %99 = vector.extract_strided_slice %31 {offsets = [0, 24], sizes = [8, 8], strides = [1, 1]} : vector<16x96xf32> to vector<8x8xf32>
    %100 = vector.extract_strided_slice %31 {offsets = [0, 56], sizes = [8, 8], strides = [1, 1]} : vector<16x96xf32> to vector<8x8xf32>
    %101 = vector.extract_strided_slice %31 {offsets = [0, 88], sizes = [8, 8], strides = [1, 1]} : vector<16x96xf32> to vector<8x8xf32>
    %102 = arith.truncf %99 : vector<8x8xf32> to vector<8x8xbf16>
    %103 = arith.truncf %100 : vector<8x8xf32> to vector<8x8xbf16>
    %cst_34 = arith.constant dense<0.000000e+00> : vector<8x8xf32>
    %104 = tpu.matmul %102, %103, %cst_34 {dimension_numbers = #tpu.dot_dimension_numbers<[1], [1], [0], [0], [0, 0, 1, 0], [], []>} : vector<8x8xbf16>, vector<8x8xbf16>, vector<8x8xf32> -> vector<8x8xf32>
    %105 = vector.broadcast %32 : vector<1x8xf32> to vector<8x8xf32>
    %106 = arith.addf %104, %105 : vector<8x8xf32>
    %cst_35 = arith.constant dense<0xFF800000> : vector<8xf32>
    %107 = vector.multi_reduction <maximumf>, %106, %cst_35 [1] : vector<8x8xf32> to vector<8xf32>
    %108 = vector.shape_cast %107 : vector<8xf32> to vector<8x1xf32>
    %109 = vector.broadcast %108 : vector<8x1xf32> to vector<8x8xf32>
    %110 = arith.subf %106, %109 : vector<8x8xf32>
    %111 = math.exp %110 : vector<8x8xf32>
    %cst_36 = arith.constant dense<0.000000e+00> : vector<8xf32>
    %112 = vector.multi_reduction <add>, %111, %cst_36 [1] : vector<8x8xf32> to vector<8xf32>
    %113 = vector.shape_cast %112 : vector<8xf32> to vector<8x1xf32>
    %114 = tpu.reciprocal %113 {approx = true} : vector<8x1xf32> -> vector<8x1xf32>
    %115 = vector.broadcast %114 : vector<8x1xf32> to vector<8x8xf32>
    %116 = arith.mulf %111, %115 : vector<8x8xf32>
    %117 = arith.truncf %101 : vector<8x8xf32> to vector<8x8xbf16>
    %118 = arith.truncf %116 : vector<8x8xf32> to vector<8x8xbf16>
    %cst_37 = arith.constant dense<0.000000e+00> : vector<8x8xf32>
    %119 = tpu.matmul %118, %117, %cst_37 {dimension_numbers = #tpu.dot_dimension_numbers<[1], [0], [0], [1], [0, 0, 1, 1], [], []>} : vector<8x8xbf16>, vector<8x8xbf16>, vector<8x8xf32> -> vector<8x8xf32>
    %c0_38 = arith.constant 0 : index
    %c24 = arith.constant 24 : index
    %120 = vector.load %arg21[%c0_38, %c24] : memref<16x32xf32, #tpu.memory_space<vmem>>, vector<8x8xf32>
    tpu.vector_store %arg21[%c0_38, %c24], %119 {strides = array<i32>} : memref<16x32xf32, #tpu.memory_space<vmem>>, vector<8x8xf32>,
    %121 = vector.extract_strided_slice %23 {offsets = [1, 0], sizes = [1, 8], strides = [1, 1]} : vector<2x8xf32> to vector<1x8xf32>
    %122 = vector.extract_strided_slice %31 {offsets = [8, 0], sizes = [8, 8], strides = [1, 1]} : vector<16x96xf32> to vector<8x8xf32>
    %123 = vector.extract_strided_slice %31 {offsets = [8, 32], sizes = [8, 8], strides = [1, 1]} : vector<16x96xf32> to vector<8x8xf32>
    %124 = vector.extract_strided_slice %31 {offsets = [8, 64], sizes = [8, 8], strides = [1, 1]} : vector<16x96xf32> to vector<8x8xf32>
    %125 = arith.truncf %122 : vector<8x8xf32> to vector<8x8xbf16>
    %126 = arith.truncf %123 : vector<8x8xf32> to vector<8x8xbf16>
    %cst_39 = arith.constant dense<0.000000e+00> : vector<8x8xf32>
    %127 = tpu.matmul %125, %126, %cst_39 {dimension_numbers = #tpu.dot_dimension_numbers<[1], [1], [0], [0], [0, 0, 1, 0], [], []>} : vector<8x8xbf16>, vector<8x8xbf16>, vector<8x8xf32> -> vector<8x8xf32>
    %128 = vector.broadcast %121 : vector<1x8xf32> to vector<8x8xf32>
    %129 = arith.addf %127, %128 : vector<8x8xf32>
    %cst_40 = arith.constant dense<0xFF800000> : vector<8xf32>
    %130 = vector.multi_reduction <maximumf>, %129, %cst_40 [1] : vector<8x8xf32> to vector<8xf32>
    %131 = vector.shape_cast %130 : vector<8xf32> to vector<8x1xf32>
    %132 = vector.broadcast %131 : vector<8x1xf32> to vector<8x8xf32>
    %133 = arith.subf %129, %132 : vector<8x8xf32>
    %134 = math.exp %133 : vector<8x8xf32>
    %cst_41 = arith.constant dense<0.000000e+00> : vector<8xf32>
    %135 = vector.multi_reduction <add>, %134, %cst_41 [1] : vector<8x8xf32> to vector<8xf32>
    %136 = vector.shape_cast %135 : vector<8xf32> to vector<8x1xf32>
    %137 = tpu.reciprocal %136 {approx = true} : vector<8x1xf32> -> vector<8x1xf32>
    %138 = vector.broadcast %137 : vector<8x1xf32> to vector<8x8xf32>
    %139 = arith.mulf %134, %138 : vector<8x8xf32>
    %140 = arith.truncf %124 : vector<8x8xf32> to vector<8x8xbf16>
    %141 = arith.truncf %139 : vector<8x8xf32> to vector<8x8xbf16>
    %cst_42 = arith.constant dense<0.000000e+00> : vector<8x8xf32>
    %142 = tpu.matmul %141, %140, %cst_42 {dimension_numbers = #tpu.dot_dimension_numbers<[1], [0], [0], [1], [0, 0, 1, 1], [], []>} : vector<8x8xbf16>, vector<8x8xbf16>, vector<8x8xf32> -> vector<8x8xf32>
    %c8_43 = arith.constant 8 : index
    %c0_44 = arith.constant 0 : index
    %143 = vector.load %arg21[%c8_43, %c0_44] : memref<16x32xf32, #tpu.memory_space<vmem>>, vector<8x8xf32>
    tpu.vector_store %arg21[%c8_43, %c0_44], %142 {strides = array<i32>} : memref<16x32xf32, #tpu.memory_space<vmem>>, vector<8x8xf32>,
    %144 = vector.extract_strided_slice %31 {offsets = [8, 8], sizes = [8, 8], strides = [1, 1]} : vector<16x96xf32> to vector<8x8xf32>
    %145 = vector.extract_strided_slice %31 {offsets = [8, 40], sizes = [8, 8], strides = [1, 1]} : vector<16x96xf32> to vector<8x8xf32>
    %146 = vector.extract_strided_slice %31 {offsets = [8, 72], sizes = [8, 8], strides = [1, 1]} : vector<16x96xf32> to vector<8x8xf32>
    %147 = arith.truncf %144 : vector<8x8xf32> to vector<8x8xbf16>
    %148 = arith.truncf %145 : vector<8x8xf32> to vector<8x8xbf16>
    %cst_45 = arith.constant dense<0.000000e+00> : vector<8x8xf32>
    %149 = tpu.matmul %147, %148, %cst_45 {dimension_numbers = #tpu.dot_dimension_numbers<[1], [1], [0], [0], [0, 0, 1, 0], [], []>} : vector<8x8xbf16>, vector<8x8xbf16>, vector<8x8xf32> -> vector<8x8xf32>
    %150 = vector.broadcast %121 : vector<1x8xf32> to vector<8x8xf32>
    %151 = arith.addf %149, %150 : vector<8x8xf32>
    %cst_46 = arith.constant dense<0xFF800000> : vector<8xf32>
    %152 = vector.multi_reduction <maximumf>, %151, %cst_46 [1] : vector<8x8xf32> to vector<8xf32>
    %153 = vector.shape_cast %152 : vector<8xf32> to vector<8x1xf32>
    %154 = vector.broadcast %153 : vector<8x1xf32> to vector<8x8xf32>
    %155 = arith.subf %151, %154 : vector<8x8xf32>
    %156 = math.exp %155 : vector<8x8xf32>
    %cst_47 = arith.constant dense<0.000000e+00> : vector<8xf32>
    %157 = vector.multi_reduction <add>, %156, %cst_47 [1] : vector<8x8xf32> to vector<8xf32>
    %158 = vector.shape_cast %157 : vector<8xf32> to vector<8x1xf32>
    %159 = tpu.reciprocal %158 {approx = true} : vector<8x1xf32> -> vector<8x1xf32>
    %160 = vector.broadcast %159 : vector<8x1xf32> to vector<8x8xf32>
    %161 = arith.mulf %156, %160 : vector<8x8xf32>
    %162 = arith.truncf %146 : vector<8x8xf32> to vector<8x8xbf16>
    %163 = arith.truncf %161 : vector<8x8xf32> to vector<8x8xbf16>
    %cst_48 = arith.constant dense<0.000000e+00> : vector<8x8xf32>
    %164 = tpu.matmul %163, %162, %cst_48 {dimension_numbers = #tpu.dot_dimension_numbers<[1], [0], [0], [1], [0, 0, 1, 1], [], []>} : vector<8x8xbf16>, vector<8x8xbf16>, vector<8x8xf32> -> vector<8x8xf32>
    %c8_49 = arith.constant 8 : index
    %c8_50 = arith.constant 8 : index
    %165 = vector.load %arg21[%c8_49, %c8_50] : memref<16x32xf32, #tpu.memory_space<vmem>>, vector<8x8xf32>
    tpu.vector_store %arg21[%c8_49, %c8_50], %164 {strides = array<i32>} : memref<16x32xf32, #tpu.memory_space<vmem>>, vector<8x8xf32>,
    %166 = vector.extract_strided_slice %31 {offsets = [8, 16], sizes = [8, 8], strides = [1, 1]} : vector<16x96xf32> to vector<8x8xf32>
    %167 = vector.extract_strided_slice %31 {offsets = [8, 48], sizes = [8, 8], strides = [1, 1]} : vector<16x96xf32> to vector<8x8xf32>
    %168 = vector.extract_strided_slice %31 {offsets = [8, 80], sizes = [8, 8], strides = [1, 1]} : vector<16x96xf32> to vector<8x8xf32>
    %169 = arith.truncf %166 : vector<8x8xf32> to vector<8x8xbf16>
    %170 = arith.truncf %167 : vector<8x8xf32> to vector<8x8xbf16>
    %cst_51 = arith.constant dense<0.000000e+00> : vector<8x8xf32>
    %171 = tpu.matmul %169, %170, %cst_51 {dimension_numbers = #tpu.dot_dimension_numbers<[1], [1], [0], [0], [0, 0, 1, 0], [], []>} : vector<8x8xbf16>, vector<8x8xbf16>, vector<8x8xf32> -> vector<8x8xf32>
    %172 = vector.broadcast %121 : vector<1x8xf32> to vector<8x8xf32>
    %173 = arith.addf %171, %172 : vector<8x8xf32>
    %cst_52 = arith.constant dense<0xFF800000> : vector<8xf32>
    %174 = vector.multi_reduction <maximumf>, %173, %cst_52 [1] : vector<8x8xf32> to vector<8xf32>
    %175 = vector.shape_cast %174 : vector<8xf32> to vector<8x1xf32>
    %176 = vector.broadcast %175 : vector<8x1xf32> to vector<8x8xf32>
    %177 = arith.subf %173, %176 : vector<8x8xf32>
    %178 = math.exp %177 : vector<8x8xf32>
    %cst_53 = arith.constant dense<0.000000e+00> : vector<8xf32>
    %179 = vector.multi_reduction <add>, %178, %cst_53 [1] : vector<8x8xf32> to vector<8xf32>
    %180 = vector.shape_cast %179 : vector<8xf32> to vector<8x1xf32>
    %181 = tpu.reciprocal %180 {approx = true} : vector<8x1xf32> -> vector<8x1xf32>
    %182 = vector.broadcast %181 : vector<8x1xf32> to vector<8x8xf32>
    %183 = arith.mulf %178, %182 : vector<8x8xf32>
    %184 = arith.truncf %168 : vector<8x8xf32> to vector<8x8xbf16>
    %185 = arith.truncf %183 : vector<8x8xf32> to vector<8x8xbf16>
    %cst_54 = arith.constant dense<0.000000e+00> : vector<8x8xf32>
    %186 = tpu.matmul %185, %184, %cst_54 {dimension_numbers = #tpu.dot_dimension_numbers<[1], [0], [0], [1], [0, 0, 1, 1], [], []>} : vector<8x8xbf16>, vector<8x8xbf16>, vector<8x8xf32> -> vector<8x8xf32>
    %c8_55 = arith.constant 8 : index
    %c16_56 = arith.constant 16 : index
    %187 = vector.load %arg21[%c8_55, %c16_56] : memref<16x32xf32, #tpu.memory_space<vmem>>, vector<8x8xf32>
    tpu.vector_store %arg21[%c8_55, %c16_56], %186 {strides = array<i32>} : memref<16x32xf32, #tpu.memory_space<vmem>>, vector<8x8xf32>,
    %188 = vector.extract_strided_slice %31 {offsets = [8, 24], sizes = [8, 8], strides = [1, 1]} : vector<16x96xf32> to vector<8x8xf32>
    %189 = vector.extract_strided_slice %31 {offsets = [8, 56], sizes = [8, 8], strides = [1, 1]} : vector<16x96xf32> to vector<8x8xf32>
    %190 = vector.extract_strided_slice %31 {offsets = [8, 88], sizes = [8, 8], strides = [1, 1]} : vector<16x96xf32> to vector<8x8xf32>
    %191 = arith.truncf %188 : vector<8x8xf32> to vector<8x8xbf16>
    %192 = arith.truncf %189 : vector<8x8xf32> to vector<8x8xbf16>
    %cst_57 = arith.constant dense<0.000000e+00> : vector<8x8xf32>
    %193 = tpu.matmul %191, %192, %cst_57 {dimension_numbers = #tpu.dot_dimension_numbers<[1], [1], [0], [0], [0, 0, 1, 0], [], []>} : vector<8x8xbf16>, vector<8x8xbf16>, vector<8x8xf32> -> vector<8x8xf32>
    %194 = vector.broadcast %121 : vector<1x8xf32> to vector<8x8xf32>
    %195 = arith.addf %193, %194 : vector<8x8xf32>
    %cst_58 = arith.constant dense<0xFF800000> : vector<8xf32>
    %196 = vector.multi_reduction <maximumf>, %195, %cst_58 [1] : vector<8x8xf32> to vector<8xf32>
    %197 = vector.shape_cast %196 : vector<8xf32> to vector<8x1xf32>
    %198 = vector.broadcast %197 : vector<8x1xf32> to vector<8x8xf32>
    %199 = arith.subf %195, %198 : vector<8x8xf32>
    %200 = math.exp %199 : vector<8x8xf32>
    %cst_59 = arith.constant dense<0.000000e+00> : vector<8xf32>
    %201 = vector.multi_reduction <add>, %200, %cst_59 [1] : vector<8x8xf32> to vector<8xf32>
    %202 = vector.shape_cast %201 : vector<8xf32> to vector<8x1xf32>
    %203 = tpu.reciprocal %202 {approx = true} : vector<8x1xf32> -> vector<8x1xf32>
    %204 = vector.broadcast %203 : vector<8x1xf32> to vector<8x8xf32>
    %205 = arith.mulf %200, %204 : vector<8x8xf32>
    %206 = arith.truncf %190 : vector<8x8xf32> to vector<8x8xbf16>
    %207 = arith.truncf %205 : vector<8x8xf32> to vector<8x8xbf16>
    %cst_60 = arith.constant dense<0.000000e+00> : vector<8x8xf32>
    %208 = tpu.matmul %207, %206, %cst_60 {dimension_numbers = #tpu.dot_dimension_numbers<[1], [0], [0], [1], [0, 0, 1, 1], [], []>} : vector<8x8xbf16>, vector<8x8xbf16>, vector<8x8xf32> -> vector<8x8xf32>
    %c8_61 = arith.constant 8 : index
    %c24_62 = arith.constant 24 : index
    %209 = vector.load %arg21[%c8_61, %c24_62] : memref<16x32xf32, #tpu.memory_space<vmem>>, vector<8x8xf32>
    tpu.vector_store %arg21[%c8_61, %c24_62], %208 {strides = array<i32>} : memref<16x32xf32, #tpu.memory_space<vmem>>, vector<8x8xf32>,
    %c0_63 = arith.constant 0 : index
    %c0_64 = arith.constant 0 : index
    %210 = vector.load %arg21[%c0_63, %c0_64] : memref<16x32xf32, #tpu.memory_space<vmem>>, vector<16x32xf32>
    %c0_65 = arith.constant 0 : index
    %c0_66 = arith.constant 0 : index
    %c0_67 = arith.constant 0 : index
    %211 = vector.load %arg6[%c0_65, %c0_66, %c0_67] : memref<2x32x32xbf16, #tpu.memory_space<vmem>>, vector<1x32x32xbf16>
    %212 = vector.shape_cast %211 : vector<1x32x32xbf16> to vector<32x32xbf16>
    %213 = arith.truncf %210 : vector<16x32xf32> to vector<16x32xbf16>
    %cst_68 = arith.constant dense<0.000000e+00> : vector<16x32xf32>
    %214 = tpu.matmul %213, %212, %cst_68 {dimension_numbers = #tpu.dot_dimension_numbers<[1], [0], [0], [1], [0, 0, 1, 1], [], []>} : vector<16x32xbf16>, vector<32x32xbf16>, vector<16x32xf32> -> vector<16x32xf32>
    %c0_69 = arith.constant 0 : index
    %c0_70 = arith.constant 0 : index
    %c0_71 = arith.constant 0 : index
    %215 = vector.load %arg7[%c0_69, %c0_70, %c0_71] : memref<2x1x32xf32, #tpu.memory_space<vmem>>, vector<1x1x32xf32>
    %216 = vector.shape_cast %215 : vector<1x1x32xf32> to vector<1x32xf32>
    %217 = vector.broadcast %216 : vector<1x32xf32> to vector<16x32xf32>
    %218 = arith.addf %214, %217 : vector<16x32xf32>
    %219 = arith.addf %218, %22 : vector<16x32xf32>
    %c0_72 = arith.constant 0 : index
    %c0_73 = arith.constant 0 : index
    %c0_74 = arith.constant 0 : index
    %220 = vector.load %arg8[%c0_72, %c0_73, %c0_74] : memref<2x1x32xf32, #tpu.memory_space<vmem>>, vector<1x1x32xf32>
    %221 = vector.shape_cast %220 : vector<1x1x32xf32> to vector<1x32xf32>
    %c0_75 = arith.constant 0 : index
    %c0_76 = arith.constant 0 : index
    %c0_77 = arith.constant 0 : index
    %222 = vector.load %arg9[%c0_75, %c0_76, %c0_77] : memref<2x1x32xf32, #tpu.memory_space<vmem>>, vector<1x1x32xf32>
    %223 = vector.shape_cast %222 : vector<1x1x32xf32> to vector<1x32xf32>
    %cst_78 = arith.constant dense<0.000000e+00> : vector<16xf32>
    %224 = vector.multi_reduction <add>, %219, %cst_78 [1] : vector<16x32xf32> to vector<16xf32>
    %225 = vector.shape_cast %224 : vector<16xf32> to vector<16x1xf32>
    %cst_79 = arith.constant 3.200000e+01 : f32
    %226 = vector.broadcast %cst_79 : f32 to vector<16x1xf32>
    %227 = arith.divf %225, %226 : vector<16x1xf32>
    %228 = vector.broadcast %227 : vector<16x1xf32> to vector<16x32xf32>
    %229 = arith.subf %219, %228 : vector<16x32xf32>
    %230 = arith.mulf %229, %229 : vector<16x32xf32>
    %cst_80 = arith.constant dense<0.000000e+00> : vector<16xf32>
    %231 = vector.multi_reduction <add>, %230, %cst_80 [1] : vector<16x32xf32> to vector<16xf32>
    %232 = vector.shape_cast %231 : vector<16xf32> to vector<16x1xf32>
    %cst_81 = arith.constant 3.200000e+01 : f32
    %233 = vector.broadcast %cst_81 : f32 to vector<16x1xf32>
    %234 = arith.divf %232, %233 : vector<16x1xf32>
    %cst_82 = arith.constant 9.99999996E-13 : f32
    %235 = vector.broadcast %cst_82 : f32 to vector<16x1xf32>
    %236 = arith.addf %234, %235 : vector<16x1xf32>
    %237 = math.rsqrt %236 : vector<16x1xf32>
    %238 = vector.broadcast %237 : vector<16x1xf32> to vector<16x32xf32>
    %239 = arith.mulf %229, %238 : vector<16x32xf32>
    %240 = vector.broadcast %221 : vector<1x32xf32> to vector<16x32xf32>
    %241 = arith.mulf %239, %240 : vector<16x32xf32>
    %242 = vector.broadcast %223 : vector<1x32xf32> to vector<16x32xf32>
    %243 = arith.addf %241, %242 : vector<16x32xf32>
    %c0_83 = arith.constant 0 : index
    %c0_84 = arith.constant 0 : index
    %c0_85 = arith.constant 0 : index
    %244 = vector.load %arg10[%c0_83, %c0_84, %c0_85] : memref<2x32x64xbf16, #tpu.memory_space<vmem>>, vector<1x32x64xbf16>
    %245 = vector.shape_cast %244 : vector<1x32x64xbf16> to vector<32x64xbf16>
    %246 = arith.truncf %243 : vector<16x32xf32> to vector<16x32xbf16>
    %cst_86 = arith.constant dense<0.000000e+00> : vector<16x64xf32>
    %247 = tpu.matmul %246, %245, %cst_86 {dimension_numbers = #tpu.dot_dimension_numbers<[1], [0], [0], [1], [0, 0, 1, 1], [], []>} : vector<16x32xbf16>, vector<32x64xbf16>, vector<16x64xf32> -> vector<16x64xf32>
    %c0_87 = arith.constant 0 : index
    %c0_88 = arith.constant 0 : index
    %c0_89 = arith.constant 0 : index
    %248 = vector.load %arg11[%c0_87, %c0_88, %c0_89] : memref<2x1x64xf32, #tpu.memory_space<vmem>>, vector<1x1x64xf32>
    %249 = vector.shape_cast %248 : vector<1x1x64xf32> to vector<1x64xf32>
    %250 = vector.broadcast %249 : vector<1x64xf32> to vector<16x64xf32>
    %251 = arith.addf %247, %250 : vector<16x64xf32>
    %cst_90 = arith.constant 5.000000e-01 : f32
    %252 = vector.broadcast %cst_90 : f32 to vector<16x64xf32>
    %253 = arith.mulf %252, %251 : vector<16x64xf32>
    %cst_91 = arith.constant 4.471500e-02 : f32
    %254 = vector.broadcast %cst_91 : f32 to vector<16x64xf32>
    %255 = arith.mulf %254, %251 : vector<16x64xf32>
    %256 = arith.mulf %255, %251 : vector<16x64xf32>
    %257 = arith.mulf %256, %251 : vector<16x64xf32>
    %258 = arith.addf %251, %257 : vector<16x64xf32>
    %cst_92 = arith.constant 0.797884583 : f32
    %259 = vector.broadcast %cst_92 : f32 to vector<16x64xf32>
    %260 = arith.mulf %259, %258 : vector<16x64xf32>
    %261 = math.tanh %260 : vector<16x64xf32>
    %cst_93 = arith.constant 1.000000e+00 : f32
    %262 = vector.broadcast %cst_93 : f32 to vector<16x64xf32>
    %263 = arith.addf %262, %261 : vector<16x64xf32>
    %264 = arith.mulf %253, %263 : vector<16x64xf32>
    %c0_94 = arith.constant 0 : index
    %c0_95 = arith.constant 0 : index
    %c0_96 = arith.constant 0 : index
    %265 = vector.load %arg12[%c0_94, %c0_95, %c0_96] : memref<2x64x32xbf16, #tpu.memory_space<vmem>>, vector<1x64x32xbf16>
    %266 = vector.shape_cast %265 : vector<1x64x32xbf16> to vector<64x32xbf16>
    %267 = arith.truncf %264 : vector<16x64xf32> to vector<16x64xbf16>
    %cst_97 = arith.constant dense<0.000000e+00> : vector<16x32xf32>
    %268 = tpu.matmul %267, %266, %cst_97 {dimension_numbers = #tpu.dot_dimension_numbers<[1], [0], [0], [1], [0, 0, 1, 1], [], []>} : vector<16x64xbf16>, vector<64x32xbf16>, vector<16x32xf32> -> vector<16x32xf32>
    %c0_98 = arith.constant 0 : index
    %c0_99 = arith.constant 0 : index
    %c0_100 = arith.constant 0 : index
    %269 = vector.load %arg13[%c0_98, %c0_99, %c0_100] : memref<2x1x32xf32, #tpu.memory_space<vmem>>, vector<1x1x32xf32>
    %270 = vector.shape_cast %269 : vector<1x1x32xf32> to vector<1x32xf32>
    %271 = vector.broadcast %270 : vector<1x32xf32> to vector<16x32xf32>
    %272 = arith.addf %268, %271 : vector<16x32xf32>
    %273 = arith.addf %272, %243 : vector<16x32xf32>
    %c0_101 = arith.constant 0 : index
    %c0_102 = arith.constant 0 : index
    %c0_103 = arith.constant 0 : index
    %274 = vector.load %arg14[%c0_101, %c0_102, %c0_103] : memref<2x1x32xf32, #tpu.memory_space<vmem>>, vector<1x1x32xf32>
    %275 = vector.shape_cast %274 : vector<1x1x32xf32> to vector<1x32xf32>
    %c0_104 = arith.constant 0 : index
    %c0_105 = arith.constant 0 : index
    %c0_106 = arith.constant 0 : index
    %276 = vector.load %arg15[%c0_104, %c0_105, %c0_106] : memref<2x1x32xf32, #tpu.memory_space<vmem>>, vector<1x1x32xf32>
    %277 = vector.shape_cast %276 : vector<1x1x32xf32> to vector<1x32xf32>
    %cst_107 = arith.constant dense<0.000000e+00> : vector<16xf32>
    %278 = vector.multi_reduction <add>, %273, %cst_107 [1] : vector<16x32xf32> to vector<16xf32>
    %279 = vector.shape_cast %278 : vector<16xf32> to vector<16x1xf32>
    %cst_108 = arith.constant 3.200000e+01 : f32
    %280 = vector.broadcast %cst_108 : f32 to vector<16x1xf32>
    %281 = arith.divf %279, %280 : vector<16x1xf32>
    %282 = vector.broadcast %281 : vector<16x1xf32> to vector<16x32xf32>
    %283 = arith.subf %273, %282 : vector<16x32xf32>
    %284 = arith.mulf %283, %283 : vector<16x32xf32>
    %cst_109 = arith.constant dense<0.000000e+00> : vector<16xf32>
    %285 = vector.multi_reduction <add>, %284, %cst_109 [1] : vector<16x32xf32> to vector<16xf32>
    %286 = vector.shape_cast %285 : vector<16xf32> to vector<16x1xf32>
    %cst_110 = arith.constant 3.200000e+01 : f32
    %287 = vector.broadcast %cst_110 : f32 to vector<16x1xf32>
    %288 = arith.divf %286, %287 : vector<16x1xf32>
    %cst_111 = arith.constant 9.99999996E-13 : f32
    %289 = vector.broadcast %cst_111 : f32 to vector<16x1xf32>
    %290 = arith.addf %288, %289 : vector<16x1xf32>
    %291 = math.rsqrt %290 : vector<16x1xf32>
    %292 = vector.broadcast %291 : vector<16x1xf32> to vector<16x32xf32>
    %293 = arith.mulf %283, %292 : vector<16x32xf32>
    %294 = vector.broadcast %275 : vector<1x32xf32> to vector<16x32xf32>
    %295 = arith.mulf %293, %294 : vector<16x32xf32>
    %296 = vector.broadcast %277 : vector<1x32xf32> to vector<16x32xf32>
    %297 = arith.addf %295, %296 : vector<16x32xf32>
    %c1 = arith.constant 1 : index
    %c0_112 = arith.constant 0 : index
    %c0_113 = arith.constant 0 : index
    %298 = vector.load %arg4[%c1, %c0_112, %c0_113] : memref<2x32x96xbf16, #tpu.memory_space<vmem>>, vector<1x32x96xbf16>
    %299 = vector.shape_cast %298 : vector<1x32x96xbf16> to vector<32x96xbf16>
    %300 = arith.truncf %297 : vector<16x32xf32> to vector<16x32xbf16>
    %cst_114 = arith.constant dense<0.000000e+00> : vector<16x96xf32>
    %301 = tpu.matmul %300, %299, %cst_114 {dimension_numbers = #tpu.dot_dimension_numbers<[1], [0], [0], [1], [0, 0, 1, 1], [], []>} : vector<16x32xbf16>, vector<32x96xbf16>, vector<16x96xf32> -> vector<16x96xf32>
    %c1_115 = arith.constant 1 : index
    %c0_116 = arith.constant 0 : index
    %c0_117 = arith.constant 0 : index
    %302 = vector.load %arg5[%c1_115, %c0_116, %c0_117] : memref<2x1x96xf32, #tpu.memory_space<vmem>>, vector<1x1x96xf32>
    %303 = vector.shape_cast %302 : vector<1x1x96xf32> to vector<1x96xf32>
    %304 = vector.broadcast %303 : vector<1x96xf32> to vector<16x96xf32>
    %305 = arith.addf %301, %304 : vector<16x96xf32>
    %306 = vector.extract_strided_slice %23 {offsets = [0, 0], sizes = [1, 8], strides = [1, 1]} : vector<2x8xf32> to vector<1x8xf32>
    %307 = vector.extract_strided_slice %305 {offsets = [0, 0], sizes = [8, 8], strides = [1, 1]} : vector<16x96xf32> to vector<8x8xf32>
    %308 = vector.extract_strided_slice %305 {offsets = [0, 32], sizes = [8, 8], strides = [1, 1]} : vector<16x96xf32> to vector<8x8xf32>
    %309 = vector.extract_strided_slice %305 {offsets = [0, 64], sizes = [8, 8], strides = [1, 1]} : vector<16x96xf32> to vector<8x8xf32>
    %310 = arith.truncf %307 : vector<8x8xf32> to vector<8x8xbf16>
    %311 = arith.truncf %308 : vector<8x8xf32> to vector<8x8xbf16>
    %cst_118 = arith.constant dense<0.000000e+00> : vector<8x8xf32>
    %312 = tpu.matmul %310, %311, %cst_118 {dimension_numbers = #tpu.dot_dimension_numbers<[1], [1], [0], [0], [0, 0, 1, 0], [], []>} : vector<8x8xbf16>, vector<8x8xbf16>, vector<8x8xf32> -> vector<8x8xf32>
    %313 = vector.broadcast %306 : vector<1x8xf32> to vector<8x8xf32>
    %314 = arith.addf %312, %313 : vector<8x8xf32>
    %cst_119 = arith.constant dense<0xFF800000> : vector<8xf32>
    %315 = vector.multi_reduction <maximumf>, %314, %cst_119 [1] : vector<8x8xf32> to vector<8xf32>
    %316 = vector.shape_cast %315 : vector<8xf32> to vector<8x1xf32>
    %317 = vector.broadcast %316 : vector<8x1xf32> to vector<8x8xf32>
    %318 = arith.subf %314, %317 : vector<8x8xf32>
    %319 = math.exp %318 : vector<8x8xf32>
    %cst_120 = arith.constant dense<0.000000e+00> : vector<8xf32>
    %320 = vector.multi_reduction <add>, %319, %cst_120 [1] : vector<8x8xf32> to vector<8xf32>
    %321 = vector.shape_cast %320 : vector<8xf32> to vector<8x1xf32>
    %322 = tpu.reciprocal %321 {approx = true} : vector<8x1xf32> -> vector<8x1xf32>
    %323 = vector.broadcast %322 : vector<8x1xf32> to vector<8x8xf32>
    %324 = arith.mulf %319, %323 : vector<8x8xf32>
    %325 = arith.truncf %309 : vector<8x8xf32> to vector<8x8xbf16>
    %326 = arith.truncf %324 : vector<8x8xf32> to vector<8x8xbf16>
    %cst_121 = arith.constant dense<0.000000e+00> : vector<8x8xf32>
    %327 = tpu.matmul %326, %325, %cst_121 {dimension_numbers = #tpu.dot_dimension_numbers<[1], [0], [0], [1], [0, 0, 1, 1], [], []>} : vector<8x8xbf16>, vector<8x8xbf16>, vector<8x8xf32> -> vector<8x8xf32>
    %c0_122 = arith.constant 0 : index
    %c0_123 = arith.constant 0 : index
    %328 = vector.load %arg21[%c0_122, %c0_123] : memref<16x32xf32, #tpu.memory_space<vmem>>, vector<8x8xf32>
    tpu.vector_store %arg21[%c0_122, %c0_123], %327 {strides = array<i32>} : memref<16x32xf32, #tpu.memory_space<vmem>>, vector<8x8xf32>,
    %329 = vector.extract_strided_slice %305 {offsets = [0, 8], sizes = [8, 8], strides = [1, 1]} : vector<16x96xf32> to vector<8x8xf32>
    %330 = vector.extract_strided_slice %305 {offsets = [0, 40], sizes = [8, 8], strides = [1, 1]} : vector<16x96xf32> to vector<8x8xf32>
    %331 = vector.extract_strided_slice %305 {offsets = [0, 72], sizes = [8, 8], strides = [1, 1]} : vector<16x96xf32> to vector<8x8xf32>
    %332 = arith.truncf %329 : vector<8x8xf32> to vector<8x8xbf16>
    %333 = arith.truncf %330 : vector<8x8xf32> to vector<8x8xbf16>
    %cst_124 = arith.constant dense<0.000000e+00> : vector<8x8xf32>
    %334 = tpu.matmul %332, %333, %cst_124 {dimension_numbers = #tpu.dot_dimension_numbers<[1], [1], [0], [0], [0, 0, 1, 0], [], []>} : vector<8x8xbf16>, vector<8x8xbf16>, vector<8x8xf32> -> vector<8x8xf32>
    %335 = vector.broadcast %306 : vector<1x8xf32> to vector<8x8xf32>
    %336 = arith.addf %334, %335 : vector<8x8xf32>
    %cst_125 = arith.constant dense<0xFF800000> : vector<8xf32>
    %337 = vector.multi_reduction <maximumf>, %336, %cst_125 [1] : vector<8x8xf32> to vector<8xf32>
    %338 = vector.shape_cast %337 : vector<8xf32> to vector<8x1xf32>
    %339 = vector.broadcast %338 : vector<8x1xf32> to vector<8x8xf32>
    %340 = arith.subf %336, %339 : vector<8x8xf32>
    %341 = math.exp %340 : vector<8x8xf32>
    %cst_126 = arith.constant dense<0.000000e+00> : vector<8xf32>
    %342 = vector.multi_reduction <add>, %341, %cst_126 [1] : vector<8x8xf32> to vector<8xf32>
    %343 = vector.shape_cast %342 : vector<8xf32> to vector<8x1xf32>
    %344 = tpu.reciprocal %343 {approx = true} : vector<8x1xf32> -> vector<8x1xf32>
    %345 = vector.broadcast %344 : vector<8x1xf32> to vector<8x8xf32>
    %346 = arith.mulf %341, %345 : vector<8x8xf32>
    %347 = arith.truncf %331 : vector<8x8xf32> to vector<8x8xbf16>
    %348 = arith.truncf %346 : vector<8x8xf32> to vector<8x8xbf16>
    %cst_127 = arith.constant dense<0.000000e+00> : vector<8x8xf32>
    %349 = tpu.matmul %348, %347, %cst_127 {dimension_numbers = #tpu.dot_dimension_numbers<[1], [0], [0], [1], [0, 0, 1, 1], [], []>} : vector<8x8xbf16>, vector<8x8xbf16>, vector<8x8xf32> -> vector<8x8xf32>
    %c0_128 = arith.constant 0 : index
    %c8_129 = arith.constant 8 : index
    %350 = vector.load %arg21[%c0_128, %c8_129] : memref<16x32xf32, #tpu.memory_space<vmem>>, vector<8x8xf32>
    tpu.vector_store %arg21[%c0_128, %c8_129], %349 {strides = array<i32>} : memref<16x32xf32, #tpu.memory_space<vmem>>, vector<8x8xf32>,
    %351 = vector.extract_strided_slice %305 {offsets = [0, 16], sizes = [8, 8], strides = [1, 1]} : vector<16x96xf32> to vector<8x8xf32>
    %352 = vector.extract_strided_slice %305 {offsets = [0, 48], sizes = [8, 8], strides = [1, 1]} : vector<16x96xf32> to vector<8x8xf32>
    %353 = vector.extract_strided_slice %305 {offsets = [0, 80], sizes = [8, 8], strides = [1, 1]} : vector<16x96xf32> to vector<8x8xf32>
    %354 = arith.truncf %351 : vector<8x8xf32> to vector<8x8xbf16>
    %355 = arith.truncf %352 : vector<8x8xf32> to vector<8x8xbf16>
    %cst_130 = arith.constant dense<0.000000e+00> : vector<8x8xf32>
    %356 = tpu.matmul %354, %355, %cst_130 {dimension_numbers = #tpu.dot_dimension_numbers<[1], [1], [0], [0], [0, 0, 1, 0], [], []>} : vector<8x8xbf16>, vector<8x8xbf16>, vector<8x8xf32> -> vector<8x8xf32>
    %357 = vector.broadcast %306 : vector<1x8xf32> to vector<8x8xf32>
    %358 = arith.addf %356, %357 : vector<8x8xf32>
    %cst_131 = arith.constant dense<0xFF800000> : vector<8xf32>
    %359 = vector.multi_reduction <maximumf>, %358, %cst_131 [1] : vector<8x8xf32> to vector<8xf32>
    %360 = vector.shape_cast %359 : vector<8xf32> to vector<8x1xf32>
    %361 = vector.broadcast %360 : vector<8x1xf32> to vector<8x8xf32>
    %362 = arith.subf %358, %361 : vector<8x8xf32>
    %363 = math.exp %362 : vector<8x8xf32>
    %cst_132 = arith.constant dense<0.000000e+00> : vector<8xf32>
    %364 = vector.multi_reduction <add>, %363, %cst_132 [1] : vector<8x8xf32> to vector<8xf32>
    %365 = vector.shape_cast %364 : vector<8xf32> to vector<8x1xf32>
    %366 = tpu.reciprocal %365 {approx = true} : vector<8x1xf32> -> vector<8x1xf32>
    %367 = vector.broadcast %366 : vector<8x1xf32> to vector<8x8xf32>
    %368 = arith.mulf %363, %367 : vector<8x8xf32>
    %369 = arith.truncf %353 : vector<8x8xf32> to vector<8x8xbf16>
    %370 = arith.truncf %368 : vector<8x8xf32> to vector<8x8xbf16>
    %cst_133 = arith.constant dense<0.000000e+00> : vector<8x8xf32>
    %371 = tpu.matmul %370, %369, %cst_133 {dimension_numbers = #tpu.dot_dimension_numbers<[1], [0], [0], [1], [0, 0, 1, 1], [], []>} : vector<8x8xbf16>, vector<8x8xbf16>, vector<8x8xf32> -> vector<8x8xf32>
    %c0_134 = arith.constant 0 : index
    %c16_135 = arith.constant 16 : index
    %372 = vector.load %arg21[%c0_134, %c16_135] : memref<16x32xf32, #tpu.memory_space<vmem>>, vector<8x8xf32>
    tpu.vector_store %arg21[%c0_134, %c16_135], %371 {strides = array<i32>} : memref<16x32xf32, #tpu.memory_space<vmem>>, vector<8x8xf32>,
    %373 = vector.extract_strided_slice %305 {offsets = [0, 24], sizes = [8, 8], strides = [1, 1]} : vector<16x96xf32> to vector<8x8xf32>
    %374 = vector.extract_strided_slice %305 {offsets = [0, 56], sizes = [8, 8], strides = [1, 1]} : vector<16x96xf32> to vector<8x8xf32>
    %375 = vector.extract_strided_slice %305 {offsets = [0, 88], sizes = [8, 8], strides = [1, 1]} : vector<16x96xf32> to vector<8x8xf32>
    %376 = arith.truncf %373 : vector<8x8xf32> to vector<8x8xbf16>
    %377 = arith.truncf %374 : vector<8x8xf32> to vector<8x8xbf16>
    %cst_136 = arith.constant dense<0.000000e+00> : vector<8x8xf32>
    %378 = tpu.matmul %376, %377, %cst_136 {dimension_numbers = #tpu.dot_dimension_numbers<[1], [1], [0], [0], [0, 0, 1, 0], [], []>} : vector<8x8xbf16>, vector<8x8xbf16>, vector<8x8xf32> -> vector<8x8xf32>
    %379 = vector.broadcast %306 : vector<1x8xf32> to vector<8x8xf32>
    %380 = arith.addf %378, %379 : vector<8x8xf32>
    %cst_137 = arith.constant dense<0xFF800000> : vector<8xf32>
    %381 = vector.multi_reduction <maximumf>, %380, %cst_137 [1] : vector<8x8xf32> to vector<8xf32>
    %382 = vector.shape_cast %381 : vector<8xf32> to vector<8x1xf32>
    %383 = vector.broadcast %382 : vector<8x1xf32> to vector<8x8xf32>
    %384 = arith.subf %380, %383 : vector<8x8xf32>
    %385 = math.exp %384 : vector<8x8xf32>
    %cst_138 = arith.constant dense<0.000000e+00> : vector<8xf32>
    %386 = vector.multi_reduction <add>, %385, %cst_138 [1] : vector<8x8xf32> to vector<8xf32>
    %387 = vector.shape_cast %386 : vector<8xf32> to vector<8x1xf32>
    %388 = tpu.reciprocal %387 {approx = true} : vector<8x1xf32> -> vector<8x1xf32>
    %389 = vector.broadcast %388 : vector<8x1xf32> to vector<8x8xf32>
    %390 = arith.mulf %385, %389 : vector<8x8xf32>
    %391 = arith.truncf %375 : vector<8x8xf32> to vector<8x8xbf16>
    %392 = arith.truncf %390 : vector<8x8xf32> to vector<8x8xbf16>
    %cst_139 = arith.constant dense<0.000000e+00> : vector<8x8xf32>
    %393 = tpu.matmul %392, %391, %cst_139 {dimension_numbers = #tpu.dot_dimension_numbers<[1], [0], [0], [1], [0, 0, 1, 1], [], []>} : vector<8x8xbf16>, vector<8x8xbf16>, vector<8x8xf32> -> vector<8x8xf32>
    %c0_140 = arith.constant 0 : index
    %c24_141 = arith.constant 24 : index
    %394 = vector.load %arg21[%c0_140, %c24_141] : memref<16x32xf32, #tpu.memory_space<vmem>>, vector<8x8xf32>
    tpu.vector_store %arg21[%c0_140, %c24_141], %393 {strides = array<i32>} : memref<16x32xf32, #tpu.memory_space<vmem>>, vector<8x8xf32>,
    %395 = vector.extract_strided_slice %23 {offsets = [1, 0], sizes = [1, 8], strides = [1, 1]} : vector<2x8xf32> to vector<1x8xf32>
    %396 = vector.extract_strided_slice %305 {offsets = [8, 0], sizes = [8, 8], strides = [1, 1]} : vector<16x96xf32> to vector<8x8xf32>
    %397 = vector.extract_strided_slice %305 {offsets = [8, 32], sizes = [8, 8], strides = [1, 1]} : vector<16x96xf32> to vector<8x8xf32>
    %398 = vector.extract_strided_slice %305 {offsets = [8, 64], sizes = [8, 8], strides = [1, 1]} : vector<16x96xf32> to vector<8x8xf32>
    %399 = arith.truncf %396 : vector<8x8xf32> to vector<8x8xbf16>
    %400 = arith.truncf %397 : vector<8x8xf32> to vector<8x8xbf16>
    %cst_142 = arith.constant dense<0.000000e+00> : vector<8x8xf32>
    %401 = tpu.matmul %399, %400, %cst_142 {dimension_numbers = #tpu.dot_dimension_numbers<[1], [1], [0], [0], [0, 0, 1, 0], [], []>} : vector<8x8xbf16>, vector<8x8xbf16>, vector<8x8xf32> -> vector<8x8xf32>
    %402 = vector.broadcast %395 : vector<1x8xf32> to vector<8x8xf32>
    %403 = arith.addf %401, %402 : vector<8x8xf32>
    %cst_143 = arith.constant dense<0xFF800000> : vector<8xf32>
    %404 = vector.multi_reduction <maximumf>, %403, %cst_143 [1] : vector<8x8xf32> to vector<8xf32>
    %405 = vector.shape_cast %404 : vector<8xf32> to vector<8x1xf32>
    %406 = vector.broadcast %405 : vector<8x1xf32> to vector<8x8xf32>
    %407 = arith.subf %403, %406 : vector<8x8xf32>
    %408 = math.exp %407 : vector<8x8xf32>
    %cst_144 = arith.constant dense<0.000000e+00> : vector<8xf32>
    %409 = vector.multi_reduction <add>, %408, %cst_144 [1] : vector<8x8xf32> to vector<8xf32>
    %410 = vector.shape_cast %409 : vector<8xf32> to vector<8x1xf32>
    %411 = tpu.reciprocal %410 {approx = true} : vector<8x1xf32> -> vector<8x1xf32>
    %412 = vector.broadcast %411 : vector<8x1xf32> to vector<8x8xf32>
    %413 = arith.mulf %408, %412 : vector<8x8xf32>
    %414 = arith.truncf %398 : vector<8x8xf32> to vector<8x8xbf16>
    %415 = arith.truncf %413 : vector<8x8xf32> to vector<8x8xbf16>
    %cst_145 = arith.constant dense<0.000000e+00> : vector<8x8xf32>
    %416 = tpu.matmul %415, %414, %cst_145 {dimension_numbers = #tpu.dot_dimension_numbers<[1], [0], [0], [1], [0, 0, 1, 1], [], []>} : vector<8x8xbf16>, vector<8x8xbf16>, vector<8x8xf32> -> vector<8x8xf32>
    %c8_146 = arith.constant 8 : index
    %c0_147 = arith.constant 0 : index
    %417 = vector.load %arg21[%c8_146, %c0_147] : memref<16x32xf32, #tpu.memory_space<vmem>>, vector<8x8xf32>
    tpu.vector_store %arg21[%c8_146, %c0_147], %416 {strides = array<i32>} : memref<16x32xf32, #tpu.memory_space<vmem>>, vector<8x8xf32>,
    %418 = vector.extract_strided_slice %305 {offsets = [8, 8], sizes = [8, 8], strides = [1, 1]} : vector<16x96xf32> to vector<8x8xf32>
    %419 = vector.extract_strided_slice %305 {offsets = [8, 40], sizes = [8, 8], strides = [1, 1]} : vector<16x96xf32> to vector<8x8xf32>
    %420 = vector.extract_strided_slice %305 {offsets = [8, 72], sizes = [8, 8], strides = [1, 1]} : vector<16x96xf32> to vector<8x8xf32>
    %421 = arith.truncf %418 : vector<8x8xf32> to vector<8x8xbf16>
    %422 = arith.truncf %419 : vector<8x8xf32> to vector<8x8xbf16>
    %cst_148 = arith.constant dense<0.000000e+00> : vector<8x8xf32>
    %423 = tpu.matmul %421, %422, %cst_148 {dimension_numbers = #tpu.dot_dimension_numbers<[1], [1], [0], [0], [0, 0, 1, 0], [], []>} : vector<8x8xbf16>, vector<8x8xbf16>, vector<8x8xf32> -> vector<8x8xf32>
    %424 = vector.broadcast %395 : vector<1x8xf32> to vector<8x8xf32>
    %425 = arith.addf %423, %424 : vector<8x8xf32>
    %cst_149 = arith.constant dense<0xFF800000> : vector<8xf32>
    %426 = vector.multi_reduction <maximumf>, %425, %cst_149 [1] : vector<8x8xf32> to vector<8xf32>
    %427 = vector.shape_cast %426 : vector<8xf32> to vector<8x1xf32>
    %428 = vector.broadcast %427 : vector<8x1xf32> to vector<8x8xf32>
    %429 = arith.subf %425, %428 : vector<8x8xf32>
    %430 = math.exp %429 : vector<8x8xf32>
    %cst_150 = arith.constant dense<0.000000e+00> : vector<8xf32>
    %431 = vector.multi_reduction <add>, %430, %cst_150 [1] : vector<8x8xf32> to vector<8xf32>
    %432 = vector.shape_cast %431 : vector<8xf32> to vector<8x1xf32>
    %433 = tpu.reciprocal %432 {approx = true} : vector<8x1xf32> -> vector<8x1xf32>
    %434 = vector.broadcast %433 : vector<8x1xf32> to vector<8x8xf32>
    %435 = arith.mulf %430, %434 : vector<8x8xf32>
    %436 = arith.truncf %420 : vector<8x8xf32> to vector<8x8xbf16>
    %437 = arith.truncf %435 : vector<8x8xf32> to vector<8x8xbf16>
    %cst_151 = arith.constant dense<0.000000e+00> : vector<8x8xf32>
    %438 = tpu.matmul %437, %436, %cst_151 {dimension_numbers = #tpu.dot_dimension_numbers<[1], [0], [0], [1], [0, 0, 1, 1], [], []>} : vector<8x8xbf16>, vector<8x8xbf16>, vector<8x8xf32> -> vector<8x8xf32>
    %c8_152 = arith.constant 8 : index
    %c8_153 = arith.constant 8 : index
    %439 = vector.load %arg21[%c8_152, %c8_153] : memref<16x32xf32, #tpu.memory_space<vmem>>, vector<8x8xf32>
    tpu.vector_store %arg21[%c8_152, %c8_153], %438 {strides = array<i32>} : memref<16x32xf32, #tpu.memory_space<vmem>>, vector<8x8xf32>,
    %440 = vector.extract_strided_slice %305 {offsets = [8, 16], sizes = [8, 8], strides = [1, 1]} : vector<16x96xf32> to vector<8x8xf32>
    %441 = vector.extract_strided_slice %305 {offsets = [8, 48], sizes = [8, 8], strides = [1, 1]} : vector<16x96xf32> to vector<8x8xf32>
    %442 = vector.extract_strided_slice %305 {offsets = [8, 80], sizes = [8, 8], strides = [1, 1]} : vector<16x96xf32> to vector<8x8xf32>
    %443 = arith.truncf %440 : vector<8x8xf32> to vector<8x8xbf16>
    %444 = arith.truncf %441 : vector<8x8xf32> to vector<8x8xbf16>
    %cst_154 = arith.constant dense<0.000000e+00> : vector<8x8xf32>
    %445 = tpu.matmul %443, %444, %cst_154 {dimension_numbers = #tpu.dot_dimension_numbers<[1], [1], [0], [0], [0, 0, 1, 0], [], []>} : vector<8x8xbf16>, vector<8x8xbf16>, vector<8x8xf32> -> vector<8x8xf32>
    %446 = vector.broadcast %395 : vector<1x8xf32> to vector<8x8xf32>
    %447 = arith.addf %445, %446 : vector<8x8xf32>
    %cst_155 = arith.constant dense<0xFF800000> : vector<8xf32>
    %448 = vector.multi_reduction <maximumf>, %447, %cst_155 [1] : vector<8x8xf32> to vector<8xf32>
    %449 = vector.shape_cast %448 : vector<8xf32> to vector<8x1xf32>
    %450 = vector.broadcast %449 : vector<8x1xf32> to vector<8x8xf32>
    %451 = arith.subf %447, %450 : vector<8x8xf32>
    %452 = math.exp %451 : vector<8x8xf32>
    %cst_156 = arith.constant dense<0.000000e+00> : vector<8xf32>
    %453 = vector.multi_reduction <add>, %452, %cst_156 [1] : vector<8x8xf32> to vector<8xf32>
    %454 = vector.shape_cast %453 : vector<8xf32> to vector<8x1xf32>
    %455 = tpu.reciprocal %454 {approx = true} : vector<8x1xf32> -> vector<8x1xf32>
    %456 = vector.broadcast %455 : vector<8x1xf32> to vector<8x8xf32>
    %457 = arith.mulf %452, %456 : vector<8x8xf32>
    %458 = arith.truncf %442 : vector<8x8xf32> to vector<8x8xbf16>
    %459 = arith.truncf %457 : vector<8x8xf32> to vector<8x8xbf16>
    %cst_157 = arith.constant dense<0.000000e+00> : vector<8x8xf32>
    %460 = tpu.matmul %459, %458, %cst_157 {dimension_numbers = #tpu.dot_dimension_numbers<[1], [0], [0], [1], [0, 0, 1, 1], [], []>} : vector<8x8xbf16>, vector<8x8xbf16>, vector<8x8xf32> -> vector<8x8xf32>
    %c8_158 = arith.constant 8 : index
    %c16_159 = arith.constant 16 : index
    %461 = vector.load %arg21[%c8_158, %c16_159] : memref<16x32xf32, #tpu.memory_space<vmem>>, vector<8x8xf32>
    tpu.vector_store %arg21[%c8_158, %c16_159], %460 {strides = array<i32>} : memref<16x32xf32, #tpu.memory_space<vmem>>, vector<8x8xf32>,
    %462 = vector.extract_strided_slice %305 {offsets = [8, 24], sizes = [8, 8], strides = [1, 1]} : vector<16x96xf32> to vector<8x8xf32>
    %463 = vector.extract_strided_slice %305 {offsets = [8, 56], sizes = [8, 8], strides = [1, 1]} : vector<16x96xf32> to vector<8x8xf32>
    %464 = vector.extract_strided_slice %305 {offsets = [8, 88], sizes = [8, 8], strides = [1, 1]} : vector<16x96xf32> to vector<8x8xf32>
    %465 = arith.truncf %462 : vector<8x8xf32> to vector<8x8xbf16>
    %466 = arith.truncf %463 : vector<8x8xf32> to vector<8x8xbf16>
    %cst_160 = arith.constant dense<0.000000e+00> : vector<8x8xf32>
    %467 = tpu.matmul %465, %466, %cst_160 {dimension_numbers = #tpu.dot_dimension_numbers<[1], [1], [0], [0], [0, 0, 1, 0], [], []>} : vector<8x8xbf16>, vector<8x8xbf16>, vector<8x8xf32> -> vector<8x8xf32>
    %468 = vector.broadcast %395 : vector<1x8xf32> to vector<8x8xf32>
    %469 = arith.addf %467, %468 : vector<8x8xf32>
    %cst_161 = arith.constant dense<0xFF800000> : vector<8xf32>
    %470 = vector.multi_reduction <maximumf>, %469, %cst_161 [1] : vector<8x8xf32> to vector<8xf32>
    %471 = vector.shape_cast %470 : vector<8xf32> to vector<8x1xf32>
    %472 = vector.broadcast %471 : vector<8x1xf32> to vector<8x8xf32>
    %473 = arith.subf %469, %472 : vector<8x8xf32>
    %474 = math.exp %473 : vector<8x8xf32>
    %cst_162 = arith.constant dense<0.000000e+00> : vector<8xf32>
    %475 = vector.multi_reduction <add>, %474, %cst_162 [1] : vector<8x8xf32> to vector<8xf32>
    %476 = vector.shape_cast %475 : vector<8xf32> to vector<8x1xf32>
    %477 = tpu.reciprocal %476 {approx = true} : vector<8x1xf32> -> vector<8x1xf32>
    %478 = vector.broadcast %477 : vector<8x1xf32> to vector<8x8xf32>
    %479 = arith.mulf %474, %478 : vector<8x8xf32>
    %480 = arith.truncf %464 : vector<8x8xf32> to vector<8x8xbf16>
    %481 = arith.truncf %479 : vector<8x8xf32> to vector<8x8xbf16>
    %cst_163 = arith.constant dense<0.000000e+00> : vector<8x8xf32>
    %482 = tpu.matmul %481, %480, %cst_163 {dimension_numbers = #tpu.dot_dimension_numbers<[1], [0], [0], [1], [0, 0, 1, 1], [], []>} : vector<8x8xbf16>, vector<8x8xbf16>, vector<8x8xf32> -> vector<8x8xf32>
    %c8_164 = arith.constant 8 : index
    %c24_165 = arith.constant 24 : index
    %483 = vector.load %arg21[%c8_164, %c24_165] : memref<16x32xf32, #tpu.memory_space<vmem>>, vector<8x8xf32>
    tpu.vector_store %arg21[%c8_164, %c24_165], %482 {strides = array<i32>} : memref<16x32xf32, #tpu.memory_space<vmem>>, vector<8x8xf32>,
    %c0_166 = arith.constant 0 : index
    %c0_167 = arith.constant 0 : index
    %484 = vector.load %arg21[%c0_166, %c0_167] : memref<16x32xf32, #tpu.memory_space<vmem>>, vector<16x32xf32>
    %c1_168 = arith.constant 1 : index
    %c0_169 = arith.constant 0 : index
    %c0_170 = arith.constant 0 : index
    %485 = vector.load %arg6[%c1_168, %c0_169, %c0_170] : memref<2x32x32xbf16, #tpu.memory_space<vmem>>, vector<1x32x32xbf16>
    %486 = vector.shape_cast %485 : vector<1x32x32xbf16> to vector<32x32xbf16>
    %487 = arith.truncf %484 : vector<16x32xf32> to vector<16x32xbf16>
    %cst_171 = arith.constant dense<0.000000e+00> : vector<16x32xf32>
    %488 = tpu.matmul %487, %486, %cst_171 {dimension_numbers = #tpu.dot_dimension_numbers<[1], [0], [0], [1], [0, 0, 1, 1], [], []>} : vector<16x32xbf16>, vector<32x32xbf16>, vector<16x32xf32> -> vector<16x32xf32>
    %c1_172 = arith.constant 1 : index
    %c0_173 = arith.constant 0 : index
    %c0_174 = arith.constant 0 : index
    %489 = vector.load %arg7[%c1_172, %c0_173, %c0_174] : memref<2x1x32xf32, #tpu.memory_space<vmem>>, vector<1x1x32xf32>
    %490 = vector.shape_cast %489 : vector<1x1x32xf32> to vector<1x32xf32>
    %491 = vector.broadcast %490 : vector<1x32xf32> to vector<16x32xf32>
    %492 = arith.addf %488, %491 : vector<16x32xf32>
    %493 = arith.addf %492, %297 : vector<16x32xf32>
    %c1_175 = arith.constant 1 : index
    %c0_176 = arith.constant 0 : index
    %c0_177 = arith.constant 0 : index
    %494 = vector.load %arg8[%c1_175, %c0_176, %c0_177] : memref<2x1x32xf32, #tpu.memory_space<vmem>>, vector<1x1x32xf32>
    %495 = vector.shape_cast %494 : vector<1x1x32xf32> to vector<1x32xf32>
    %c1_178 = arith.constant 1 : index
    %c0_179 = arith.constant 0 : index
    %c0_180 = arith.constant 0 : index
    %496 = vector.load %arg9[%c1_178, %c0_179, %c0_180] : memref<2x1x32xf32, #tpu.memory_space<vmem>>, vector<1x1x32xf32>
    %497 = vector.shape_cast %496 : vector<1x1x32xf32> to vector<1x32xf32>
    %cst_181 = arith.constant dense<0.000000e+00> : vector<16xf32>
    %498 = vector.multi_reduction <add>, %493, %cst_181 [1] : vector<16x32xf32> to vector<16xf32>
    %499 = vector.shape_cast %498 : vector<16xf32> to vector<16x1xf32>
    %cst_182 = arith.constant 3.200000e+01 : f32
    %500 = vector.broadcast %cst_182 : f32 to vector<16x1xf32>
    %501 = arith.divf %499, %500 : vector<16x1xf32>
    %502 = vector.broadcast %501 : vector<16x1xf32> to vector<16x32xf32>
    %503 = arith.subf %493, %502 : vector<16x32xf32>
    %504 = arith.mulf %503, %503 : vector<16x32xf32>
    %cst_183 = arith.constant dense<0.000000e+00> : vector<16xf32>
    %505 = vector.multi_reduction <add>, %504, %cst_183 [1] : vector<16x32xf32> to vector<16xf32>
    %506 = vector.shape_cast %505 : vector<16xf32> to vector<16x1xf32>
    %cst_184 = arith.constant 3.200000e+01 : f32
    %507 = vector.broadcast %cst_184 : f32 to vector<16x1xf32>
    %508 = arith.divf %506, %507 : vector<16x1xf32>
    %cst_185 = arith.constant 9.99999996E-13 : f32
    %509 = vector.broadcast %cst_185 : f32 to vector<16x1xf32>
    %510 = arith.addf %508, %509 : vector<16x1xf32>
    %511 = math.rsqrt %510 : vector<16x1xf32>
    %512 = vector.broadcast %511 : vector<16x1xf32> to vector<16x32xf32>
    %513 = arith.mulf %503, %512 : vector<16x32xf32>
    %514 = vector.broadcast %495 : vector<1x32xf32> to vector<16x32xf32>
    %515 = arith.mulf %513, %514 : vector<16x32xf32>
    %516 = vector.broadcast %497 : vector<1x32xf32> to vector<16x32xf32>
    %517 = arith.addf %515, %516 : vector<16x32xf32>
    %c1_186 = arith.constant 1 : index
    %c0_187 = arith.constant 0 : index
    %c0_188 = arith.constant 0 : index
    %518 = vector.load %arg10[%c1_186, %c0_187, %c0_188] : memref<2x32x64xbf16, #tpu.memory_space<vmem>>, vector<1x32x64xbf16>
    %519 = vector.shape_cast %518 : vector<1x32x64xbf16> to vector<32x64xbf16>
    %520 = arith.truncf %517 : vector<16x32xf32> to vector<16x32xbf16>
    %cst_189 = arith.constant dense<0.000000e+00> : vector<16x64xf32>
    %521 = tpu.matmul %520, %519, %cst_189 {dimension_numbers = #tpu.dot_dimension_numbers<[1], [0], [0], [1], [0, 0, 1, 1], [], []>} : vector<16x32xbf16>, vector<32x64xbf16>, vector<16x64xf32> -> vector<16x64xf32>
    %c1_190 = arith.constant 1 : index
    %c0_191 = arith.constant 0 : index
    %c0_192 = arith.constant 0 : index
    %522 = vector.load %arg11[%c1_190, %c0_191, %c0_192] : memref<2x1x64xf32, #tpu.memory_space<vmem>>, vector<1x1x64xf32>
    %523 = vector.shape_cast %522 : vector<1x1x64xf32> to vector<1x64xf32>
    %524 = vector.broadcast %523 : vector<1x64xf32> to vector<16x64xf32>
    %525 = arith.addf %521, %524 : vector<16x64xf32>
    %cst_193 = arith.constant 5.000000e-01 : f32
    %526 = vector.broadcast %cst_193 : f32 to vector<16x64xf32>
    %527 = arith.mulf %526, %525 : vector<16x64xf32>
    %cst_194 = arith.constant 4.471500e-02 : f32
    %528 = vector.broadcast %cst_194 : f32 to vector<16x64xf32>
    %529 = arith.mulf %528, %525 : vector<16x64xf32>
    %530 = arith.mulf %529, %525 : vector<16x64xf32>
    %531 = arith.mulf %530, %525 : vector<16x64xf32>
    %532 = arith.addf %525, %531 : vector<16x64xf32>
    %cst_195 = arith.constant 0.797884583 : f32
    %533 = vector.broadcast %cst_195 : f32 to vector<16x64xf32>
    %534 = arith.mulf %533, %532 : vector<16x64xf32>
    %535 = math.tanh %534 : vector<16x64xf32>
    %cst_196 = arith.constant 1.000000e+00 : f32
    %536 = vector.broadcast %cst_196 : f32 to vector<16x64xf32>
    %537 = arith.addf %536, %535 : vector<16x64xf32>
    %538 = arith.mulf %527, %537 : vector<16x64xf32>
    %c1_197 = arith.constant 1 : index
    %c0_198 = arith.constant 0 : index
    %c0_199 = arith.constant 0 : index
    %539 = vector.load %arg12[%c1_197, %c0_198, %c0_199] : memref<2x64x32xbf16, #tpu.memory_space<vmem>>, vector<1x64x32xbf16>
    %540 = vector.shape_cast %539 : vector<1x64x32xbf16> to vector<64x32xbf16>
    %541 = arith.truncf %538 : vector<16x64xf32> to vector<16x64xbf16>
    %cst_200 = arith.constant dense<0.000000e+00> : vector<16x32xf32>
    %542 = tpu.matmul %541, %540, %cst_200 {dimension_numbers = #tpu.dot_dimension_numbers<[1], [0], [0], [1], [0, 0, 1, 1], [], []>} : vector<16x64xbf16>, vector<64x32xbf16>, vector<16x32xf32> -> vector<16x32xf32>
    %c1_201 = arith.constant 1 : index
    %c0_202 = arith.constant 0 : index
    %c0_203 = arith.constant 0 : index
    %543 = vector.load %arg13[%c1_201, %c0_202, %c0_203] : memref<2x1x32xf32, #tpu.memory_space<vmem>>, vector<1x1x32xf32>
    %544 = vector.shape_cast %543 : vector<1x1x32xf32> to vector<1x32xf32>
    %545 = vector.broadcast %544 : vector<1x32xf32> to vector<16x32xf32>
    %546 = arith.addf %542, %545 : vector<16x32xf32>
    %547 = arith.addf %546, %517 : vector<16x32xf32>
    %c1_204 = arith.constant 1 : index
    %c0_205 = arith.constant 0 : index
    %c0_206 = arith.constant 0 : index
    %548 = vector.load %arg14[%c1_204, %c0_205, %c0_206] : memref<2x1x32xf32, #tpu.memory_space<vmem>>, vector<1x1x32xf32>
    %549 = vector.shape_cast %548 : vector<1x1x32xf32> to vector<1x32xf32>
    %c1_207 = arith.constant 1 : index
    %c0_208 = arith.constant 0 : index
    %c0_209 = arith.constant 0 : index
    %550 = vector.load %arg15[%c1_207, %c0_208, %c0_209] : memref<2x1x32xf32, #tpu.memory_space<vmem>>, vector<1x1x32xf32>
    %551 = vector.shape_cast %550 : vector<1x1x32xf32> to vector<1x32xf32>
    %cst_210 = arith.constant dense<0.000000e+00> : vector<16xf32>
    %552 = vector.multi_reduction <add>, %547, %cst_210 [1] : vector<16x32xf32> to vector<16xf32>
    %553 = vector.shape_cast %552 : vector<16xf32> to vector<16x1xf32>
    %cst_211 = arith.constant 3.200000e+01 : f32
    %554 = vector.broadcast %cst_211 : f32 to vector<16x1xf32>
    %555 = arith.divf %553, %554 : vector<16x1xf32>
    %556 = vector.broadcast %555 : vector<16x1xf32> to vector<16x32xf32>
    %557 = arith.subf %547, %556 : vector<16x32xf32>
    %558 = arith.mulf %557, %557 : vector<16x32xf32>
    %cst_212 = arith.constant dense<0.000000e+00> : vector<16xf32>
    %559 = vector.multi_reduction <add>, %558, %cst_212 [1] : vector<16x32xf32> to vector<16xf32>
    %560 = vector.shape_cast %559 : vector<16xf32> to vector<16x1xf32>
    %cst_213 = arith.constant 3.200000e+01 : f32
    %561 = vector.broadcast %cst_213 : f32 to vector<16x1xf32>
    %562 = arith.divf %560, %561 : vector<16x1xf32>
    %cst_214 = arith.constant 9.99999996E-13 : f32
    %563 = vector.broadcast %cst_214 : f32 to vector<16x1xf32>
    %564 = arith.addf %562, %563 : vector<16x1xf32>
    %565 = math.rsqrt %564 : vector<16x1xf32>
    %566 = vector.broadcast %565 : vector<16x1xf32> to vector<16x32xf32>
    %567 = arith.mulf %557, %566 : vector<16x32xf32>
    %568 = vector.broadcast %549 : vector<1x32xf32> to vector<16x32xf32>
    %569 = arith.mulf %567, %568 : vector<16x32xf32>
    %570 = vector.broadcast %551 : vector<1x32xf32> to vector<16x32xf32>
    %571 = arith.addf %569, %570 : vector<16x32xf32>
    %572 = vector.extract_strided_slice %571 {offsets = [0, 0], sizes = [1, 32], strides = [1, 1]} : vector<16x32xf32> to vector<1x32xf32>
    %573 = vector.extract_strided_slice %571 {offsets = [8, 0], sizes = [1, 32], strides = [1, 1]} : vector<16x32xf32> to vector<1x32xf32>
    %574 = tpu.concatenate %572, %573 in 0 : vector<1x32xf32>, vector<1x32xf32> -> vector<2x32xf32>
    %c0_215 = arith.constant 0 : index
    %c0_216 = arith.constant 0 : index
    %575 = vector.load %arg16[%c0_215, %c0_216] : memref<32x32xbf16, #tpu.memory_space<vmem>>, vector<32x32xbf16>
    %576 = arith.truncf %574 : vector<2x32xf32> to vector<2x32xbf16>
    %cst_217 = arith.constant dense<0.000000e+00> : vector<2x32xf32>
    %577 = tpu.matmul %576, %575, %cst_217 {dimension_numbers = #tpu.dot_dimension_numbers<[1], [0], [0], [1], [0, 0, 1, 1], [], []>} : vector<2x32xbf16>, vector<32x32xbf16>, vector<2x32xf32> -> vector<2x32xf32>
    %c0_218 = arith.constant 0 : index
    %c0_219 = arith.constant 0 : index
    %578 = vector.load %arg17[%c0_218, %c0_219] : memref<1x32xf32, #tpu.memory_space<vmem>>, vector<1x32xf32>
    %579 = vector.broadcast %578 : vector<1x32xf32> to vector<2x32xf32>
    %580 = arith.addf %577, %579 : vector<2x32xf32>
    %581 = math.tanh %580 : vector<2x32xf32>
    %c0_220 = arith.constant 0 : index
    %c0_221 = arith.constant 0 : index
    %582 = vector.load %arg18[%c0_220, %c0_221] : memref<32x128xbf16, #tpu.memory_space<vmem>>, vector<32x128xbf16>
    %583 = arith.truncf %581 : vector<2x32xf32> to vector<2x32xbf16>
    %cst_222 = arith.constant dense<0.000000e+00> : vector<2x128xf32>
    %584 = tpu.matmul %583, %582, %cst_222 {dimension_numbers = #tpu.dot_dimension_numbers<[1], [0], [0], [1], [0, 0, 1, 1], [], []>} : vector<2x32xbf16>, vector<32x128xbf16>, vector<2x128xf32> -> vector<2x128xf32>
    %c0_223 = arith.constant 0 : index
    %c0_224 = arith.constant 0 : index
    %585 = vector.load %arg19[%c0_223, %c0_224] : memref<1x128xf32, #tpu.memory_space<vmem>>, vector<1x128xf32>
    %586 = vector.broadcast %585 : vector<1x128xf32> to vector<2x128xf32>
    %587 = arith.addf %584, %586 : vector<2x128xf32>
    %c0_225 = arith.constant 0 : index
    %c0_226 = arith.constant 0 : index
    %588 = vector.load %arg20[%c0_225, %c0_226] : memref<2x128xf32, #tpu.memory_space<vmem>>, vector<2x128xf32>
    tpu.vector_store %arg20[%c0_225, %c0_226], %587 {strides = array<i32>} : memref<2x128xf32, #tpu.memory_space<vmem>>, vector<2x128xf32>,
    return
  }
}

</mosaic_0001>

<llo_original>
// kernel: dental_forward.1
$region0: #{dental_forward.1}
  #allocation0 [shape = 'u32[]', space=smem, size = 0x4, offset = 0x4, fixed_abs, tag = 'smem constant byte address 0x4 - core index']
  #allocation1 [shape = 'u32[144,128]{1,0:T(1,128)}', space=vmem, size = 0x12000, scoped, tag = 'internal scratch']
  #allocation2 [shape = 'f32[16,32]{1,0:T(8,128)}', space=vmem, size = 0x2000, scoped, tag = 'scratch operand']
  %s0 = inlined_call_operand.vmem [shape: f32[16,32], index: 0, kind: input, shape index: {}]
  %s1 = inlined_call_operand.vmem [shape: f32[2,8], index: 1, kind: input, shape index: {}]
  %s2 = inlined_call_operand.vmem [shape: f32[1,32], index: 2, kind: input, shape index: {}]
  %s3 = inlined_call_operand.vmem [shape: f32[1,32], index: 3, kind: input, shape index: {}]
  %s4 = inlined_call_operand.vmem [shape: bf16[2,32,96], index: 4, kind: input, shape index: {}]
  %s5 = inlined_call_operand.vmem [shape: f32[2,1,96], index: 5, kind: input, shape index: {}]
  %s6 = inlined_call_operand.vmem [shape: bf16[2,32,32], index: 6, kind: input, shape index: {}]
  %s7 = inlined_call_operand.vmem [shape: f32[2,1,32], index: 7, kind: input, shape index: {}]
  %s8 = inlined_call_operand.vmem [shape: f32[2,1,32], index: 8, kind: input, shape index: {}]
  %s9 = inlined_call_operand.vmem [shape: f32[2,1,32], index: 9, kind: input, shape index: {}]
  %s10 = inlined_call_operand.vmem [shape: bf16[2,32,64], index: 10, kind: input, shape index: {}]
  %s11 = inlined_call_operand.vmem [shape: f32[2,1,64], index: 11, kind: input, shape index: {}]
  %s12 = inlined_call_operand.vmem [shape: bf16[2,64,32], index: 12, kind: input, shape index: {}]
  %s13 = inlined_call_operand.vmem [shape: f32[2,1,32], index: 13, kind: input, shape index: {}]
  %s14 = inlined_call_operand.vmem [shape: f32[2,1,32], index: 14, kind: input, shape index: {}]
  %s15 = inlined_call_operand.vmem [shape: f32[2,1,32], index: 15, kind: input, shape index: {}]
  %s16 = inlined_call_operand.vmem [shape: bf16[32,32], index: 16, kind: input, shape index: {}]
  %s17 = inlined_call_operand.vmem [shape: f32[1,32], index: 17, kind: input, shape index: {}]
  %s18 = inlined_call_operand.vmem [shape: bf16[32,128], index: 18, kind: input, shape index: {}]
  %s19 = inlined_call_operand.vmem [shape: f32[1,128], index: 19, kind: input, shape index: {}]
  %s20 = inlined_call_operand.hbm [shape: f32[2,128], index: 20, kind: output, shape index: {}]
  %s21 = sld [smem:[#allocation0]]
  $region90: #{dental_forward.1} parent=0
    _
  %s23 = ssub.s32 1, %s21
  %s24 = scalar_select 0, %s23, %s21
  $region1: #{dental_forward.1} parent=0
    #allocation3 [shape = 'u8[1024]{0}', space=vmem, size = 0x400, scoped, tag = 'output window, operand 0, single buffered']
    #allocation4 [shape = 's32[1]{0}', space=sflag, size = 0x4, scoped, tag = 'scoped memory for dental_forward.1']
    %25 = vsyncpa [#allocation4], 0
    // Predicated region
    $region2: #{dental_forward.1} parent=1 // pred_check
      _
    $region3: #{dental_forward.1} parent=1 // pred_check_branch
      %27 = sbr.rel (0) target = $region5
    $region4: #{dental_forward.1} parent=1 // pred_region
      _
    $region5: #{dental_forward.1} parent=1 // pred_fallthru
      _
    // Predicated region
    $region6: #{dental_forward.1} parent=1 // pred_check
      _
    $region7: #{dental_forward.1} parent=1 // pred_check_branch
      %29 = sbr.rel (0) target = $region9
    $region8: #{dental_forward.1} parent=1 // pred_region
      _
    $region9: #{dental_forward.1} parent=1 // pred_fallthru
      _
    // Predicated region
    $region10: #{dental_forward.1} parent=1 // pred_check
      _
    $region11: #{dental_forward.1} parent=1 // pred_check_branch
      %31 = sbr.rel (0) target = $region13
    $region12: #{dental_forward.1} parent=1 // pred_region
      _
    $region13: #{dental_forward.1} parent=1 // pred_fallthru
      _
    // Predicated region
    $region14: #{dental_forward.1} parent=1 // pred_check
      _
    $region15: #{dental_forward.1} parent=1 // pred_check_branch
      %33 = sbr.rel (0) target = $region17
    $region16: #{dental_forward.1} parent=1 // pred_region
      _
    $region17: #{dental_forward.1} parent=1 // pred_fallthru
      _
    // Predicated region
    $region18: #{dental_forward.1} parent=1 // pred_check
      _
    $region19: #{dental_forward.1} parent=1 // pred_check_branch
      %35 = sbr.rel (0) target = $region21
    $region20: #{dental_forward.1} parent=1 // pred_region
      _
    $region21: #{dental_forward.1} parent=1 // pred_fallthru
      _
    // Predicated region
    $region22: #{dental_forward.1} parent=1 // pred_check
      _
    $region23: #{dental_forward.1} parent=1 // pred_check_branch
      %37 = sbr.rel (0) target = $region25
    $region24: #{dental_forward.1} parent=1 // pred_region
      _
    $region25: #{dental_forward.1} parent=1 // pred_fallthru
      _
    // Predicated region
    $region26: #{dental_forward.1} parent=1 // pred_check
      _
    $region27: #{dental_forward.1} parent=1 // pred_check_branch
      %39 = sbr.rel (0) target = $region29
    $region28: #{dental_forward.1} parent=1 // pred_region
      _
    $region29: #{dental_forward.1} parent=1 // pred_fallthru
      _
    // Predicated region
    $region30: #{dental_forward.1} parent=1 // pred_check
      _
    $region31: #{dental_forward.1} parent=1 // pred_check_branch
      %41 = sbr.rel (0) target = $region33
    $region32: #{dental_forward.1} parent=1 // pred_region
      _
    $region33: #{dental_forward.1} parent=1 // pred_fallthru
      _
    // Predicated region
    $region34: #{dental_forward.1} parent=1 // pred_check
      _
    $region35: #{dental_forward.1} parent=1 // pred_check_branch
      %43 = sbr.rel (0) target = $region37
    $region36: #{dental_forward.1} parent=1 // pred_region
      _
    $region37: #{dental_forward.1} parent=1 // pred_fallthru
      _
    // Predicated region
    $region38: #{dental_forward.1} parent=1 // pred_check
      _
    $region39: #{dental_forward.1} parent=1 // pred_check_branch
      %45 = sbr.rel (0) target = $region41
    $region40: #{dental_forward.1} parent=1 // pred_region
      _
    $region41: #{dental_forward.1} parent=1 // pred_fallthru
      _
    // Predicated region
    $region42: #{dental_forward.1} parent=1 // pred_check
      _
    $region43: #{dental_forward.1} parent=1 // pred_check_branch
      %47 = sbr.rel (0) target = $region45
    $region44: #{dental_forward.1} parent=1 // pred_region
      _
    $region45: #{dental_forward.1} parent=1 // pred_fallthru
      _
    // Predicated region
    $region46: #{dental_forward.1} parent=1 // pred_check
      _
    $region47: #{dental_forward.1} parent=1 // pred_check_branch
      %49 = sbr.rel (0) target = $region49
    $region48: #{dental_forward.1} parent=1 // pred_region
      _
    $region49: #{dental_forward.1} parent=1 // pred_fallthru
      _
    // Predicated region
    $region50: #{dental_forward.1} parent=1 // pred_check
      _
    $region51: #{dental_forward.1} parent=1 // pred_check_branch
      %51 = sbr.rel (0) target = $region53
    $region52: #{dental_forward.1} parent=1 // pred_region
      _
    $region53: #{dental_forward.1} parent=1 // pred_fallthru
      _
    // Predicated region
    $region54: #{dental_forward.1} parent=1 // pred_check
      _
    $region55: #{dental_forward.1} parent=1 // pred_check_branch
      %53 = sbr.rel (0) target = $region57
    $region56: #{dental_forward.1} parent=1 // pred_region
      _
    $region57: #{dental_forward.1} parent=1 // pred_fallthru
      _
    // Predicated region
    $region58: #{dental_forward.1} parent=1 // pred_check
      _
    $region59: #{dental_forward.1} parent=1 // pred_check_branch
      %55 = sbr.rel (0) target = $region61
    $region60: #{dental_forward.1} parent=1 // pred_region
      _
    $region61: #{dental_forward.1} parent=1 // pred_fallthru
      _
    // Predicated region
    $region62: #{dental_forward.1} parent=1 // pred_check
      _
    $region63: #{dental_forward.1} parent=1 // pred_check_branch
      %57 = sbr.rel (0) target = $region65
    $region64: #{dental_forward.1} parent=1 // pred_region
      _
    $region65: #{dental_forward.1} parent=1 // pred_fallthru
      _
    // Predicated region
    $region66: #{dental_forward.1} parent=1 // pred_check
      _
    $region67: #{dental_forward.1} parent=1 // pred_check_branch
      %59 = sbr.rel (0) target = $region69
    $region68: #{dental_forward.1} parent=1 // pred_region
      _
    $region69: #{dental_forward.1} parent=1 // pred_fallthru
      _
    // Predicated region
    $region70: #{dental_forward.1} parent=1 // pred_check
      _
    $region71: #{dental_forward.1} parent=1 // pred_check_branch
      %61 = sbr.rel (0) target = $region73
    $region72: #{dental_forward.1} parent=1 // pred_region
      _
    $region73: #{dental_forward.1} parent=1 // pred_fallthru
      _
    // Predicated region
    $region74: #{dental_forward.1} parent=1 // pred_check
      _
    $region75: #{dental_forward.1} parent=1 // pred_check_branch
      %63 = sbr.rel (0) target = $region77
    $region76: #{dental_forward.1} parent=1 // pred_region
      _
    $region77: #{dental_forward.1} parent=1 // pred_fallthru
      _
    // Predicated region
    $region78: #{dental_forward.1} parent=1 // pred_check
      _
    $region79: #{dental_forward.1} parent=1 // pred_check_branch
      %65 = sbr.rel (0) target = $region81
    $region80: #{dental_forward.1} parent=1 // pred_region
      _
    $region81: #{dental_forward.1} parent=1 // pred_fallthru
      _
    %v67 = vld [vmem:[%s0] sm:$0xff]
    %v68 = vld [vmem:[%s0 + $0x8] sm:$0xff]
    %v69 = vld [vmem:[%s2] sm:$0x1]
    %v70 = vld [vmem:[%s3] sm:$0x1]
    %vm71 = vcmask 261120
    %v72 = vsel %vm71, %v67, 0.0
    %73 = vadd.xlane.f32.xlu0 %v72
    %v74 = vpop.xlane.xlu0 %73
    %v75 = vsel %vm71, %v68, 0.0
    %76 = vadd.xlane.f32.xlu0 %v75
    %v77 = vpop.xlane.xlu0 %76
    %v78 = vrcp.pop 32.0
    %v79 = vmul.f32 %v74, %v78
    %v80 = vmul.f32 %v77, %v78
    %v81 = vsub.f32 %v67, %v79
    %v82 = vsub.f32 %v68, %v80
    %v83 = vmul.f32 %v81, %v81
    %v84 = vmul.f32 %v82, %v82
    %v85 = vsel %vm71, %v83, 0.0
    %86 = vadd.xlane.f32.xlu0 %v85
    %v87 = vpop.xlane.xlu0 %86
    %v88 = vsel %vm71, %v84, 0.0
    %89 = vadd.xlane.f32.xlu0 %v88
    %v90 = vpop.xlane.xlu0 %89
    %v91 = vmul.f32 %v87, %v78
    %v92 = vmul.f32 %v90, %v78
    %v93 = vadd.f32 %v91, 1e-12
    %v94 = vadd.f32 %v92, 1e-12
    %v95 = vrsqrt.pop %v93
    %v96 = vrsqrt.pop %v94
    %v97 = vmul.f32 %v81, %v95
    %v98 = vmul.f32 %v82, %v96
    %v100 = vlaneseq
    %v101 = vshrl.u32 %v100, 7
    %v102 = vsub.s32 0, %v101
    %v103 = vrot.slane %v69, %v102
    %v105 = vmul.f32 %v97, %v103
    %v106 = vmul.f32 %v98, %v103
    %v108 = vlaneseq
    %v109 = vshrl.u32 %v108, 7
    %v110 = vsub.s32 0, %v109
    %v111 = vrot.slane %v70, %v110
    %v113 = vadd.f32 %v105, %v111
    %v114 = vadd.f32 %v106, %v111
    %v115 = vld [vmem:[%s1] sm:$0x3]
    %v116 = vld [vmem:[%s4] sm:$0xf]
    %v117 = vld [vmem:[%s4 + $0x4] sm:$0xf]
    %v118 = vld [vmem:[%s4 + $0x8] sm:$0xf]
    %v119 = vld [vmem:[%s4 + $0xc] sm:$0xf]
    %v120 = vpack.c.bf16 %v114, %v113
    %v121 = vld [vmem:[%s5] sm:$0x1]
    %v123 = vlaneseq
    %v124 = vshrl.u32 %v123, 7
    %v125 = vsub.s32 0, %v124
    %v126 = vrot.slane %v121, %v125
    %v132 = vunpack.c.l.b16 %v116
    %v133 = vunpack.c.l.b16 %v117
    %v134 = vunpack.c.l.b16 %v118
    %v135 = vunpack.c.l.b16 %v119
    %v136 = vpack.c.b16 %v133, %v132
    %v137 = vpack.c.b16 %v135, %v134
    %v141 = vsel %vm71, %v120, 0
    %143 = vmatprep.subr.bf16.mxu0 0
    %144 = vmatpush1.bf16.msra.mxu0 %v136
    %145 = vmatprep.subr.bf16.mxu0 0
    %146 = vmatpush1.bf16.msra.mxu0 %v137
    %147 = vmatprep.subr.bf16.mxu0 0
    %148 = vmatpush1.bf16.msra.mxu0 0
    %149 = vmatprep.subr.bf16.mxu0 0
    %150 = vmatpush1.bf16.msra.mxu0 0
    %151 = vmatprep.subr.bf16.mxu0 0
    %152 = vmatpush1.bf16.msra.mxu0 0
    %153 = vmatprep.subr.bf16.mxu0 0
    %154 = vmatpush1.bf16.msra.mxu0 0
    %155 = vmatprep.subr.bf16.mxu0 0
    %156 = vmatpush1.bf16.msra.mxu0 0
    %157 = vmatprep.subr.bf16.mxu0 0
    %158 = vmatpush1.bf16.msra.mxu0 0
    %159 = vmatprep.subr.bf16.mxu0 0
    %160 = vmatpush1.bf16.msra.mxu0 0
    %161 = vmatprep.subr.bf16.mxu0 0
    %162 = vmatpush1.bf16.msra.mxu0 0
    %163 = vmatprep.subr.bf16.mxu0 0
    %164 = vmatpush1.bf16.msra.mxu0 0
    %165 = vmatprep.subr.bf16.mxu0 0
    %166 = vmatpush1.bf16.msra.mxu0 0
    %167 = vmatprep.subr.bf16.mxu0 0
    %168 = vmatpush1.bf16.msra.mxu0 0
    %169 = vmatprep.subr.bf16.mxu0 0
    %170 = vmatpush1.bf16.msra.mxu0 0
    %171 = vmatprep.subr.bf16.mxu0 0
    %172 = vmatpush1.bf16.msra.mxu0 0
    %173 = vmatprep.subr.bf16.mxu0 0
    %174 = vmatpush1.bf16.msra.mxu0 0
    %175 = vmatprep.mubr.bf16.mxu0 0
    %176 = vmatmul.mubr.bf16.gmra.mrb[0].mxu0 %v141
    %v177 = vpop.f32.mrb[0].mxu0
    %v178 = vadd.f32 %v126, %v177
    %v179 = vpop.f32.mrb[0].mxu0
    %v180 = vpop.f32.mrb[0].mxu0
    %v181 = vadd.f32 %v126, %v180
    %v182 = vpop.f32.mrb[0].mxu0
    %183 = vdwg.mxu0
    %v184 = vpack.c.bf16 %v178, %v178
    %v185 = vlaneseq
    %v186 = vshrl.u32 %v185, 7
    %v187 = vsub.s32 0, %v186
    %v188 = vrot.slane %v115, %v187
    %190 = vrot.lane.b32.xlu0 %v184, 96
    %v191 = vpop.permute.xlu0 %190
    %vm192 = vcmask 64512
    %v194 = vsel %vm192, %v184, 0
    %v197 = vsel %vm192, %v191, 0
    %199 = vmatprep.subr.bf16.mxu0 0
    %200 = vmatpush1.bf16.xpose.msra.mxu0 %v197
    %201 = vmatprep.subr.bf16.mxu0 0
    %202 = vmatpush1.bf16.xpose.msra.mxu0 0
    %203 = vmatprep.subr.bf16.mxu0 0
    %204 = vmatpush1.bf16.xpose.msra.mxu0 0
    %205 = vmatprep.subr.bf16.mxu0 0
    %206 = vmatpush1.bf16.xpose.msra.mxu0 0
    %207 = vmatprep.subr.bf16.mxu0 0
    %208 = vmatpush1.bf16.xpose.msra.mxu0 0
    %209 = vmatprep.subr.bf16.mxu0 0
    %210 = vmatpush1.bf16.xpose.msra.mxu0 0
    %211 = vmatprep.subr.bf16.mxu0 0
    %212 = vmatpush1.bf16.xpose.msra.mxu0 0
    %213 = vmatprep.subr.bf16.mxu0 0
    %214 = vmatpush1.bf16.xpose.msra.mxu0 0
    %215 = vmatprep.subr.bf16.mxu0 0
    %216 = vmatpush1.bf16.xpose.msra.mxu0 0
    %217 = vmatprep.subr.bf16.mxu0 0
    %218 = vmatpush1.bf16.xpose.msra.mxu0 0
    %219 = vmatprep.subr.bf16.mxu0 0
    %220 = vmatpush1.bf16.xpose.msra.mxu0 0
    %221 = vmatprep.subr.bf16.mxu0 0
    %222 = vmatpush1.bf16.xpose.msra.mxu0 0
    %223 = vmatprep.subr.bf16.mxu0 0
    %224 = vmatpush1.bf16.xpose.msra.mxu0 0
    %225 = vmatprep.subr.bf16.mxu0 0
    %226 = vmatpush1.bf16.xpose.msra.mxu0 0
    %227 = vmatprep.subr.bf16.mxu0 0
    %228 = vmatpush1.bf16.xpose.msra.mxu0 0
    %229 = vmatprep.subr.bf16.mxu0 0
    %230 = vmatpush1.bf16.xpose.msra.mxu0 0
    %231 = vmatprep.mubr.bf16.mxu0 0
    %232 = vmatmul.mubr.bf16.gmra.mrb[0].mxu0 %v194
    %v233 = vpop.f32.mrb[0].mxu0
    %v234 = vadd.f32 %v188, %v233
    %v235 = vpop.f32.mrb[0].mxu0
    %v236 = vpop.f32.mrb[0].mxu0
    %v237 = vpop.f32.mrb[0].mxu0
    %238 = vdwg.mxu0
    %v239 = vsel %vm192, %v234, -inf
    %240 = vmax.xlane.f32.xlu0 %v239
    %v241 = vpop.xlane.xlu0 %240
    %v242 = vsub.f32 %v234, %v241
    %v243 = vmul.f32 %v242, 1.442695
    %v244 = vpow.pop %v243
    %v245 = vsel %vm192, %v244, 0.0
    %246 = vadd.xlane.f32.xlu0 %v245
    %v247 = vpop.xlane.xlu0 %246
    %v248 = vrcp.pop %v247
    %v249 = vmul.f32 %v244, %v248
    %v250 = vpack.c.bf16 %v249, %v249
    %251 = vrot.lane.b32.xlu0 %v184, 64
    %v252 = vpop.permute.xlu0 %251
    %v254 = vsel %vm192, %v250, 0
    %vm256 = vcmask 1043456
    %v258 = vsel %vm256, %v252, 0
    %260 = vmatprep.subr.bf16.mxu0 0
    %261 = vmatpush1.bf16.msra.mxu0 %v258
    %262 = vmatprep.subr.bf16.mxu0 0
    %263 = vmatpush1.bf16.msra.mxu0 0
    %264 = vmatprep.subr.bf16.mxu0 0
    %265 = vmatpush1.bf16.msra.mxu0 0
    %266 = vmatprep.subr.bf16.mxu0 0
    %267 = vmatpush1.bf16.msra.mxu0 0
    %268 = vmatprep.subr.bf16.mxu0 0
    %269 = vmatpush1.bf16.msra.mxu0 0
    %270 = vmatprep.subr.bf16.mxu0 0
    %271 = vmatpush1.bf16.msra.mxu0 0
    %272 = vmatprep.subr.bf16.mxu0 0
    %273 = vmatpush1.bf16.msra.mxu0 0
    %274 = vmatprep.subr.bf16.mxu0 0
    %275 = vmatpush1.bf16.msra.mxu0 0
    %276 = vmatprep.subr.bf16.mxu0 0
    %277 = vmatpush1.bf16.msra.mxu0 0
    %278 = vmatprep.subr.bf16.mxu0 0
    %279 = vmatpush1.bf16.msra.mxu0 0
    %280 = vmatprep.subr.bf16.mxu0 0
    %281 = vmatpush1.bf16.msra.mxu0 0
    %282 = vmatprep.subr.bf16.mxu0 0
    %283 = vmatpush1.bf16.msra.mxu0 0
    %284 = vmatprep.subr.bf16.mxu0 0
    %285 = vmatpush1.bf16.msra.mxu0 0
    %286 = vmatprep.subr.bf16.mxu0 0
    %287 = vmatpush1.bf16.msra.mxu0 0
    %288 = vmatprep.subr.bf16.mxu0 0
    %289 = vmatpush1.bf16.msra.mxu0 0
    %290 = vmatprep.subr.bf16.mxu0 0
    %291 = vmatpush1.bf16.msra.mxu0 0
    %292 = vmatprep.mubr.bf16.mxu0 0
    %293 = vmatmul.mubr.bf16.gmra.mrb[0].mxu0 %v254
    %v294 = vpop.f32.mrb[0].mxu0
    %v295 = vadd.f32 0.0, %v294
    %v296 = vpop.f32.mrb[0].mxu0
    %v297 = vpop.f32.mrb[0].mxu0
    %v298 = vpop.f32.mrb[0].mxu0
    %299 = vdwg.mxu0
    %300 = vst.msk [vmem:[#allocation2] sm:$0xff] %vm192, %v295
    %301 = vrot.lane.b32.xlu0 %v184, 120
    %v302 = vpop.permute.xlu0 %301
    %303 = vrot.lane.b32.xlu0 %v184, 88
    %v304 = vpop.permute.xlu0 %303
    %v306 = vsel %vm192, %v302, 0
    %v309 = vsel %vm192, %v304, 0
    %311 = vmatprep.subr.bf16.mxu0 0
    %312 = vmatpush1.bf16.xpose.msra.mxu0 %v309
    %313 = vmatprep.subr.bf16.mxu0 0
    %314 = vmatpush1.bf16.xpose.msra.mxu0 0
    %315 = vmatprep.subr.bf16.mxu0 0
    %316 = vmatpush1.bf16.xpose.msra.mxu0 0
    %317 = vmatprep.subr.bf16.mxu0 0
    %318 = vmatpush1.bf16.xpose.msra.mxu0 0
    %319 = vmatprep.subr.bf16.mxu0 0
    %320 = vmatpush1.bf16.xpose.msra.mxu0 0
    %321 = vmatprep.subr.bf16.mxu0 0
    %322 = vmatpush1.bf16.xpose.msra.mxu0 0
    %323 = vmatprep.subr.bf16.mxu0 0
    %324 = vmatpush1.bf16.xpose.msra.mxu0 0
    %325 = vmatprep.subr.bf16.mxu0 0
    %326 = vmatpush1.bf16.xpose.msra.mxu0 0
    %327 = vmatprep.subr.bf16.mxu0 0
    %328 = vmatpush1.bf16.xpose.msra.mxu0 0
    %329 = vmatprep.subr.bf16.mxu0 0
    %330 = vmatpush1.bf16.xpose.msra.mxu0 0
    %331 = vmatprep.subr.bf16.mxu0 0
    %332 = vmatpush1.bf16.xpose.msra.mxu0 0
    %333 = vmatprep.subr.bf16.mxu0 0
    %334 = vmatpush1.bf16.xpose.msra.mxu0 0
    %335 = vmatprep.subr.bf16.mxu0 0
    %336 = vmatpush1.bf16.xpose.msra.mxu0 0
    %337 = vmatprep.subr.bf16.mxu0 0
    %338 = vmatpush1.bf16.xpose.msra.mxu0 0
    %339 = vmatprep.subr.bf16.mxu0 0
    %340 = vmatpush1.bf16.xpose.msra.mxu0 0
    %341 = vmatprep.subr.bf16.mxu0 0
    %342 = vmatpush1.bf16.xpose.msra.mxu0 0
    %343 = vmatprep.mubr.bf16.mxu0 0
    %344 = vmatmul.mubr.bf16.gmra.mrb[0].mxu0 %v306
    %v345 = vpop.f32.mrb[0].mxu0
    %v346 = vadd.f32 %v188, %v345
    %v347 = vpop.f32.mrb[0].mxu0
    %v348 = vpop.f32.mrb[0].mxu0
    %v349 = vpop.f32.mrb[0].mxu0
    %350 = vdwg.mxu0
    %v351 = vsel %vm192, %v346, -inf
    %352 = vmax.xlane.f32.xlu0 %v351
    %v353 = vpop.xlane.xlu0 %352
    %v354 = vsub.f32 %v346, %v353
    %v355 = vmul.f32 %v354, 1.442695
    %v356 = vpow.pop %v355
    %v357 = vsel %vm192, %v356, 0.0
    %358 = vadd.xlane.f32.xlu0 %v357
    %v359 = vpop.xlane.xlu0 %358
    %v360 = vrcp.pop %v359
    %v361 = vmul.f32 %v356, %v360
    %v362 = vpack.c.bf16 %v361, %v361
    %363 = vrot.lane.b32.xlu0 %v184, 56
    %v364 = vpop.permute.xlu0 %363
    %v366 = vsel %vm192, %v362, 0
    %v369 = vsel %vm256, %v364, 0
    %371 = vmatprep.subr.bf16.mxu0 0
    %372 = vmatpush1.bf16.msra.mxu0 %v369
    %373 = vmatprep.subr.bf16.mxu0 0
    %374 = vmatpush1.bf16.msra.mxu0 0
    %375 = vmatprep.subr.bf16.mxu0 0
    %376 = vmatpush1.bf16.msra.mxu0 0
    %377 = vmatprep.subr.bf16.mxu0 0
    %378 = vmatpush1.bf16.msra.mxu0 0
    %379 = vmatprep.subr.bf16.mxu0 0
    %380 = vmatpush1.bf16.msra.mxu0 0
    %381 = vmatprep.subr.bf16.mxu0 0
    %382 = vmatpush1.bf16.msra.mxu0 0
    %383 = vmatprep.subr.bf16.mxu0 0
    %384 = vmatpush1.bf16.msra.mxu0 0
    %385 = vmatprep.subr.bf16.mxu0 0
    %386 = vmatpush1.bf16.msra.mxu0 0
    %387 = vmatprep.subr.bf16.mxu0 0
    %388 = vmatpush1.bf16.msra.mxu0 0
    %389 = vmatprep.subr.bf16.mxu0 0
    %390 = vmatpush1.bf16.msra.mxu0 0
    %391 = vmatprep.subr.bf16.mxu0 0
    %392 = vmatpush1.bf16.msra.mxu0 0
    %393 = vmatprep.subr.bf16.mxu0 0
    %394 = vmatpush1.bf16.msra.mxu0 0
    %395 = vmatprep.subr.bf16.mxu0 0
    %396 = vmatpush1.bf16.msra.mxu0 0
    %397 = vmatprep.subr.bf16.mxu0 0
    %398 = vmatpush1.bf16.msra.mxu0 0
    %399 = vmatprep.subr.bf16.mxu0 0
    %400 = vmatpush1.bf16.msra.mxu0 0
    %401 = vmatprep.subr.bf16.mxu0 0
    %402 = vmatpush1.bf16.msra.mxu0 0
    %403 = vmatprep.mubr.bf16.mxu0 0
    %404 = vmatmul.mubr.bf16.gmra.mrb[0].mxu0 %v366
    %v405 = vpop.f32.mrb[0].mxu0
    %v406 = vadd.f32 0.0, %v405
    %v407 = vpop.f32.mrb[0].mxu0
    %v408 = vpop.f32.mrb[0].mxu0
    %v409 = vpop.f32.mrb[0].mxu0
    %410 = vdwg.mxu0
    %412 = vrot.lane.b32.xlu0 %v406, 8
    %v413 = vpop.permute.xlu0 %412
    %vm415 = vcmask 130112
    %416 = vst.msk [vmem:[#allocation2] sm:$0xff] %vm415, %v413
    %417 = vrot.lane.b32.xlu0 %v184, 112
    %v418 = vpop.permute.xlu0 %417
    %419 = vrot.lane.b32.xlu0 %v184, 80
    %v420 = vpop.permute.xlu0 %419
    %v422 = vsel %vm192, %v418, 0
    %v425 = vsel %vm192, %v420, 0
    %427 = vmatprep.subr.bf16.mxu0 0
    %428 = vmatpush1.bf16.xpose.msra.mxu0 %v425
    %429 = vmatprep.subr.bf16.mxu0 0
    %430 = vmatpush1.bf16.xpose.msra.mxu0 0
    %431 = vmatprep.subr.bf16.mxu0 0
    %432 = vmatpush1.bf16.xpose.msra.mxu0 0
    %433 = vmatprep.subr.bf16.mxu0 0
    %434 = vmatpush1.bf16.xpose.msra.mxu0 0
    %435 = vmatprep.subr.bf16.mxu0 0
    %436 = vmatpush1.bf16.xpose.msra.mxu0 0
    %437 = vmatprep.subr.bf16.mxu0 0
    %438 = vmatpush1.bf16.xpose.msra.mxu0 0
    %439 = vmatprep.subr.bf16.mxu0 0
    %440 = vmatpush1.bf16.xpose.msra.mxu0 0
    %441 = vmatprep.subr.bf16.mxu0 0
    %442 = vmatpush1.bf16.xpose.msra.mxu0 0
    %443 = vmatprep.subr.bf16.mxu0 0
    %444 = vmatpush1.bf16.xpose.msra.mxu0 0
    %445 = vmatprep.subr.bf16.mxu0 0
    %446 = vmatpush1.bf16.xpose.msra.mxu0 0
    %447 = vmatprep.subr.bf16.mxu0 0
    %448 = vmatpush1.bf16.xpose.msra.mxu0 0
    %449 = vmatprep.subr.bf16.mxu0 0
    %450 = vmatpush1.bf16.xpose.msra.mxu0 0
    %451 = vmatprep.subr.bf16.mxu0 0
    %452 = vmatpush1.bf16.xpose.msra.mxu0 0
    %453 = vmatprep.subr.bf16.mxu0 0
    %454 = vmatpush1.bf16.xpose.msra.mxu0 0
    %455 = vmatprep.subr.bf16.mxu0 0
    %456 = vmatpush1.bf16.xpose.msra.mxu0 0
    %457 = vmatprep.subr.bf16.mxu0 0
    %458 = vmatpush1.bf16.xpose.msra.mxu0 0
    %459 = vmatprep.mubr.bf16.mxu0 0
    %460 = vmatmul.mubr.bf16.gmra.mrb[0].mxu0 %v422
    %v461 = vpop.f32.mrb[0].mxu0
    %v462 = vadd.f32 %v188, %v461
    %v463 = vpop.f32.mrb[0].mxu0
    %v464 = vpop.f32.mrb[0].mxu0
    %v465 = vpop.f32.mrb[0].mxu0
    %466 = vdwg.mxu0
    %v467 = vsel %vm192, %v462, -inf
    %468 = vmax.xlane.f32.xlu0 %v467
    %v469 = vpop.xlane.xlu0 %468
    %v470 = vsub.f32 %v462, %v469
    %v471 = vmul.f32 %v470, 1.442695
    %v472 = vpow.pop %v471
    %v473 = vsel %vm192, %v472, 0.0
    %474 = vadd.xlane.f32.xlu0 %v473
    %v475 = vpop.xlane.xlu0 %474
    %v476 = vrcp.pop %v475
    %v477 = vmul.f32 %v472, %v476
    %v478 = vpack.c.bf16 %v477, %v477
    %479 = vrot.lane.b32.xlu0 %v184, 48
    %v480 = vpop.permute.xlu0 %479
    %v482 = vsel %vm192, %v478, 0
    %v485 = vsel %vm256, %v480, 0
    %487 = vmatprep.subr.bf16.mxu0 0
    %488 = vmatpush1.bf16.msra.mxu0 %v485
    %489 = vmatprep.subr.bf16.mxu0 0
    %490 = vmatpush1.bf16.msra.mxu0 0
    %491 = vmatprep.subr.bf16.mxu0 0
    %492 = vmatpush1.bf16.msra.mxu0 0
    %493 = vmatprep.subr.bf16.mxu0 0
    %494 = vmatpush1.bf16.msra.mxu0 0
    %495 = vmatprep.subr.bf16.mxu0 0
    %496 = vmatpush1.bf16.msra.mxu0 0
    %497 = vmatprep.subr.bf16.mxu0 0
    %498 = vmatpush1.bf16.msra.mxu0 0
    %499 = vmatprep.subr.bf16.mxu0 0
    %500 = vmatpush1.bf16.msra.mxu0 0
    %501 = vmatprep.subr.bf16.mxu0 0
    %502 = vmatpush1.bf16.msra.mxu0 0
    %503 = vmatprep.subr.bf16.mxu0 0
    %504 = vmatpush1.bf16.msra.mxu0 0
    %505 = vmatprep.subr.bf16.mxu0 0
    %506 = vmatpush1.bf16.msra.mxu0 0
    %507 = vmatprep.subr.bf16.mxu0 0
    %508 = vmatpush1.bf16.msra.mxu0 0
    %509 = vmatprep.subr.bf16.mxu0 0
    %510 = vmatpush1.bf16.msra.mxu0 0
    %511 = vmatprep.subr.bf16.mxu0 0
    %512 = vmatpush1.bf16.msra.mxu0 0
    %513 = vmatprep.subr.bf16.mxu0 0
    %514 = vmatpush1.bf16.msra.mxu0 0
    %515 = vmatprep.subr.bf16.mxu0 0
    %516 = vmatpush1.bf16.msra.mxu0 0
    %517 = vmatprep.subr.bf16.mxu0 0
    %518 = vmatpush1.bf16.msra.mxu0 0
    %519 = vmatprep.mubr.bf16.mxu0 0
    %520 = vmatmul.mubr.bf16.gmra.mrb[0].mxu0 %v482
    %v521 = vpop.f32.mrb[0].mxu0
    %v522 = vadd.f32 0.0, %v521
    %v523 = vpop.f32.mrb[0].mxu0
    %v524 = vpop.f32.mrb[0].mxu0
    %v525 = vpop.f32.mrb[0].mxu0
    %526 = vdwg.mxu0
    %528 = vrot.lane.b32.xlu0 %v522, 16
    %v529 = vpop.permute.xlu0 %528
    %vm531 = vcmask 195712
    %532 = vst.msk [vmem:[#allocation2] sm:$0xff] %vm531, %v529
    %533 = vrot.lane.b32.xlu0 %v184, 104
    %v534 = vpop.permute.xlu0 %533
    %535 = vrot.lane.b32.xlu0 %v184, 72
    %v536 = vpop.permute.xlu0 %535
    %v538 = vsel %vm192, %v534, 0
    %v541 = vsel %vm192, %v536, 0
    %543 = vmatprep.subr.bf16.mxu0 0
    %544 = vmatpush1.bf16.xpose.msra.mxu0 %v541
    %545 = vmatprep.subr.bf16.mxu0 0
    %546 = vmatpush1.bf16.xpose.msra.mxu0 0
    %547 = vmatprep.subr.bf16.mxu0 0
    %548 = vmatpush1.bf16.xpose.msra.mxu0 0
    %549 = vmatprep.subr.bf16.mxu0 0
    %550 = vmatpush1.bf16.xpose.msra.mxu0 0
    %551 = vmatprep.subr.bf16.mxu0 0
    %552 = vmatpush1.bf16.xpose.msra.mxu0 0
    %553 = vmatprep.subr.bf16.mxu0 0
    %554 = vmatpush1.bf16.xpose.msra.mxu0 0
    %555 = vmatprep.subr.bf16.mxu0 0
    %556 = vmatpush1.bf16.xpose.msra.mxu0 0
    %557 = vmatprep.subr.bf16.mxu0 0
    %558 = vmatpush1.bf16.xpose.msra.mxu0 0
    %559 = vmatprep.subr.bf16.mxu0 0
    %560 = vmatpush1.bf16.xpose.msra.mxu0 0
    %561 = vmatprep.subr.bf16.mxu0 0
    %562 = vmatpush1.bf16.xpose.msra.mxu0 0
    %563 = vmatprep.subr.bf16.mxu0 0
    %564 = vmatpush1.bf16.xpose.msra.mxu0 0
    %565 = vmatprep.subr.bf16.mxu0 0
    %566 = vmatpush1.bf16.xpose.msra.mxu0 0
    %567 = vmatprep.subr.bf16.mxu0 0
    %568 = vmatpush1.bf16.xpose.msra.mxu0 0
    %569 = vmatprep.subr.bf16.mxu0 0
    %570 = vmatpush1.bf16.xpose.msra.mxu0 0
    %571 = vmatprep.subr.bf16.mxu0 0
    %572 = vmatpush1.bf16.xpose.msra.mxu0 0
    %573 = vmatprep.subr.bf16.mxu0 0
    %574 = vmatpush1.bf16.xpose.msra.mxu0 0
    %575 = vmatprep.mubr.bf16.mxu0 0
    %576 = vmatmul.mubr.bf16.gmra.mrb[0].mxu0 %v538
    %v577 = vpop.f32.mrb[0].mxu0
    %v578 = vadd.f32 %v188, %v577
    %v579 = vpop.f32.mrb[0].mxu0
    %v580 = vpop.f32.mrb[0].mxu0
    %v581 = vpop.f32.mrb[0].mxu0
    %582 = vdwg.mxu0
    %v583 = vsel %vm192, %v578, -inf
    %584 = vmax.xlane.f32.xlu0 %v583
    %v585 = vpop.xlane.xlu0 %584
    %v586 = vsub.f32 %v578, %v585
    %v587 = vmul.f32 %v586, 1.442695
    %v588 = vpow.pop %v587
    %v589 = vsel %vm192, %v588, 0.0
    %590 = vadd.xlane.f32.xlu0 %v589
    %v591 = vpop.xlane.xlu0 %590
    %v592 = vrcp.pop %v591
    %v593 = vmul.f32 %v588, %v592
    %v594 = vpack.c.bf16 %v593, %v593
    %595 = vrot.lane.b32.xlu0 %v184, 40
    %v596 = vpop.permute.xlu0 %595
    %v598 = vsel %vm192, %v594, 0
    %v601 = vsel %vm256, %v596, 0
    %603 = vmatprep.subr.bf16.mxu0 0
    %604 = vmatpush1.bf16.msra.mxu0 %v601
    %605 = vmatprep.subr.bf16.mxu0 0
    %606 = vmatpush1.bf16.msra.mxu0 0
    %607 = vmatprep.subr.bf16.mxu0 0
    %608 = vmatpush1.bf16.msra.mxu0 0
    %609 = vmatprep.subr.bf16.mxu0 0
    %610 = vmatpush1.bf16.msra.mxu0 0
    %611 = vmatprep.subr.bf16.mxu0 0
    %612 = vmatpush1.bf16.msra.mxu0 0
    %613 = vmatprep.subr.bf16.mxu0 0
    %614 = vmatpush1.bf16.msra.mxu0 0
    %615 = vmatprep.subr.bf16.mxu0 0
    %616 = vmatpush1.bf16.msra.mxu0 0
    %617 = vmatprep.subr.bf16.mxu0 0
    %618 = vmatpush1.bf16.msra.mxu0 0
    %619 = vmatprep.subr.bf16.mxu0 0
    %620 = vmatpush1.bf16.msra.mxu0 0
    %621 = vmatprep.subr.bf16.mxu0 0
    %622 = vmatpush1.bf16.msra.mxu0 0
    %623 = vmatprep.subr.bf16.mxu0 0
    %624 = vmatpush1.bf16.msra.mxu0 0
    %625 = vmatprep.subr.bf16.mxu0 0
    %626 = vmatpush1.bf16.msra.mxu0 0
    %627 = vmatprep.subr.bf16.mxu0 0
    %628 = vmatpush1.bf16.msra.mxu0 0
    %629 = vmatprep.subr.bf16.mxu0 0
    %630 = vmatpush1.bf16.msra.mxu0 0
    %631 = vmatprep.subr.bf16.mxu0 0
    %632 = vmatpush1.bf16.msra.mxu0 0
    %633 = vmatprep.subr.bf16.mxu0 0
    %634 = vmatpush1.bf16.msra.mxu0 0
    %635 = vmatprep.mubr.bf16.mxu0 0
    %636 = vmatmul.mubr.bf16.gmra.mrb[0].mxu0 %v598
    %v637 = vpop.f32.mrb[0].mxu0
    %v638 = vadd.f32 0.0, %v637
    %v639 = vpop.f32.mrb[0].mxu0
    %v640 = vpop.f32.mrb[0].mxu0
    %v641 = vpop.f32.mrb[0].mxu0
    %642 = vdwg.mxu0
    %644 = vrot.lane.b32.xlu0 %v638, 24
    %v645 = vpop.permute.xlu0 %644
    %vm647 = vcmask 261312
    %648 = vst.msk [vmem:[#allocation2] sm:$0xff] %vm647, %v645
    %v649 = vpack.c.bf16 %v181, %v181
    %v650 = vlaneseq
    %v651 = vshrl.u32 %v650, 7
    %v652 = vsub.s32 1, %v651
    %v653 = vrot.slane %v115, %v652
    %655 = vrot.lane.b32.xlu0 %v649, 96
    %v656 = vpop.permute.xlu0 %655
    %v658 = vsel %vm192, %v649, 0
    %v661 = vsel %vm192, %v656, 0
    %663 = vmatprep.subr.bf16.mxu0 0
    %664 = vmatpush1.bf16.xpose.msra.mxu0 %v661
    %665 = vmatprep.subr.bf16.mxu0 0
    %666 = vmatpush1.bf16.xpose.msra.mxu0 0
    %667 = vmatprep.subr.bf16.mxu0 0
    %668 = vmatpush1.bf16.xpose.msra.mxu0 0
    %669 = vmatprep.subr.bf16.mxu0 0
    %670 = vmatpush1.bf16.xpose.msra.mxu0 0
    %671 = vmatprep.subr.bf16.mxu0 0
    %672 = vmatpush1.bf16.xpose.msra.mxu0 0
    %673 = vmatprep.subr.bf16.mxu0 0
    %674 = vmatpush1.bf16.xpose.msra.mxu0 0
    %675 = vmatprep.subr.bf16.mxu0 0
    %676 = vmatpush1.bf16.xpose.msra.mxu0 0
    %677 = vmatprep.subr.bf16.mxu0 0
    %678 = vmatpush1.bf16.xpose.msra.mxu0 0
    %679 = vmatprep.subr.bf16.mxu0 0
    %680 = vmatpush1.bf16.xpose.msra.mxu0 0
    %681 = vmatprep.subr.bf16.mxu0 0
    %682 = vmatpush1.bf16.xpose.msra.mxu0 0
    %683 = vmatprep.subr.bf16.mxu0 0
    %684 = vmatpush1.bf16.xpose.msra.mxu0 0
    %685 = vmatprep.subr.bf16.mxu0 0
    %686 = vmatpush1.bf16.xpose.msra.mxu0 0
    %687 = vmatprep.subr.bf16.mxu0 0
    %688 = vmatpush1.bf16.xpose.msra.mxu0 0
    %689 = vmatprep.subr.bf16.mxu0 0
    %690 = vmatpush1.bf16.xpose.msra.mxu0 0
    %691 = vmatprep.subr.bf16.mxu0 0
    %692 = vmatpush1.bf16.xpose.msra.mxu0 0
    %693 = vmatprep.subr.bf16.mxu0 0
    %694 = vmatpush1.bf16.xpose.msra.mxu0 0
    %695 = vmatprep.mubr.bf16.mxu0 0
    %696 = vmatmul.mubr.bf16.gmra.mrb[0].mxu0 %v658
    %v697 = vpop.f32.mrb[0].mxu0
    %v698 = vadd.f32 %v653, %v697
    %v699 = vpop.f32.mrb[0].mxu0
    %v700 = vpop.f32.mrb[0].mxu0
    %v701 = vpop.f32.mrb[0].mxu0
    %702 = vdwg.mxu0
    %v703 = vsel %vm192, %v698, -inf
    %704 = vmax.xlane.f32.xlu0 %v703
    %v705 = vpop.xlane.xlu0 %704
    %v706 = vsub.f32 %v698, %v705
    %v707 = vmul.f32 %v706, 1.442695
    %v708 = vpow.pop %v707
    %v709 = vsel %vm192, %v708, 0.0
    %710 = vadd.xlane.f32.xlu0 %v709
    %v711 = vpop.xlane.xlu0 %710
    %v712 = vrcp.pop %v711
    %v713 = vmul.f32 %v708, %v712
    %v714 = vpack.c.bf16 %v713, %v713
    %715 = vrot.lane.b32.xlu0 %v649, 64
    %v716 = vpop.permute.xlu0 %715
    %v718 = vsel %vm192, %v714, 0
    %v721 = vsel %vm256, %v716, 0
    %723 = vmatprep.subr.bf16.mxu0 0
    %724 = vmatpush1.bf16.msra.mxu0 %v721
    %725 = vmatprep.subr.bf16.mxu0 0
    %726 = vmatpush1.bf16.msra.mxu0 0
    %727 = vmatprep.subr.bf16.mxu0 0
    %728 = vmatpush1.bf16.msra.mxu0 0
    %729 = vmatprep.subr.bf16.mxu0 0
    %730 = vmatpush1.bf16.msra.mxu0 0
    %731 = vmatprep.subr.bf16.mxu0 0
    %732 = vmatpush1.bf16.msra.mxu0 0
    %733 = vmatprep.subr.bf16.mxu0 0
    %734 = vmatpush1.bf16.msra.mxu0 0
    %735 = vmatprep.subr.bf16.mxu0 0
    %736 = vmatpush1.bf16.msra.mxu0 0
    %737 = vmatprep.subr.bf16.mxu0 0
    %738 = vmatpush1.bf16.msra.mxu0 0
    %739 = vmatprep.subr.bf16.mxu0 0
    %740 = vmatpush1.bf16.msra.mxu0 0
    %741 = vmatprep.subr.bf16.mxu0 0
    %742 = vmatpush1.bf16.msra.mxu0 0
    %743 = vmatprep.subr.bf16.mxu0 0
    %744 = vmatpush1.bf16.msra.mxu0 0
    %745 = vmatprep.subr.bf16.mxu0 0
    %746 = vmatpush1.bf16.msra.mxu0 0
    %747 = vmatprep.subr.bf16.mxu0 0
    %748 = vmatpush1.bf16.msra.mxu0 0
    %749 = vmatprep.subr.bf16.mxu0 0
    %750 = vmatpush1.bf16.msra.mxu0 0
    %751 = vmatprep.subr.bf16.mxu0 0
    %752 = vmatpush1.bf16.msra.mxu0 0
    %753 = vmatprep.subr.bf16.mxu0 0
    %754 = vmatpush1.bf16.msra.mxu0 0
    %755 = vmatprep.mubr.bf16.mxu0 0
    %756 = vmatmul.mubr.bf16.gmra.mrb[0].mxu0 %v718
    %v757 = vpop.f32.mrb[0].mxu0
    %v758 = vadd.f32 0.0, %v757
    %v759 = vpop.f32.mrb[0].mxu0
    %v760 = vpop.f32.mrb[0].mxu0
    %v761 = vpop.f32.mrb[0].mxu0
    %762 = vdwg.mxu0
    %763 = vst.msk [vmem:[#allocation2 + $0x8] sm:$0xff] %vm192, %v758
    %764 = vrot.lane.b32.xlu0 %v649, 120
    %v765 = vpop.permute.xlu0 %764
    %766 = vrot.lane.b32.xlu0 %v649, 88
    %v767 = vpop.permute.xlu0 %766
    %v769 = vsel %vm192, %v765, 0
    %v772 = vsel %vm192, %v767, 0
    %774 = vmatprep.subr.bf16.mxu0 0
    %775 = vmatpush1.bf16.xpose.msra.mxu0 %v772
    %776 = vmatprep.subr.bf16.mxu0 0
    %777 = vmatpush1.bf16.xpose.msra.mxu0 0
    %778 = vmatprep.subr.bf16.mxu0 0
    %779 = vmatpush1.bf16.xpose.msra.mxu0 0
    %780 = vmatprep.subr.bf16.mxu0 0
    %781 = vmatpush1.bf16.xpose.msra.mxu0 0
    %782 = vmatprep.subr.bf16.mxu0 0
    %783 = vmatpush1.bf16.xpose.msra.mxu0 0
    %784 = vmatprep.subr.bf16.mxu0 0
    %785 = vmatpush1.bf16.xpose.msra.mxu0 0
    %786 = vmatprep.subr.bf16.mxu0 0
    %787 = vmatpush1.bf16.xpose.msra.mxu0 0
    %788 = vmatprep.subr.bf16.mxu0 0
    %789 = vmatpush1.bf16.xpose.msra.mxu0 0
    %790 = vmatprep.subr.bf16.mxu0 0
    %791 = vmatpush1.bf16.xpose.msra.mxu0 0
    %792 = vmatprep.subr.bf16.mxu0 0
    %793 = vmatpush1.bf16.xpose.msra.mxu0 0
    %794 = vmatprep.subr.bf16.mxu0 0
    %795 = vmatpush1.bf16.xpose.msra.mxu0 0
    %796 = vmatprep.subr.bf16.mxu0 0
    %797 = vmatpush1.bf16.xpose.msra.mxu0 0
    %798 = vmatprep.subr.bf16.mxu0 0
    %799 = vmatpush1.bf16.xpose.msra.mxu0 0
    %800 = vmatprep.subr.bf16.mxu0 0
    %801 = vmatpush1.bf16.xpose.msra.mxu0 0
    %802 = vmatprep.subr.bf16.mxu0 0
    %803 = vmatpush1.bf16.xpose.msra.mxu0 0
    %804 = vmatprep.subr.bf16.mxu0 0
    %805 = vmatpush1.bf16.xpose.msra.mxu0 0
    %806 = vmatprep.mubr.bf16.mxu0 0
    %807 = vmatmul.mubr.bf16.gmra.mrb[0].mxu0 %v769
    %v808 = vpop.f32.mrb[0].mxu0
    %v809 = vadd.f32 %v653, %v808
    %v810 = vpop.f32.mrb[0].mxu0
    %v811 = vpop.f32.mrb[0].mxu0
    %v812 = vpop.f32.mrb[0].mxu0
    %813 = vdwg.mxu0
    %v814 = vsel %vm192, %v809, -inf
    %815 = vmax.xlane.f32.xlu0 %v814
    %v816 = vpop.xlane.xlu0 %815
    %v817 = vsub.f32 %v809, %v816
    %v818 = vmul.f32 %v817, 1.442695
    %v819 = vpow.pop %v818
    %v820 = vsel %vm192, %v819, 0.0
    %821 = vadd.xlane.f32.xlu0 %v820
    %v822 = vpop.xlane.xlu0 %821
    %v823 = vrcp.pop %v822
    %v824 = vmul.f32 %v819, %v823
    %v825 = vpack.c.bf16 %v824, %v824
    %826 = vrot.lane.b32.xlu0 %v649, 56
    %v827 = vpop.permute.xlu0 %826
    %v829 = vsel %vm192, %v825, 0
    %v832 = vsel %vm256, %v827, 0
    %834 = vmatprep.subr.bf16.mxu0 0
    %835 = vmatpush1.bf16.msra.mxu0 %v832
    %836 = vmatprep.subr.bf16.mxu0 0
    %837 = vmatpush1.bf16.msra.mxu0 0
    %838 = vmatprep.subr.bf16.mxu0 0
    %839 = vmatpush1.bf16.msra.mxu0 0
    %840 = vmatprep.subr.bf16.mxu0 0
    %841 = vmatpush1.bf16.msra.mxu0 0
    %842 = vmatprep.subr.bf16.mxu0 0
    %843 = vmatpush1.bf16.msra.mxu0 0
    %844 = vmatprep.subr.bf16.mxu0 0
    %845 = vmatpush1.bf16.msra.mxu0 0
    %846 = vmatprep.subr.bf16.mxu0 0
    %847 = vmatpush1.bf16.msra.mxu0 0
    %848 = vmatprep.subr.bf16.mxu0 0
    %849 = vmatpush1.bf16.msra.mxu0 0
    %850 = vmatprep.subr.bf16.mxu0 0
    %851 = vmatpush1.bf16.msra.mxu0 0
    %852 = vmatprep.subr.bf16.mxu0 0
    %853 = vmatpush1.bf16.msra.mxu0 0
    %854 = vmatprep.subr.bf16.mxu0 0
    %855 = vmatpush1.bf16.msra.mxu0 0
    %856 = vmatprep.subr.bf16.mxu0 0
    %857 = vmatpush1.bf16.msra.mxu0 0
    %858 = vmatprep.subr.bf16.mxu0 0
    %859 = vmatpush1.bf16.msra.mxu0 0
    %860 = vmatprep.subr.bf16.mxu0 0
    %861 = vmatpush1.bf16.msra.mxu0 0
    %862 = vmatprep.subr.bf16.mxu0 0
    %863 = vmatpush1.bf16.msra.mxu0 0
    %864 = vmatprep.subr.bf16.mxu0 0
    %865 = vmatpush1.bf16.msra.mxu0 0
    %866 = vmatprep.mubr.bf16.mxu0 0
    %867 = vmatmul.mubr.bf16.gmra.mrb[0].mxu0 %v829
    %v868 = vpop.f32.mrb[0].mxu0
    %v869 = vadd.f32 0.0, %v868
    %v870 = vpop.f32.mrb[0].mxu0
    %v871 = vpop.f32.mrb[0].mxu0
    %v872 = vpop.f32.mrb[0].mxu0
    %873 = vdwg.mxu0
    %875 = vrot.lane.b32.xlu0 %v869, 8
    %v876 = vpop.permute.xlu0 %875
    %878 = vst.msk [vmem:[#allocation2 + $0x8] sm:$0xff] %vm415, %v876
    %879 = vrot.lane.b32.xlu0 %v649, 112
    %v880 = vpop.permute.xlu0 %879
    %881 = vrot.lane.b32.xlu0 %v649, 80
    %v882 = vpop.permute.xlu0 %881
    %v884 = vsel %vm192, %v880, 0
    %v887 = vsel %vm192, %v882, 0
    %889 = vmatprep.subr.bf16.mxu0 0
    %890 = vmatpush1.bf16.xpose.msra.mxu0 %v887
    %891 = vmatprep.subr.bf16.mxu0 0
    %892 = vmatpush1.bf16.xpose.msra.mxu0 0
    %893 = vmatprep.subr.bf16.mxu0 0
    %894 = vmatpush1.bf16.xpose.msra.mxu0 0
    %895 = vmatprep.subr.bf16.mxu0 0
    %896 = vmatpush1.bf16.xpose.msra.mxu0 0
    %897 = vmatprep.subr.bf16.mxu0 0
    %898 = vmatpush1.bf16.xpose.msra.mxu0 0
    %899 = vmatprep.subr.bf16.mxu0 0
    %900 = vmatpush1.bf16.xpose.msra.mxu0 0
    %901 = vmatprep.subr.bf16.mxu0 0
    %902 = vmatpush1.bf16.xpose.msra.mxu0 0
    %903 = vmatprep.subr.bf16.mxu0 0
    %904 = vmatpush1.bf16.xpose.msra.mxu0 0
    %905 = vmatprep.subr.bf16.mxu0 0
    %906 = vmatpush1.bf16.xpose.msra.mxu0 0
    %907 = vmatprep.subr.bf16.mxu0 0
    %908 = vmatpush1.bf16.xpose.msra.mxu0 0
    %909 = vmatprep.subr.bf16.mxu0 0
    %910 = vmatpush1.bf16.xpose.msra.mxu0 0
    %911 = vmatprep.subr.bf16.mxu0 0
    %912 = vmatpush1.bf16.xpose.msra.mxu0 0
    %913 = vmatprep.subr.bf16.mxu0 0
    %914 = vmatpush1.bf16.xpose.msra.mxu0 0
    %915 = vmatprep.subr.bf16.mxu0 0
    %916 = vmatpush1.bf16.xpose.msra.mxu0 0
    %917 = vmatprep.subr.bf16.mxu0 0
    %918 = vmatpush1.bf16.xpose.msra.mxu0 0
    %919 = vmatprep.subr.bf16.mxu0 0
    %920 = vmatpush1.bf16.xpose.msra.mxu0 0
    %921 = vmatprep.mubr.bf16.mxu0 0
    %922 = vmatmul.mubr.bf16.gmra.mrb[0].mxu0 %v884
    %v923 = vpop.f32.mrb[0].mxu0
    %v924 = vadd.f32 %v653, %v923
    %v925 = vpop.f32.mrb[0].mxu0
    %v926 = vpop.f32.mrb[0].mxu0
    %v927 = vpop.f32.mrb[0].mxu0
    %928 = vdwg.mxu0
    %v929 = vsel %vm192, %v924, -inf
    %930 = vmax.xlane.f32.xlu0 %v929
    %v931 = vpop.xlane.xlu0 %930
    %v932 = vsub.f32 %v924, %v931
    %v933 = vmul.f32 %v932, 1.442695
    %v934 = vpow.pop %v933
    %v935 = vsel %vm192, %v934, 0.0
    %936 = vadd.xlane.f32.xlu0 %v935
    %v937 = vpop.xlane.xlu0 %936
    %v938 = vrcp.pop %v937
    %v939 = vmul.f32 %v934, %v938
    %v940 = vpack.c.bf16 %v939, %v939
    %941 = vrot.lane.b32.xlu0 %v649, 48
    %v942 = vpop.permute.xlu0 %941
    %v944 = vsel %vm192, %v940, 0
    %v947 = vsel %vm256, %v942, 0
    %949 = vmatprep.subr.bf16.mxu0 0
    %950 = vmatpush1.bf16.msra.mxu0 %v947
    %951 = vmatprep.subr.bf16.mxu0 0
    %952 = vmatpush1.bf16.msra.mxu0 0
    %953 = vmatprep.subr.bf16.mxu0 0
    %954 = vmatpush1.bf16.msra.mxu0 0
    %955 = vmatprep.subr.bf16.mxu0 0
    %956 = vmatpush1.bf16.msra.mxu0 0
    %957 = vmatprep.subr.bf16.mxu0 0
    %958 = vmatpush1.bf16.msra.mxu0 0
    %959 = vmatprep.subr.bf16.mxu0 0
    %960 = vmatpush1.bf16.msra.mxu0 0
    %961 = vmatprep.subr.bf16.mxu0 0
    %962 = vmatpush1.bf16.msra.mxu0 0
    %963 = vmatprep.subr.bf16.mxu0 0
    %964 = vmatpush1.bf16.msra.mxu0 0
    %965 = vmatprep.subr.bf16.mxu0 0
    %966 = vmatpush1.bf16.msra.mxu0 0
    %967 = vmatprep.subr.bf16.mxu0 0
    %968 = vmatpush1.bf16.msra.mxu0 0
    %969 = vmatprep.subr.bf16.mxu0 0
    %970 = vmatpush1.bf16.msra.mxu0 0
    %971 = vmatprep.subr.bf16.mxu0 0
    %972 = vmatpush1.bf16.msra.mxu0 0
    %973 = vmatprep.subr.bf16.mxu0 0
    %974 = vmatpush1.bf16.msra.mxu0 0
    %975 = vmatprep.subr.bf16.mxu0 0
    %976 = vmatpush1.bf16.msra.mxu0 0
    %977 = vmatprep.subr.bf16.mxu0 0
    %978 = vmatpush1.bf16.msra.mxu0 0
    %979 = vmatprep.subr.bf16.mxu0 0
    %980 = vmatpush1.bf16.msra.mxu0 0
    %981 = vmatprep.mubr.bf16.mxu0 0
    %982 = vmatmul.mubr.bf16.gmra.mrb[0].mxu0 %v944
    %v983 = vpop.f32.mrb[0].mxu0
    %v984 = vadd.f32 0.0, %v983
    %v985 = vpop.f32.mrb[0].mxu0
    %v986 = vpop.f32.mrb[0].mxu0
    %v987 = vpop.f32.mrb[0].mxu0
    %988 = vdwg.mxu0
    %990 = vrot.lane.b32.xlu0 %v984, 16
    %v991 = vpop.permute.xlu0 %990
    %993 = vst.msk [vmem:[#allocation2 + $0x8] sm:$0xff] %vm531, %v991
    %994 = vrot.lane.b32.xlu0 %v649, 104
    %v995 = vpop.permute.xlu0 %994
    %996 = vrot.lane.b32.xlu0 %v649, 72
    %v997 = vpop.permute.xlu0 %996
    %v999 = vsel %vm192, %v995, 0
    %v1002 = vsel %vm192, %v997, 0
    %1004 = vmatprep.subr.bf16.mxu0 0
    %1005 = vmatpush1.bf16.xpose.msra.mxu0 %v1002
    %1006 = vmatprep.subr.bf16.mxu0 0
    %1007 = vmatpush1.bf16.xpose.msra.mxu0 0
    %1008 = vmatprep.subr.bf16.mxu0 0
    %1009 = vmatpush1.bf16.xpose.msra.mxu0 0
    %1010 = vmatprep.subr.bf16.mxu0 0
    %1011 = vmatpush1.bf16.xpose.msra.mxu0 0
    %1012 = vmatprep.subr.bf16.mxu0 0
    %1013 = vmatpush1.bf16.xpose.msra.mxu0 0
    %1014 = vmatprep.subr.bf16.mxu0 0
    %1015 = vmatpush1.bf16.xpose.msra.mxu0 0
    %1016 = vmatprep.subr.bf16.mxu0 0
    %1017 = vmatpush1.bf16.xpose.msra.mxu0 0
    %1018 = vmatprep.subr.bf16.mxu0 0
    %1019 = vmatpush1.bf16.xpose.msra.mxu0 0
    %1020 = vmatprep.subr.bf16.mxu0 0
    %1021 = vmatpush1.bf16.xpose.msra.mxu0 0
    %1022 = vmatprep.subr.bf16.mxu0 0
    %1023 = vmatpush1.bf16.xpose.msra.mxu0 0
    %1024 = vmatprep.subr.bf16.mxu0 0
    %1025 = vmatpush1.bf16.xpose.msra.mxu0 0
    %1026 = vmatprep.subr.bf16.mxu0 0
    %1027 = vmatpush1.bf16.xpose.msra.mxu0 0
    %1028 = vmatprep.subr.bf16.mxu0 0
    %1029 = vmatpush1.bf16.xpose.msra.mxu0 0
    %1030 = vmatprep.subr.bf16.mxu0 0
    %1031 = vmatpush1.bf16.xpose.msra.mxu0 0
    %1032 = vmatprep.subr.bf16.mxu0 0
    %1033 = vmatpush1.bf16.xpose.msra.mxu0 0
    %1034 = vmatprep.subr.bf16.mxu0 0
    %1035 = vmatpush1.bf16.xpose.msra.mxu0 0
    %1036 = vmatprep.mubr.bf16.mxu0 0
    %1037 = vmatmul.mubr.bf16.gmra.mrb[0].mxu0 %v999
    %v1038 = vpop.f32.mrb[0].mxu0
    %v1039 = vadd.f32 %v653, %v1038
    %v1040 = vpop.f32.mrb[0].mxu0
    %v1041 = vpop.f32.mrb[0].mxu0
    %v1042 = vpop.f32.mrb[0].mxu0
    %1043 = vdwg.mxu0
    %v1044 = vsel %vm192, %v1039, -inf
    %1045 = vmax.xlane.f32.xlu0 %v1044
    %v1046 = vpop.xlane.xlu0 %1045
    %v1047 = vsub.f32 %v1039, %v1046
    %v1048 = vmul.f32 %v1047, 1.442695
    %v1049 = vpow.pop %v1048
    %v1050 = vsel %vm192, %v1049, 0.0
    %1051 = vadd.xlane.f32.xlu0 %v1050
    %v1052 = vpop.xlane.xlu0 %1051
    %v1053 = vrcp.pop %v1052
    %v1054 = vmul.f32 %v1049, %v1053
    %v1055 = vpack.c.bf16 %v1054, %v1054
    %1056 = vrot.lane.b32.xlu0 %v649, 40
    %v1057 = vpop.permute.xlu0 %1056
    %v1059 = vsel %vm192, %v1055, 0
    %v1062 = vsel %vm256, %v1057, 0
    %1064 = vmatprep.subr.bf16.mxu0 0
    %1065 = vmatpush1.bf16.msra.mxu0 %v1062
    %1066 = vmatprep.subr.bf16.mxu0 0
    %1067 = vmatpush1.bf16.msra.mxu0 0
    %1068 = vmatprep.subr.bf16.mxu0 0
    %1069 = vmatpush1.bf16.msra.mxu0 0
    %1070 = vmatprep.subr.bf16.mxu0 0
    %1071 = vmatpush1.bf16.msra.mxu0 0
    %1072 = vmatprep.subr.bf16.mxu0 0
    %1073 = vmatpush1.bf16.msra.mxu0 0
    %1074 = vmatprep.subr.bf16.mxu0 0
    %1075 = vmatpush1.bf16.msra.mxu0 0
    %1076 = vmatprep.subr.bf16.mxu0 0
    %1077 = vmatpush1.bf16.msra.mxu0 0
    %1078 = vmatprep.subr.bf16.mxu0 0
    %1079 = vmatpush1.bf16.msra.mxu0 0
    %1080 = vmatprep.subr.bf16.mxu0 0
    %1081 = vmatpush1.bf16.msra.mxu0 0
    %1082 = vmatprep.subr.bf16.mxu0 0
    %1083 = vmatpush1.bf16.msra.mxu0 0
    %1084 = vmatprep.subr.bf16.mxu0 0
    %1085 = vmatpush1.bf16.msra.mxu0 0
    %1086 = vmatprep.subr.bf16.mxu0 0
    %1087 = vmatpush1.bf16.msra.mxu0 0
    %1088 = vmatprep.subr.bf16.mxu0 0
    %1089 = vmatpush1.bf16.msra.mxu0 0
    %1090 = vmatprep.subr.bf16.mxu0 0
    %1091 = vmatpush1.bf16.msra.mxu0 0
    %1092 = vmatprep.subr.bf16.mxu0 0
    %1093 = vmatpush1.bf16.msra.mxu0 0
    %1094 = vmatprep.subr.bf16.mxu0 0
    %1095 = vmatpush1.bf16.msra.mxu0 0
    %1096 = vmatprep.mubr.bf16.mxu0 0
    %1097 = vmatmul.mubr.bf16.gmra.mrb[0].mxu0 %v1059
    %v1098 = vpop.f32.mrb[0].mxu0
    %v1099 = vadd.f32 0.0, %v1098
    %v1100 = vpop.f32.mrb[0].mxu0
    %v1101 = vpop.f32.mrb[0].mxu0
    %v1102 = vpop.f32.mrb[0].mxu0
    %1103 = vdwg.mxu0
    %1105 = vrot.lane.b32.xlu0 %v1099, 24
    %v1106 = vpop.permute.xlu0 %1105
    %1108 = vst.msk [vmem:[#allocation2 + $0x8] sm:$0xff] %vm647, %v1106
    %v1109 = vld [vmem:[#allocation2] sm:$0xff]
    %v1110 = vld [vmem:[#allocation2 + $0x8] sm:$0xff]
    %v1111 = vld [vmem:[%s6] sm:$0xf]
    %v1112 = vld [vmem:[%s6 + $0x4] sm:$0xf]
    %v1113 = vld [vmem:[%s6 + $0x8] sm:$0xf]
    %v1114 = vld [vmem:[%s6 + $0xc] sm:$0xf]
    %v1115 = vpack.c.bf16 %v1110, %v1109
    %v1116 = vld [vmem:[%s7] sm:$0x1]
    %v1118 = vlaneseq
    %v1119 = vshrl.u32 %v1118, 7
    %v1120 = vsub.s32 0, %v1119
    %v1121 = vrot.slane %v1116, %v1120
    %v1127 = vunpack.c.l.b16 %v1111
    %v1128 = vunpack.c.l.b16 %v1112
    %v1129 = vunpack.c.l.b16 %v1113
    %v1130 = vunpack.c.l.b16 %v1114
    %v1131 = vpack.c.b16 %v1128, %v1127
    %v1132 = vpack.c.b16 %v1130, %v1129
    %v1136 = vsel %vm71, %v1115, 0
    %1138 = vmatprep.subr.bf16.mxu0 0
    %1139 = vmatpush1.bf16.msra.mxu0 %v1131
    %1140 = vmatprep.subr.bf16.mxu0 0
    %1141 = vmatpush1.bf16.msra.mxu0 %v1132
    %1142 = vmatprep.subr.bf16.mxu0 0
    %1143 = vmatpush1.bf16.msra.mxu0 0
    %1144 = vmatprep.subr.bf16.mxu0 0
    %1145 = vmatpush1.bf16.msra.mxu0 0
    %1146 = vmatprep.subr.bf16.mxu0 0
    %1147 = vmatpush1.bf16.msra.mxu0 0
    %1148 = vmatprep.subr.bf16.mxu0 0
    %1149 = vmatpush1.bf16.msra.mxu0 0
    %1150 = vmatprep.subr.bf16.mxu0 0
    %1151 = vmatpush1.bf16.msra.mxu0 0
    %1152 = vmatprep.subr.bf16.mxu0 0
    %1153 = vmatpush1.bf16.msra.mxu0 0
    %1154 = vmatprep.subr.bf16.mxu0 0
    %1155 = vmatpush1.bf16.msra.mxu0 0
    %1156 = vmatprep.subr.bf16.mxu0 0
    %1157 = vmatpush1.bf16.msra.mxu0 0
    %1158 = vmatprep.subr.bf16.mxu0 0
    %1159 = vmatpush1.bf16.msra.mxu0 0
    %1160 = vmatprep.subr.bf16.mxu0 0
    %1161 = vmatpush1.bf16.msra.mxu0 0
    %1162 = vmatprep.subr.bf16.mxu0 0
    %1163 = vmatpush1.bf16.msra.mxu0 0
    %1164 = vmatprep.subr.bf16.mxu0 0
    %1165 = vmatpush1.bf16.msra.mxu0 0
    %1166 = vmatprep.subr.bf16.mxu0 0
    %1167 = vmatpush1.bf16.msra.mxu0 0
    %1168 = vmatprep.subr.bf16.mxu0 0
    %1169 = vmatpush1.bf16.msra.mxu0 0
    %1170 = vmatprep.mubr.bf16.mxu0 0
    %1171 = vmatmul.mubr.bf16.gmra.mrb[0].mxu0 %v1136
    %v1172 = vpop.f32.mrb[0].mxu0
    %v1173 = vadd.f32 %v1121, %v1172
    %v1174 = vpop.f32.mrb[0].mxu0
    %v1175 = vpop.f32.mrb[0].mxu0
    %v1176 = vadd.f32 %v1121, %v1175
    %v1177 = vpop.f32.mrb[0].mxu0
    %1178 = vdwg.mxu0
    %v1179 = vadd.f32 %v1173, %v113
    %v1180 = vadd.f32 %v1176, %v114
    %v1181 = vld [vmem:[%s8] sm:$0x1]
    %v1182 = vld [vmem:[%s9] sm:$0x1]
    %v1183 = vsel %vm71, %v1179, 0.0
    %1184 = vadd.xlane.f32.xlu0 %v1183
    %v1185 = vpop.xlane.xlu0 %1184
    %v1186 = vsel %vm71, %v1180, 0.0
    %1187 = vadd.xlane.f32.xlu0 %v1186
    %v1188 = vpop.xlane.xlu0 %1187
    %v1189 = vmul.f32 %v1185, %v78
    %v1190 = vmul.f32 %v1188, %v78
    %v1191 = vsub.f32 %v1179, %v1189
    %v1192 = vsub.f32 %v1180, %v1190
    %v1193 = vmul.f32 %v1191, %v1191
    %v1194 = vmul.f32 %v1192, %v1192
    %v1195 = vsel %vm71, %v1193, 0.0
    %1196 = vadd.xlane.f32.xlu0 %v1195
    %v1197 = vpop.xlane.xlu0 %1196
    %v1198 = vsel %vm71, %v1194, 0.0
    %1199 = vadd.xlane.f32.xlu0 %v1198
    %v1200 = vpop.xlane.xlu0 %1199
    %v1201 = vmul.f32 %v1197, %v78
    %v1202 = vmul.f32 %v1200, %v78
    %v1203 = vadd.f32 %v1201, 1e-12
    %v1204 = vadd.f32 %v1202, 1e-12
    %v1205 = vrsqrt.pop %v1203
    %v1206 = vrsqrt.pop %v1204
    %v1207 = vmul.f32 %v1191, %v1205
    %v1208 = vmul.f32 %v1192, %v1206
    %v1210 = vlaneseq
    %v1211 = vshrl.u32 %v1210, 7
    %v1212 = vsub.s32 0, %v1211
    %v1213 = vrot.slane %v1181, %v1212
    %v1215 = vmul.f32 %v1207, %v1213
    %v1216 = vmul.f32 %v1208, %v1213
    %v1218 = vlaneseq
    %v1219 = vshrl.u32 %v1218, 7
    %v1220 = vsub.s32 0, %v1219
    %v1221 = vrot.slane %v1182, %v1220
    %v1223 = vadd.f32 %v1215, %v1221
    %v1224 = vadd.f32 %v1216, %v1221
    %v1225 = vld [vmem:[%s10] sm:$0xf]
    %v1226 = vld [vmem:[%s10 + $0x4] sm:$0xf]
    %v1227 = vld [vmem:[%s10 + $0x8] sm:$0xf]
    %v1228 = vld [vmem:[%s10 + $0xc] sm:$0xf]
    %v1229 = vpack.c.bf16 %v1224, %v1223
    %v1230 = vld [vmem:[%s11] sm:$0x1]
    %v1232 = vlaneseq
    %v1233 = vshrl.u32 %v1232, 7
    %v1234 = vsub.s32 0, %v1233
    %v1235 = vrot.slane %v1230, %v1234
    %v1241 = vunpack.c.l.b16 %v1225
    %v1242 = vunpack.c.l.b16 %v1226
    %v1243 = vunpack.c.l.b16 %v1227
    %v1244 = vunpack.c.l.b16 %v1228
    %v1245 = vpack.c.b16 %v1242, %v1241
    %v1246 = vpack.c.b16 %v1244, %v1243
    %v1250 = vsel %vm71, %v1229, 0
    %1252 = vmatprep.subr.bf16.mxu0 0
    %1253 = vmatpush1.bf16.msra.mxu0 %v1245
    %1254 = vmatprep.subr.bf16.mxu0 0
    %1255 = vmatpush1.bf16.msra.mxu0 %v1246
    %1256 = vmatprep.subr.bf16.mxu0 0
    %1257 = vmatpush1.bf16.msra.mxu0 0
    %1258 = vmatprep.subr.bf16.mxu0 0
    %1259 = vmatpush1.bf16.msra.mxu0 0
    %1260 = vmatprep.subr.bf16.mxu0 0
    %1261 = vmatpush1.bf16.msra.mxu0 0
    %1262 = vmatprep.subr.bf16.mxu0 0
    %1263 = vmatpush1.bf16.msra.mxu0 0
    %1264 = vmatprep.subr.bf16.mxu0 0
    %1265 = vmatpush1.bf16.msra.mxu0 0
    %1266 = vmatprep.subr.bf16.mxu0 0
    %1267 = vmatpush1.bf16.msra.mxu0 0
    %1268 = vmatprep.subr.bf16.mxu0 0
    %1269 = vmatpush1.bf16.msra.mxu0 0
    %1270 = vmatprep.subr.bf16.mxu0 0
    %1271 = vmatpush1.bf16.msra.mxu0 0
    %1272 = vmatprep.subr.bf16.mxu0 0
    %1273 = vmatpush1.bf16.msra.mxu0 0
    %1274 = vmatprep.subr.bf16.mxu0 0
    %1275 = vmatpush1.bf16.msra.mxu0 0
    %1276 = vmatprep.subr.bf16.mxu0 0
    %1277 = vmatpush1.bf16.msra.mxu0 0
    %1278 = vmatprep.subr.bf16.mxu0 0
    %1279 = vmatpush1.bf16.msra.mxu0 0
    %1280 = vmatprep.subr.bf16.mxu0 0
    %1281 = vmatpush1.bf16.msra.mxu0 0
    %1282 = vmatprep.subr.bf16.mxu0 0
    %1283 = vmatpush1.bf16.msra.mxu0 0
    %1284 = vmatprep.mubr.bf16.mxu0 0
    %1285 = vmatmul.mubr.bf16.gmra.mrb[0].mxu0 %v1250
    %v1286 = vpop.f32.mrb[0].mxu0
    %v1287 = vadd.f32 %v1235, %v1286
    %v1288 = vpop.f32.mrb[0].mxu0
    %v1289 = vpop.f32.mrb[0].mxu0
    %v1290 = vadd.f32 %v1235, %v1289
    %v1291 = vpop.f32.mrb[0].mxu0
    %1292 = vdwg.mxu0
    %v1293 = vmul.f32 %v1287, 0.5
    %v1294 = vmul.f32 %v1290, 0.5
    %v1295 = vmul.f32 %v1287, 0.044715
    %v1296 = vmul.f32 %v1290, 0.044715
    %v1297 = vmul.f32 %v1295, %v1287
    %v1298 = vmul.f32 %v1296, %v1290
    %v1299 = vmul.f32 %v1297, %v1287
    %v1300 = vmul.f32 %v1298, %v1290
    %v1301 = vadd.f32 %v1287, %v1299
    %v1302 = vadd.f32 %v1290, %v1300
    %v1303 = vmul.f32 %v1301, 0.7978846
    %v1304 = vmul.f32 %v1302, 0.7978846
    %v1305 = vtanh.pop %v1303
    %v1306 = vtanh.pop %v1304
    %v1307 = vadd.f32 %v1305, 1.0
    %v1308 = vadd.f32 %v1306, 1.0
    %v1309 = vmul.f32 %v1293, %v1307
    %v1310 = vmul.f32 %v1294, %v1308
    %v1311 = vld [vmem:[%s12] sm:$0xf]
    %v1312 = vld [vmem:[%s12 + $0x4] sm:$0xf]
    %v1313 = vld [vmem:[%s12 + $0x8] sm:$0xf]
    %v1314 = vld [vmem:[%s12 + $0xc] sm:$0xf]
    %v1315 = vld [vmem:[%s12 + $0x10] sm:$0xf]
    %v1316 = vld [vmem:[%s12 + $0x14] sm:$0xf]
    %v1317 = vld [vmem:[%s12 + $0x18] sm:$0xf]
    %v1318 = vld [vmem:[%s12 + $0x1c] sm:$0xf]
    %v1319 = vpack.c.bf16 %v1310, %v1309
    %v1320 = vld [vmem:[%s13] sm:$0x1]
    %v1322 = vlaneseq
    %v1323 = vshrl.u32 %v1322, 7
    %v1324 = vsub.s32 0, %v1323
    %v1325 = vrot.slane %v1320, %v1324
    %v1335 = vunpack.c.l.b16 %v1311
    %v1336 = vunpack.c.l.b16 %v1312
    %v1337 = vunpack.c.l.b16 %v1313
    %v1338 = vunpack.c.l.b16 %v1314
    %v1339 = vunpack.c.l.b16 %v1315
    %v1340 = vunpack.c.l.b16 %v1316
    %v1341 = vunpack.c.l.b16 %v1317
    %v1342 = vunpack.c.l.b16 %v1318
    %v1343 = vpack.c.b16 %v1336, %v1335
    %v1344 = vpack.c.b16 %v1338, %v1337
    %v1345 = vpack.c.b16 %v1340, %v1339
    %v1346 = vpack.c.b16 %v1342, %v1341
    %vm1351 = vcmask 523264
    %v1353 = vsel %vm1351, %v1319, 0
    %1355 = vmatprep.subr.bf16.mxu0 0
    %1356 = vmatpush1.bf16.msra.mxu0 %v1343
    %1357 = vmatprep.subr.bf16.mxu0 0
    %1358 = vmatpush1.bf16.msra.mxu0 %v1344
    %1359 = vmatprep.subr.bf16.mxu0 0
    %1360 = vmatpush1.bf16.msra.mxu0 %v1345
    %1361 = vmatprep.subr.bf16.mxu0 0
    %1362 = vmatpush1.bf16.msra.mxu0 %v1346
    %1363 = vmatprep.subr.bf16.mxu0 0
    %1364 = vmatpush1.bf16.msra.mxu0 0
    %1365 = vmatprep.subr.bf16.mxu0 0
    %1366 = vmatpush1.bf16.msra.mxu0 0
    %1367 = vmatprep.subr.bf16.mxu0 0
    %1368 = vmatpush1.bf16.msra.mxu0 0
    %1369 = vmatprep.subr.bf16.mxu0 0
    %1370 = vmatpush1.bf16.msra.mxu0 0
    %1371 = vmatprep.subr.bf16.mxu0 0
    %1372 = vmatpush1.bf16.msra.mxu0 0
    %1373 = vmatprep.subr.bf16.mxu0 0
    %1374 = vmatpush1.bf16.msra.mxu0 0
    %1375 = vmatprep.subr.bf16.mxu0 0
    %1376 = vmatpush1.bf16.msra.mxu0 0
    %1377 = vmatprep.subr.bf16.mxu0 0
    %1378 = vmatpush1.bf16.msra.mxu0 0
    %1379 = vmatprep.subr.bf16.mxu0 0
    %1380 = vmatpush1.bf16.msra.mxu0 0
    %1381 = vmatprep.subr.bf16.mxu0 0
    %1382 = vmatpush1.bf16.msra.mxu0 0
    %1383 = vmatprep.subr.bf16.mxu0 0
    %1384 = vmatpush1.bf16.msra.mxu0 0
    %1385 = vmatprep.subr.bf16.mxu0 0
    %1386 = vmatpush1.bf16.msra.mxu0 0
    %1387 = vmatprep.mubr.bf16.mxu0 0
    %1388 = vmatmul.mubr.bf16.gmra.mrb[0].mxu0 %v1353
    %v1389 = vpop.f32.mrb[0].mxu0
    %v1390 = vadd.f32 %v1325, %v1389
    %v1391 = vpop.f32.mrb[0].mxu0
    %v1392 = vpop.f32.mrb[0].mxu0
    %v1393 = vadd.f32 %v1325, %v1392
    %v1394 = vpop.f32.mrb[0].mxu0
    %1395 = vdwg.mxu0
    %v1396 = vadd.f32 %v1390, %v1223
    %v1397 = vadd.f32 %v1393, %v1224
    %v1398 = vld [vmem:[%s14] sm:$0x1]
    %v1399 = vld [vmem:[%s15] sm:$0x1]
    %v1400 = vsel %vm71, %v1396, 0.0
    %1401 = vadd.xlane.f32.xlu0 %v1400
    %v1402 = vpop.xlane.xlu0 %1401
    %v1403 = vsel %vm71, %v1397, 0.0
    %1404 = vadd.xlane.f32.xlu0 %v1403
    %v1405 = vpop.xlane.xlu0 %1404
    %v1406 = vmul.f32 %v1402, %v78
    %v1407 = vmul.f32 %v1405, %v78
    %v1408 = vsub.f32 %v1396, %v1406
    %v1409 = vsub.f32 %v1397, %v1407
    %v1410 = vmul.f32 %v1408, %v1408
    %v1411 = vmul.f32 %v1409, %v1409
    %v1412 = vsel %vm71, %v1410, 0.0
    %1413 = vadd.xlane.f32.xlu0 %v1412
    %v1414 = vpop.xlane.xlu0 %1413
    %v1415 = vsel %vm71, %v1411, 0.0
    %1416 = vadd.xlane.f32.xlu0 %v1415
    %v1417 = vpop.xlane.xlu0 %1416
    %v1418 = vmul.f32 %v1414, %v78
    %v1419 = vmul.f32 %v1417, %v78
    %v1420 = vadd.f32 %v1418, 1e-12
    %v1421 = vadd.f32 %v1419, 1e-12
    %v1422 = vrsqrt.pop %v1420
    %v1423 = vrsqrt.pop %v1421
    %v1424 = vmul.f32 %v1408, %v1422
    %v1425 = vmul.f32 %v1409, %v1423
    %v1427 = vlaneseq
    %v1428 = vshrl.u32 %v1427, 7
    %v1429 = vsub.s32 0, %v1428
    %v1430 = vrot.slane %v1398, %v1429
    %v1432 = vmul.f32 %v1424, %v1430
    %v1433 = vmul.f32 %v1425, %v1430
    %v1435 = vlaneseq
    %v1436 = vshrl.u32 %v1435, 7
    %v1437 = vsub.s32 0, %v1436
    %v1438 = vrot.slane %v1399, %v1437
    %v1440 = vadd.f32 %v1432, %v1438
    %v1441 = vadd.f32 %v1433, %v1438
    %s1442 = scalar_lea.vmem %s4, 16
    %v1443 = vld [vmem:[%s1442] sm:$0xf]
    %v1444 = vld [vmem:[%s1442 + $0x4] sm:$0xf]
    %v1445 = vld [vmem:[%s1442 + $0x8] sm:$0xf]
    %v1446 = vld [vmem:[%s1442 + $0xc] sm:$0xf]
    %v1447 = vpack.c.bf16 %v1441, %v1440
    %s1448 = scalar_lea.vmem %s5, 1
    %v1449 = vld [vmem:[%s1448] sm:$0x1]
    %v1451 = vlaneseq
    %v1452 = vshrl.u32 %v1451, 7
    %v1453 = vsub.s32 0, %v1452
    %v1454 = vrot.slane %v1449, %v1453
    %v1460 = vunpack.c.l.b16 %v1443
    %v1461 = vunpack.c.l.b16 %v1444
    %v1462 = vunpack.c.l.b16 %v1445
    %v1463 = vunpack.c.l.b16 %v1446
    %v1464 = vpack.c.b16 %v1461, %v1460
    %v1465 = vpack.c.b16 %v1463, %v1462
    %v1469 = vsel %vm71, %v1447, 0
    %1471 = vmatprep.subr.bf16.mxu0 0
    %1472 = vmatpush1.bf16.msra.mxu0 %v1464
    %1473 = vmatprep.subr.bf16.mxu0 0
    %1474 = vmatpush1.bf16.msra.mxu0 %v1465
    %1475 = vmatprep.subr.bf16.mxu0 0
    %1476 = vmatpush1.bf16.msra.mxu0 0
    %1477 = vmatprep.subr.bf16.mxu0 0
    %1478 = vmatpush1.bf16.msra.mxu0 0
    %1479 = vmatprep.subr.bf16.mxu0 0
    %1480 = vmatpush1.bf16.msra.mxu0 0
    %1481 = vmatprep.subr.bf16.mxu0 0
    %1482 = vmatpush1.bf16.msra.mxu0 0
    %1483 = vmatprep.subr.bf16.mxu0 0
    %1484 = vmatpush1.bf16.msra.mxu0 0
    %1485 = vmatprep.subr.bf16.mxu0 0
    %1486 = vmatpush1.bf16.msra.mxu0 0
    %1487 = vmatprep.subr.bf16.mxu0 0
    %1488 = vmatpush1.bf16.msra.mxu0 0
    %1489 = vmatprep.subr.bf16.mxu0 0
    %1490 = vmatpush1.bf16.msra.mxu0 0
    %1491 = vmatprep.subr.bf16.mxu0 0
    %1492 = vmatpush1.bf16.msra.mxu0 0
    %1493 = vmatprep.subr.bf16.mxu0 0
    %1494 = vmatpush1.bf16.msra.mxu0 0
    %1495 = vmatprep.subr.bf16.mxu0 0
    %1496 = vmatpush1.bf16.msra.mxu0 0
    %1497 = vmatprep.subr.bf16.mxu0 0
    %1498 = vmatpush1.bf16.msra.mxu0 0
    %1499 = vmatprep.subr.bf16.mxu0 0
    %1500 = vmatpush1.bf16.msra.mxu0 0
    %1501 = vmatprep.subr.bf16.mxu0 0
    %1502 = vmatpush1.bf16.msra.mxu0 0
    %1503 = vmatprep.mubr.bf16.mxu0 0
    %1504 = vmatmul.mubr.bf16.gmra.mrb[0].mxu0 %v1469
    %v1505 = vpop.f32.mrb[0].mxu0
    %v1506 = vadd.f32 %v1454, %v1505
    %v1507 = vpop.f32.mrb[0].mxu0
    %v1508 = vpop.f32.mrb[0].mxu0
    %v1509 = vadd.f32 %v1454, %v1508
    %v1510 = vpop.f32.mrb[0].mxu0
    %1511 = vdwg.mxu0
    %v1512 = vpack.c.bf16 %v1506, %v1506
    %1514 = vrot.lane.b32.xlu0 %v1512, 96
    %v1515 = vpop.permute.xlu0 %1514
    %v1517 = vsel %vm192, %v1512, 0
    %v1520 = vsel %vm192, %v1515, 0
    %1522 = vmatprep.subr.bf16.mxu0 0
    %1523 = vmatpush1.bf16.xpose.msra.mxu0 %v1520
    %1524 = vmatprep.subr.bf16.mxu0 0
    %1525 = vmatpush1.bf16.xpose.msra.mxu0 0
    %1526 = vmatprep.subr.bf16.mxu0 0
    %1527 = vmatpush1.bf16.xpose.msra.mxu0 0
    %1528 = vmatprep.subr.bf16.mxu0 0
    %1529 = vmatpush1.bf16.xpose.msra.mxu0 0
    %1530 = vmatprep.subr.bf16.mxu0 0
    %1531 = vmatpush1.bf16.xpose.msra.mxu0 0
    %1532 = vmatprep.subr.bf16.mxu0 0
    %1533 = vmatpush1.bf16.xpose.msra.mxu0 0
    %1534 = vmatprep.subr.bf16.mxu0 0
    %1535 = vmatpush1.bf16.xpose.msra.mxu0 0
    %1536 = vmatprep.subr.bf16.mxu0 0
    %1537 = vmatpush1.bf16.xpose.msra.mxu0 0
    %1538 = vmatprep.subr.bf16.mxu0 0
    %1539 = vmatpush1.bf16.xpose.msra.mxu0 0
    %1540 = vmatprep.subr.bf16.mxu0 0
    %1541 = vmatpush1.bf16.xpose.msra.mxu0 0
    %1542 = vmatprep.subr.bf16.mxu0 0
    %1543 = vmatpush1.bf16.xpose.msra.mxu0 0
    %1544 = vmatprep.subr.bf16.mxu0 0
    %1545 = vmatpush1.bf16.xpose.msra.mxu0 0
    %1546 = vmatprep.subr.bf16.mxu0 0
    %1547 = vmatpush1.bf16.xpose.msra.mxu0 0
    %1548 = vmatprep.subr.bf16.mxu0 0
    %1549 = vmatpush1.bf16.xpose.msra.mxu0 0
    %1550 = vmatprep.subr.bf16.mxu0 0
    %1551 = vmatpush1.bf16.xpose.msra.mxu0 0
    %1552 = vmatprep.subr.bf16.mxu0 0
    %1553 = vmatpush1.bf16.xpose.msra.mxu0 0
    %1554 = vmatprep.mubr.bf16.mxu0 0
    %1555 = vmatmul.mubr.bf16.gmra.mrb[0].mxu0 %v1517
    %v1556 = vpop.f32.mrb[0].mxu0
    %v1557 = vadd.f32 %v188, %v1556
    %v1558 = vpop.f32.mrb[0].mxu0
    %v1559 = vpop.f32.mrb[0].mxu0
    %v1560 = vpop.f32.mrb[0].mxu0
    %1561 = vdwg.mxu0
    %v1562 = vsel %vm192, %v1557, -inf
    %1563 = vmax.xlane.f32.xlu0 %v1562
    %v1564 = vpop.xlane.xlu0 %1563
    %v1565 = vsub.f32 %v1557, %v1564
    %v1566 = vmul.f32 %v1565, 1.442695
    %v1567 = vpow.pop %v1566
    %v1568 = vsel %vm192, %v1567, 0.0
    %1569 = vadd.xlane.f32.xlu0 %v1568
    %v1570 = vpop.xlane.xlu0 %1569
    %v1571 = vrcp.pop %v1570
    %v1572 = vmul.f32 %v1567, %v1571
    %v1573 = vpack.c.bf16 %v1572, %v1572
    %1574 = vrot.lane.b32.xlu0 %v1512, 64
    %v1575 = vpop.permute.xlu0 %1574
    %v1577 = vsel %vm192, %v1573, 0
    %v1580 = vsel %vm256, %v1575, 0
    %1582 = vmatprep.subr.bf16.mxu0 0
    %1583 = vmatpush1.bf16.msra.mxu0 %v1580
    %1584 = vmatprep.subr.bf16.mxu0 0
    %1585 = vmatpush1.bf16.msra.mxu0 0
    %1586 = vmatprep.subr.bf16.mxu0 0
    %1587 = vmatpush1.bf16.msra.mxu0 0
    %1588 = vmatprep.subr.bf16.mxu0 0
    %1589 = vmatpush1.bf16.msra.mxu0 0
    %1590 = vmatprep.subr.bf16.mxu0 0
    %1591 = vmatpush1.bf16.msra.mxu0 0
    %1592 = vmatprep.subr.bf16.mxu0 0
    %1593 = vmatpush1.bf16.msra.mxu0 0
    %1594 = vmatprep.subr.bf16.mxu0 0
    %1595 = vmatpush1.bf16.msra.mxu0 0
    %1596 = vmatprep.subr.bf16.mxu0 0
    %1597 = vmatpush1.bf16.msra.mxu0 0
    %1598 = vmatprep.subr.bf16.mxu0 0
    %1599 = vmatpush1.bf16.msra.mxu0 0
    %1600 = vmatprep.subr.bf16.mxu0 0
    %1601 = vmatpush1.bf16.msra.mxu0 0
    %1602 = vmatprep.subr.bf16.mxu0 0
    %1603 = vmatpush1.bf16.msra.mxu0 0
    %1604 = vmatprep.subr.bf16.mxu0 0
    %1605 = vmatpush1.bf16.msra.mxu0 0
    %1606 = vmatprep.subr.bf16.mxu0 0
    %1607 = vmatpush1.bf16.msra.mxu0 0
    %1608 = vmatprep.subr.bf16.mxu0 0
    %1609 = vmatpush1.bf16.msra.mxu0 0
    %1610 = vmatprep.subr.bf16.mxu0 0
    %1611 = vmatpush1.bf16.msra.mxu0 0
    %1612 = vmatprep.subr.bf16.mxu0 0
    %1613 = vmatpush1.bf16.msra.mxu0 0
    %1614 = vmatprep.mubr.bf16.mxu0 0
    %1615 = vmatmul.mubr.bf16.gmra.mrb[0].mxu0 %v1577
    %v1616 = vpop.f32.mrb[0].mxu0
    %v1617 = vadd.f32 0.0, %v1616
    %v1618 = vpop.f32.mrb[0].mxu0
    %v1619 = vpop.f32.mrb[0].mxu0
    %v1620 = vpop.f32.mrb[0].mxu0
    %1621 = vdwg.mxu0
    %1622 = vst.msk [vmem:[#allocation2] sm:$0xff] %vm192, %v1617
    %1623 = vrot.lane.b32.xlu0 %v1512, 120
    %v1624 = vpop.permute.xlu0 %1623
    %1625 = vrot.lane.b32.xlu0 %v1512, 88
    %v1626 = vpop.permute.xlu0 %1625
    %v1628 = vsel %vm192, %v1624, 0
    %v1631 = vsel %vm192, %v1626, 0
    %1633 = vmatprep.subr.bf16.mxu0 0
    %1634 = vmatpush1.bf16.xpose.msra.mxu0 %v1631
    %1635 = vmatprep.subr.bf16.mxu0 0
    %1636 = vmatpush1.bf16.xpose.msra.mxu0 0
    %1637 = vmatprep.subr.bf16.mxu0 0
    %1638 = vmatpush1.bf16.xpose.msra.mxu0 0
    %1639 = vmatprep.subr.bf16.mxu0 0
    %1640 = vmatpush1.bf16.xpose.msra.mxu0 0
    %1641 = vmatprep.subr.bf16.mxu0 0
    %1642 = vmatpush1.bf16.xpose.msra.mxu0 0
    %1643 = vmatprep.subr.bf16.mxu0 0
    %1644 = vmatpush1.bf16.xpose.msra.mxu0 0
    %1645 = vmatprep.subr.bf16.mxu0 0
    %1646 = vmatpush1.bf16.xpose.msra.mxu0 0
    %1647 = vmatprep.subr.bf16.mxu0 0
    %1648 = vmatpush1.bf16.xpose.msra.mxu0 0
    %1649 = vmatprep.subr.bf16.mxu0 0
    %1650 = vmatpush1.bf16.xpose.msra.mxu0 0
    %1651 = vmatprep.subr.bf16.mxu0 0
    %1652 = vmatpush1.bf16.xpose.msra.mxu0 0
    %1653 = vmatprep.subr.bf16.mxu0 0
    %1654 = vmatpush1.bf16.xpose.msra.mxu0 0
    %1655 = vmatprep.subr.bf16.mxu0 0
    %1656 = vmatpush1.bf16.xpose.msra.mxu0 0
    %1657 = vmatprep.subr.bf16.mxu0 0
    %1658 = vmatpush1.bf16.xpose.msra.mxu0 0
    %1659 = vmatprep.subr.bf16.mxu0 0
    %1660 = vmatpush1.bf16.xpose.msra.mxu0 0
    %1661 = vmatprep.subr.bf16.mxu0 0
    %1662 = vmatpush1.bf16.xpose.msra.mxu0 0
    %1663 = vmatprep.subr.bf16.mxu0 0
    %1664 = vmatpush1.bf16.xpose.msra.mxu0 0
    %1665 = vmatprep.mubr.bf16.mxu0 0
    %1666 = vmatmul.mubr.bf16.gmra.mrb[0].mxu0 %v1628
    %v1667 = vpop.f32.mrb[0].mxu0
    %v1668 = vadd.f32 %v188, %v1667
    %v1669 = vpop.f32.mrb[0].mxu0
    %v1670 = vpop.f32.mrb[0].mxu0
    %v1671 = vpop.f32.mrb[0].mxu0
    %1672 = vdwg.mxu0
    %v1673 = vsel %vm192, %v1668, -inf
    %1674 = vmax.xlane.f32.xlu0 %v1673
    %v1675 = vpop.xlane.xlu0 %1674
    %v1676 = vsub.f32 %v1668, %v1675
    %v1677 = vmul.f32 %v1676, 1.442695
    %v1678 = vpow.pop %v1677
    %v1679 = vsel %vm192, %v1678, 0.0
    %1680 = vadd.xlane.f32.xlu0 %v1679
    %v1681 = vpop.xlane.xlu0 %1680
    %v1682 = vrcp.pop %v1681
    %v1683 = vmul.f32 %v1678, %v1682
    %v1684 = vpack.c.bf16 %v1683, %v1683
    %1685 = vrot.lane.b32.xlu0 %v1512, 56
    %v1686 = vpop.permute.xlu0 %1685
    %v1688 = vsel %vm192, %v1684, 0
    %v1691 = vsel %vm256, %v1686, 0
    %1693 = vmatprep.subr.bf16.mxu0 0
    %1694 = vmatpush1.bf16.msra.mxu0 %v1691
    %1695 = vmatprep.subr.bf16.mxu0 0
    %1696 = vmatpush1.bf16.msra.mxu0 0
    %1697 = vmatprep.subr.bf16.mxu0 0
    %1698 = vmatpush1.bf16.msra.mxu0 0
    %1699 = vmatprep.subr.bf16.mxu0 0
    %1700 = vmatpush1.bf16.msra.mxu0 0
    %1701 = vmatprep.subr.bf16.mxu0 0
    %1702 = vmatpush1.bf16.msra.mxu0 0
    %1703 = vmatprep.subr.bf16.mxu0 0
    %1704 = vmatpush1.bf16.msra.mxu0 0
    %1705 = vmatprep.subr.bf16.mxu0 0
    %1706 = vmatpush1.bf16.msra.mxu0 0
    %1707 = vmatprep.subr.bf16.mxu0 0
    %1708 = vmatpush1.bf16.msra.mxu0 0
    %1709 = vmatprep.subr.bf16.mxu0 0
    %1710 = vmatpush1.bf16.msra.mxu0 0
    %1711 = vmatprep.subr.bf16.mxu0 0
    %1712 = vmatpush1.bf16.msra.mxu0 0
    %1713 = vmatprep.subr.bf16.mxu0 0
    %1714 = vmatpush1.bf16.msra.mxu0 0
    %1715 = vmatprep.subr.bf16.mxu0 0
    %1716 = vmatpush1.bf16.msra.mxu0 0
    %1717 = vmatprep.subr.bf16.mxu0 0
    %1718 = vmatpush1.bf16.msra.mxu0 0
    %1719 = vmatprep.subr.bf16.mxu0 0
    %1720 = vmatpush1.bf16.msra.mxu0 0
    %1721 = vmatprep.subr.bf16.mxu0 0
    %1722 = vmatpush1.bf16.msra.mxu0 0
    %1723 = vmatprep.subr.bf16.mxu0 0
    %1724 = vmatpush1.bf16.msra.mxu0 0
    %1725 = vmatprep.mubr.bf16.mxu0 0
    %1726 = vmatmul.mubr.bf16.gmra.mrb[0].mxu0 %v1688
    %v1727 = vpop.f32.mrb[0].mxu0
    %v1728 = vadd.f32 0.0, %v1727
    %v1729 = vpop.f32.mrb[0].mxu0
    %v1730 = vpop.f32.mrb[0].mxu0
    %v1731 = vpop.f32.mrb[0].mxu0
    %1732 = vdwg.mxu0
    %1734 = vrot.lane.b32.xlu0 %v1728, 8
    %v1735 = vpop.permute.xlu0 %1734
    %1737 = vst.msk [vmem:[#allocation2] sm:$0xff] %vm415, %v1735
    %1738 = vrot.lane.b32.xlu0 %v1512, 112
    %v1739 = vpop.permute.xlu0 %1738
    %1740 = vrot.lane.b32.xlu0 %v1512, 80
    %v1741 = vpop.permute.xlu0 %1740
    %v1743 = vsel %vm192, %v1739, 0
    %v1746 = vsel %vm192, %v1741, 0
    %1748 = vmatprep.subr.bf16.mxu0 0
    %1749 = vmatpush1.bf16.xpose.msra.mxu0 %v1746
    %1750 = vmatprep.subr.bf16.mxu0 0
    %1751 = vmatpush1.bf16.xpose.msra.mxu0 0
    %1752 = vmatprep.subr.bf16.mxu0 0
    %1753 = vmatpush1.bf16.xpose.msra.mxu0 0
    %1754 = vmatprep.subr.bf16.mxu0 0
    %1755 = vmatpush1.bf16.xpose.msra.mxu0 0
    %1756 = vmatprep.subr.bf16.mxu0 0
    %1757 = vmatpush1.bf16.xpose.msra.mxu0 0
    %1758 = vmatprep.subr.bf16.mxu0 0
    %1759 = vmatpush1.bf16.xpose.msra.mxu0 0
    %1760 = vmatprep.subr.bf16.mxu0 0
    %1761 = vmatpush1.bf16.xpose.msra.mxu0 0
    %1762 = vmatprep.subr.bf16.mxu0 0
    %1763 = vmatpush1.bf16.xpose.msra.mxu0 0
    %1764 = vmatprep.subr.bf16.mxu0 0
    %1765 = vmatpush1.bf16.xpose.msra.mxu0 0
    %1766 = vmatprep.subr.bf16.mxu0 0
    %1767 = vmatpush1.bf16.xpose.msra.mxu0 0
    %1768 = vmatprep.subr.bf16.mxu0 0
    %1769 = vmatpush1.bf16.xpose.msra.mxu0 0
    %1770 = vmatprep.subr.bf16.mxu0 0
    %1771 = vmatpush1.bf16.xpose.msra.mxu0 0
    %1772 = vmatprep.subr.bf16.mxu0 0
    %1773 = vmatpush1.bf16.xpose.msra.mxu0 0
    %1774 = vmatprep.subr.bf16.mxu0 0
    %1775 = vmatpush1.bf16.xpose.msra.mxu0 0
    %1776 = vmatprep.subr.bf16.mxu0 0
    %1777 = vmatpush1.bf16.xpose.msra.mxu0 0
    %1778 = vmatprep.subr.bf16.mxu0 0
    %1779 = vmatpush1.bf16.xpose.msra.mxu0 0
    %1780 = vmatprep.mubr.bf16.mxu0 0
    %1781 = vmatmul.mubr.bf16.gmra.mrb[0].mxu0 %v1743
    %v1782 = vpop.f32.mrb[0].mxu0
    %v1783 = vadd.f32 %v188, %v1782
    %v1784 = vpop.f32.mrb[0].mxu0
    %v1785 = vpop.f32.mrb[0].mxu0
    %v1786 = vpop.f32.mrb[0].mxu0
    %1787 = vdwg.mxu0
    %v1788 = vsel %vm192, %v1783, -inf
    %1789 = vmax.xlane.f32.xlu0 %v1788
    %v1790 = vpop.xlane.xlu0 %1789
    %v1791 = vsub.f32 %v1783, %v1790
    %v1792 = vmul.f32 %v1791, 1.442695
    %v1793 = vpow.pop %v1792
    %v1794 = vsel %vm192, %v1793, 0.0
    %1795 = vadd.xlane.f32.xlu0 %v1794
    %v1796 = vpop.xlane.xlu0 %1795
    %v1797 = vrcp.pop %v1796
    %v1798 = vmul.f32 %v1793, %v1797
    %v1799 = vpack.c.bf16 %v1798, %v1798
    %1800 = vrot.lane.b32.xlu0 %v1512, 48
    %v1801 = vpop.permute.xlu0 %1800
    %v1803 = vsel %vm192, %v1799, 0
    %v1806 = vsel %vm256, %v1801, 0
    %1808 = vmatprep.subr.bf16.mxu0 0
    %1809 = vmatpush1.bf16.msra.mxu0 %v1806
    %1810 = vmatprep.subr.bf16.mxu0 0
    %1811 = vmatpush1.bf16.msra.mxu0 0
    %1812 = vmatprep.subr.bf16.mxu0 0
    %1813 = vmatpush1.bf16.msra.mxu0 0
    %1814 = vmatprep.subr.bf16.mxu0 0
    %1815 = vmatpush1.bf16.msra.mxu0 0
    %1816 = vmatprep.subr.bf16.mxu0 0
    %1817 = vmatpush1.bf16.msra.mxu0 0
    %1818 = vmatprep.subr.bf16.mxu0 0
    %1819 = vmatpush1.bf16.msra.mxu0 0
    %1820 = vmatprep.subr.bf16.mxu0 0
    %1821 = vmatpush1.bf16.msra.mxu0 0
    %1822 = vmatprep.subr.bf16.mxu0 0
    %1823 = vmatpush1.bf16.msra.mxu0 0
    %1824 = vmatprep.subr.bf16.mxu0 0
    %1825 = vmatpush1.bf16.msra.mxu0 0
    %1826 = vmatprep.subr.bf16.mxu0 0
    %1827 = vmatpush1.bf16.msra.mxu0 0
    %1828 = vmatprep.subr.bf16.mxu0 0
    %1829 = vmatpush1.bf16.msra.mxu0 0
    %1830 = vmatprep.subr.bf16.mxu0 0
    %1831 = vmatpush1.bf16.msra.mxu0 0
    %1832 = vmatprep.subr.bf16.mxu0 0
    %1833 = vmatpush1.bf16.msra.mxu0 0
    %1834 = vmatprep.subr.bf16.mxu0 0
    %1835 = vmatpush1.bf16.msra.mxu0 0
    %1836 = vmatprep.subr.bf16.mxu0 0
    %1837 = vmatpush1.bf16.msra.mxu0 0
    %1838 = vmatprep.subr.bf16.mxu0 0
    %1839 = vmatpush1.bf16.msra.mxu0 0
    %1840 = vmatprep.mubr.bf16.mxu0 0
    %1841 = vmatmul.mubr.bf16.gmra.mrb[0].mxu0 %v1803
    %v1842 = vpop.f32.mrb[0].mxu0
    %v1843 = vadd.f32 0.0, %v1842
    %v1844 = vpop.f32.mrb[0].mxu0
    %v1845 = vpop.f32.mrb[0].mxu0
    %v1846 = vpop.f32.mrb[0].mxu0
    %1847 = vdwg.mxu0
    %1849 = vrot.lane.b32.xlu0 %v1843, 16
    %v1850 = vpop.permute.xlu0 %1849
    %1852 = vst.msk [vmem:[#allocation2] sm:$0xff] %vm531, %v1850
    %1853 = vrot.lane.b32.xlu0 %v1512, 104
    %v1854 = vpop.permute.xlu0 %1853
    %1855 = vrot.lane.b32.xlu0 %v1512, 72
    %v1856 = vpop.permute.xlu0 %1855
    %v1858 = vsel %vm192, %v1854, 0
    %v1861 = vsel %vm192, %v1856, 0
    %1863 = vmatprep.subr.bf16.mxu0 0
    %1864 = vmatpush1.bf16.xpose.msra.mxu0 %v1861
    %1865 = vmatprep.subr.bf16.mxu0 0
    %1866 = vmatpush1.bf16.xpose.msra.mxu0 0
    %1867 = vmatprep.subr.bf16.mxu0 0
    %1868 = vmatpush1.bf16.xpose.msra.mxu0 0
    %1869 = vmatprep.subr.bf16.mxu0 0
    %1870 = vmatpush1.bf16.xpose.msra.mxu0 0
    %1871 = vmatprep.subr.bf16.mxu0 0
    %1872 = vmatpush1.bf16.xpose.msra.mxu0 0
    %1873 = vmatprep.subr.bf16.mxu0 0
    %1874 = vmatpush1.bf16.xpose.msra.mxu0 0
    %1875 = vmatprep.subr.bf16.mxu0 0
    %1876 = vmatpush1.bf16.xpose.msra.mxu0 0
    %1877 = vmatprep.subr.bf16.mxu0 0
    %1878 = vmatpush1.bf16.xpose.msra.mxu0 0
    %1879 = vmatprep.subr.bf16.mxu0 0
    %1880 = vmatpush1.bf16.xpose.msra.mxu0 0
    %1881 = vmatprep.subr.bf16.mxu0 0
    %1882 = vmatpush1.bf16.xpose.msra.mxu0 0
    %1883 = vmatprep.subr.bf16.mxu0 0
    %1884 = vmatpush1.bf16.xpose.msra.mxu0 0
    %1885 = vmatprep.subr.bf16.mxu0 0
    %1886 = vmatpush1.bf16.xpose.msra.mxu0 0
    %1887 = vmatprep.subr.bf16.mxu0 0
    %1888 = vmatpush1.bf16.xpose.msra.mxu0 0
    %1889 = vmatprep.subr.bf16.mxu0 0
    %1890 = vmatpush1.bf16.xpose.msra.mxu0 0
    %1891 = vmatprep.subr.bf16.mxu0 0
    %1892 = vmatpush1.bf16.xpose.msra.mxu0 0
    %1893 = vmatprep.subr.bf16.mxu0 0
    %1894 = vmatpush1.bf16.xpose.msra.mxu0 0
    %1895 = vmatprep.mubr.bf16.mxu0 0
    %1896 = vmatmul.mubr.bf16.gmra.mrb[0].mxu0 %v1858
    %v1897 = vpop.f32.mrb[0].mxu0
    %v1898 = vadd.f32 %v188, %v1897
    %v1899 = vpop.f32.mrb[0].mxu0
    %v1900 = vpop.f32.mrb[0].mxu0
    %v1901 = vpop.f32.mrb[0].mxu0
    %1902 = vdwg.mxu0
    %v1903 = vsel %vm192, %v1898, -inf
    %1904 = vmax.xlane.f32.xlu0 %v1903
    %v1905 = vpop.xlane.xlu0 %1904
    %v1906 = vsub.f32 %v1898, %v1905
    %v1907 = vmul.f32 %v1906, 1.442695
    %v1908 = vpow.pop %v1907
    %v1909 = vsel %vm192, %v1908, 0.0
    %1910 = vadd.xlane.f32.xlu0 %v1909
    %v1911 = vpop.xlane.xlu0 %1910
    %v1912 = vrcp.pop %v1911
    %v1913 = vmul.f32 %v1908, %v1912
    %v1914 = vpack.c.bf16 %v1913, %v1913
    %1915 = vrot.lane.b32.xlu0 %v1512, 40
    %v1916 = vpop.permute.xlu0 %1915
    %v1918 = vsel %vm192, %v1914, 0
    %v1921 = vsel %vm256, %v1916, 0
    %1923 = vmatprep.subr.bf16.mxu0 0
    %1924 = vmatpush1.bf16.msra.mxu0 %v1921
    %1925 = vmatprep.subr.bf16.mxu0 0
    %1926 = vmatpush1.bf16.msra.mxu0 0
    %1927 = vmatprep.subr.bf16.mxu0 0
    %1928 = vmatpush1.bf16.msra.mxu0 0
    %1929 = vmatprep.subr.bf16.mxu0 0
    %1930 = vmatpush1.bf16.msra.mxu0 0
    %1931 = vmatprep.subr.bf16.mxu0 0
    %1932 = vmatpush1.bf16.msra.mxu0 0
    %1933 = vmatprep.subr.bf16.mxu0 0
    %1934 = vmatpush1.bf16.msra.mxu0 0
    %1935 = vmatprep.subr.bf16.mxu0 0
    %1936 = vmatpush1.bf16.msra.mxu0 0
    %1937 = vmatprep.subr.bf16.mxu0 0
    %1938 = vmatpush1.bf16.msra.mxu0 0
    %1939 = vmatprep.subr.bf16.mxu0 0
    %1940 = vmatpush1.bf16.msra.mxu0 0
    %1941 = vmatprep.subr.bf16.mxu0 0
    %1942 = vmatpush1.bf16.msra.mxu0 0
    %1943 = vmatprep.subr.bf16.mxu0 0
    %1944 = vmatpush1.bf16.msra.mxu0 0
    %1945 = vmatprep.subr.bf16.mxu0 0
    %1946 = vmatpush1.bf16.msra.mxu0 0
    %1947 = vmatprep.subr.bf16.mxu0 0
    %1948 = vmatpush1.bf16.msra.mxu0 0
    %1949 = vmatprep.subr.bf16.mxu0 0
    %1950 = vmatpush1.bf16.msra.mxu0 0
    %1951 = vmatprep.subr.bf16.mxu0 0
    %1952 = vmatpush1.bf16.msra.mxu0 0
    %1953 = vmatprep.subr.bf16.mxu0 0
    %1954 = vmatpush1.bf16.msra.mxu0 0
    %1955 = vmatprep.mubr.bf16.mxu0 0
    %1956 = vmatmul.mubr.bf16.gmra.mrb[0].mxu0 %v1918
    %v1957 = vpop.f32.mrb[0].mxu0
    %v1958 = vadd.f32 0.0, %v1957
    %v1959 = vpop.f32.mrb[0].mxu0
    %v1960 = vpop.f32.mrb[0].mxu0
    %v1961 = vpop.f32.mrb[0].mxu0
    %1962 = vdwg.mxu0
    %1964 = vrot.lane.b32.xlu0 %v1958, 24
    %v1965 = vpop.permute.xlu0 %1964
    %1967 = vst.msk [vmem:[#allocation2] sm:$0xff] %vm647, %v1965
    %v1968 = vpack.c.bf16 %v1509, %v1509
    %1970 = vrot.lane.b32.xlu0 %v1968, 96
    %v1971 = vpop.permute.xlu0 %1970
    %v1973 = vsel %vm192, %v1968, 0
    %v1976 = vsel %vm192, %v1971, 0
    %1978 = vmatprep.subr.bf16.mxu0 0
    %1979 = vmatpush1.bf16.xpose.msra.mxu0 %v1976
    %1980 = vmatprep.subr.bf16.mxu0 0
    %1981 = vmatpush1.bf16.xpose.msra.mxu0 0
    %1982 = vmatprep.subr.bf16.mxu0 0
    %1983 = vmatpush1.bf16.xpose.msra.mxu0 0
    %1984 = vmatprep.subr.bf16.mxu0 0
    %1985 = vmatpush1.bf16.xpose.msra.mxu0 0
    %1986 = vmatprep.subr.bf16.mxu0 0
    %1987 = vmatpush1.bf16.xpose.msra.mxu0 0
    %1988 = vmatprep.subr.bf16.mxu0 0
    %1989 = vmatpush1.bf16.xpose.msra.mxu0 0
    %1990 = vmatprep.subr.bf16.mxu0 0
    %1991 = vmatpush1.bf16.xpose.msra.mxu0 0
    %1992 = vmatprep.subr.bf16.mxu0 0
    %1993 = vmatpush1.bf16.xpose.msra.mxu0 0
    %1994 = vmatprep.subr.bf16.mxu0 0
    %1995 = vmatpush1.bf16.xpose.msra.mxu0 0
    %1996 = vmatprep.subr.bf16.mxu0 0
    %1997 = vmatpush1.bf16.xpose.msra.mxu0 0
    %1998 = vmatprep.subr.bf16.mxu0 0
    %1999 = vmatpush1.bf16.xpose.msra.mxu0 0
    %2000 = vmatprep.subr.bf16.mxu0 0
    %2001 = vmatpush1.bf16.xpose.msra.mxu0 0
    %2002 = vmatprep.subr.bf16.mxu0 0
    %2003 = vmatpush1.bf16.xpose.msra.mxu0 0
    %2004 = vmatprep.subr.bf16.mxu0 0
    %2005 = vmatpush1.bf16.xpose.msra.mxu0 0
    %2006 = vmatprep.subr.bf16.mxu0 0
    %2007 = vmatpush1.bf16.xpose.msra.mxu0 0
    %2008 = vmatprep.subr.bf16.mxu0 0
    %2009 = vmatpush1.bf16.xpose.msra.mxu0 0
    %2010 = vmatprep.mubr.bf16.mxu0 0
    %2011 = vmatmul.mubr.bf16.gmra.mrb[0].mxu0 %v1973
    %v2012 = vpop.f32.mrb[0].mxu0
    %v2013 = vadd.f32 %v653, %v2012
    %v2014 = vpop.f32.mrb[0].mxu0
    %v2015 = vpop.f32.mrb[0].mxu0
    %v2016 = vpop.f32.mrb[0].mxu0
    %2017 = vdwg.mxu0
    %v2018 = vsel %vm192, %v2013, -inf
    %2019 = vmax.xlane.f32.xlu0 %v2018
    %v2020 = vpop.xlane.xlu0 %2019
    %v2021 = vsub.f32 %v2013, %v2020
    %v2022 = vmul.f32 %v2021, 1.442695
    %v2023 = vpow.pop %v2022
    %v2024 = vsel %vm192, %v2023, 0.0
    %2025 = vadd.xlane.f32.xlu0 %v2024
    %v2026 = vpop.xlane.xlu0 %2025
    %v2027 = vrcp.pop %v2026
    %v2028 = vmul.f32 %v2023, %v2027
    %v2029 = vpack.c.bf16 %v2028, %v2028
    %2030 = vrot.lane.b32.xlu0 %v1968, 64
    %v2031 = vpop.permute.xlu0 %2030
    %v2033 = vsel %vm192, %v2029, 0
    %v2036 = vsel %vm256, %v2031, 0
    %2038 = vmatprep.subr.bf16.mxu0 0
    %2039 = vmatpush1.bf16.msra.mxu0 %v2036
    %2040 = vmatprep.subr.bf16.mxu0 0
    %2041 = vmatpush1.bf16.msra.mxu0 0
    %2042 = vmatprep.subr.bf16.mxu0 0
    %2043 = vmatpush1.bf16.msra.mxu0 0
    %2044 = vmatprep.subr.bf16.mxu0 0
    %2045 = vmatpush1.bf16.msra.mxu0 0
    %2046 = vmatprep.subr.bf16.mxu0 0
    %2047 = vmatpush1.bf16.msra.mxu0 0
    %2048 = vmatprep.subr.bf16.mxu0 0
    %2049 = vmatpush1.bf16.msra.mxu0 0
    %2050 = vmatprep.subr.bf16.mxu0 0
    %2051 = vmatpush1.bf16.msra.mxu0 0
    %2052 = vmatprep.subr.bf16.mxu0 0
    %2053 = vmatpush1.bf16.msra.mxu0 0
    %2054 = vmatprep.subr.bf16.mxu0 0
    %2055 = vmatpush1.bf16.msra.mxu0 0
    %2056 = vmatprep.subr.bf16.mxu0 0
    %2057 = vmatpush1.bf16.msra.mxu0 0
    %2058 = vmatprep.subr.bf16.mxu0 0
    %2059 = vmatpush1.bf16.msra.mxu0 0
    %2060 = vmatprep.subr.bf16.mxu0 0
    %2061 = vmatpush1.bf16.msra.mxu0 0
    %2062 = vmatprep.subr.bf16.mxu0 0
    %2063 = vmatpush1.bf16.msra.mxu0 0
    %2064 = vmatprep.subr.bf16.mxu0 0
    %2065 = vmatpush1.bf16.msra.mxu0 0
    %2066 = vmatprep.subr.bf16.mxu0 0
    %2067 = vmatpush1.bf16.msra.mxu0 0
    %2068 = vmatprep.subr.bf16.mxu0 0
    %2069 = vmatpush1.bf16.msra.mxu0 0
    %2070 = vmatprep.mubr.bf16.mxu0 0
    %2071 = vmatmul.mubr.bf16.gmra.mrb[0].mxu0 %v2033
    %v2072 = vpop.f32.mrb[0].mxu0
    %v2073 = vadd.f32 0.0, %v2072
    %v2074 = vpop.f32.mrb[0].mxu0
    %v2075 = vpop.f32.mrb[0].mxu0
    %v2076 = vpop.f32.mrb[0].mxu0
    %2077 = vdwg.mxu0
    %2078 = vst.msk [vmem:[#allocation2 + $0x8] sm:$0xff] %vm192, %v2073
    %2079 = vrot.lane.b32.xlu0 %v1968, 120
    %v2080 = vpop.permute.xlu0 %2079
    %2081 = vrot.lane.b32.xlu0 %v1968, 88
    %v2082 = vpop.permute.xlu0 %2081
    %v2084 = vsel %vm192, %v2080, 0
    %v2087 = vsel %vm192, %v2082, 0
    %2089 = vmatprep.subr.bf16.mxu0 0
    %2090 = vmatpush1.bf16.xpose.msra.mxu0 %v2087
    %2091 = vmatprep.subr.bf16.mxu0 0
    %2092 = vmatpush1.bf16.xpose.msra.mxu0 0
    %2093 = vmatprep.subr.bf16.mxu0 0
    %2094 = vmatpush1.bf16.xpose.msra.mxu0 0
    %2095 = vmatprep.subr.bf16.mxu0 0
    %2096 = vmatpush1.bf16.xpose.msra.mxu0 0
    %2097 = vmatprep.subr.bf16.mxu0 0
    %2098 = vmatpush1.bf16.xpose.msra.mxu0 0
    %2099 = vmatprep.subr.bf16.mxu0 0
    %2100 = vmatpush1.bf16.xpose.msra.mxu0 0
    %2101 = vmatprep.subr.bf16.mxu0 0
    %2102 = vmatpush1.bf16.xpose.msra.mxu0 0
    %2103 = vmatprep.subr.bf16.mxu0 0
    %2104 = vmatpush1.bf16.xpose.msra.mxu0 0
    %2105 = vmatprep.subr.bf16.mxu0 0
    %2106 = vmatpush1.bf16.xpose.msra.mxu0 0
    %2107 = vmatprep.subr.bf16.mxu0 0
    %2108 = vmatpush1.bf16.xpose.msra.mxu0 0
    %2109 = vmatprep.subr.bf16.mxu0 0
    %2110 = vmatpush1.bf16.xpose.msra.mxu0 0
    %2111 = vmatprep.subr.bf16.mxu0 0
    %2112 = vmatpush1.bf16.xpose.msra.mxu0 0
    %2113 = vmatprep.subr.bf16.mxu0 0
    %2114 = vmatpush1.bf16.xpose.msra.mxu0 0
    %2115 = vmatprep.subr.bf16.mxu0 0
    %2116 = vmatpush1.bf16.xpose.msra.mxu0 0
    %2117 = vmatprep.subr.bf16.mxu0 0
    %2118 = vmatpush1.bf16.xpose.msra.mxu0 0
    %2119 = vmatprep.subr.bf16.mxu0 0
    %2120 = vmatpush1.bf16.xpose.msra.mxu0 0
    %2121 = vmatprep.mubr.bf16.mxu0 0
    %2122 = vmatmul.mubr.bf16.gmra.mrb[0].mxu0 %v2084
    %v2123 = vpop.f32.mrb[0].mxu0
    %v2124 = vadd.f32 %v653, %v2123
    %v2125 = vpop.f32.mrb[0].mxu0
    %v2126 = vpop.f32.mrb[0].mxu0
    %v2127 = vpop.f32.mrb[0].mxu0
    %2128 = vdwg.mxu0
    %v2129 = vsel %vm192, %v2124, -inf
    %2130 = vmax.xlane.f32.xlu0 %v2129
    %v2131 = vpop.xlane.xlu0 %2130
    %v2132 = vsub.f32 %v2124, %v2131
    %v2133 = vmul.f32 %v2132, 1.442695
    %v2134 = vpow.pop %v2133
    %v2135 = vsel %vm192, %v2134, 0.0
    %2136 = vadd.xlane.f32.xlu0 %v2135
    %v2137 = vpop.xlane.xlu0 %2136
    %v2138 = vrcp.pop %v2137
    %v2139 = vmul.f32 %v2134, %v2138
    %v2140 = vpack.c.bf16 %v2139, %v2139
    %2141 = vrot.lane.b32.xlu0 %v1968, 56
    %v2142 = vpop.permute.xlu0 %2141
    %v2144 = vsel %vm192, %v2140, 0
    %v2147 = vsel %vm256, %v2142, 0
    %2149 = vmatprep.subr.bf16.mxu0 0
    %2150 = vmatpush1.bf16.msra.mxu0 %v2147
    %2151 = vmatprep.subr.bf16.mxu0 0
    %2152 = vmatpush1.bf16.msra.mxu0 0
    %2153 = vmatprep.subr.bf16.mxu0 0
    %2154 = vmatpush1.bf16.msra.mxu0 0
    %2155 = vmatprep.subr.bf16.mxu0 0
    %2156 = vmatpush1.bf16.msra.mxu0 0
    %2157 = vmatprep.subr.bf16.mxu0 0
    %2158 = vmatpush1.bf16.msra.mxu0 0
    %2159 = vmatprep.subr.bf16.mxu0 0
    %2160 = vmatpush1.bf16.msra.mxu0 0
    %2161 = vmatprep.subr.bf16.mxu0 0
    %2162 = vmatpush1.bf16.msra.mxu0 0
    %2163 = vmatprep.subr.bf16.mxu0 0
    %2164 = vmatpush1.bf16.msra.mxu0 0
    %2165 = vmatprep.subr.bf16.mxu0 0
    %2166 = vmatpush1.bf16.msra.mxu0 0
    %2167 = vmatprep.subr.bf16.mxu0 0
    %2168 = vmatpush1.bf16.msra.mxu0 0
    %2169 = vmatprep.subr.bf16.mxu0 0
    %2170 = vmatpush1.bf16.msra.mxu0 0
    %2171 = vmatprep.subr.bf16.mxu0 0
    %2172 = vmatpush1.bf16.msra.mxu0 0
    %2173 = vmatprep.subr.bf16.mxu0 0
    %2174 = vmatpush1.bf16.msra.mxu0 0
    %2175 = vmatprep.subr.bf16.mxu0 0
    %2176 = vmatpush1.bf16.msra.mxu0 0
    %2177 = vmatprep.subr.bf16.mxu0 0
    %2178 = vmatpush1.bf16.msra.mxu0 0
    %2179 = vmatprep.subr.bf16.mxu0 0
    %2180 = vmatpush1.bf16.msra.mxu0 0
    %2181 = vmatprep.mubr.bf16.mxu0 0
    %2182 = vmatmul.mubr.bf16.gmra.mrb[0].mxu0 %v2144
    %v2183 = vpop.f32.mrb[0].mxu0
    %v2184 = vadd.f32 0.0, %v2183
    %v2185 = vpop.f32.mrb[0].mxu0
    %v2186 = vpop.f32.mrb[0].mxu0
    %v2187 = vpop.f32.mrb[0].mxu0
    %2188 = vdwg.mxu0
    %2190 = vrot.lane.b32.xlu0 %v2184, 8
    %v2191 = vpop.permute.xlu0 %2190
    %2193 = vst.msk [vmem:[#allocation2 + $0x8] sm:$0xff] %vm415, %v2191
    %2194 = vrot.lane.b32.xlu0 %v1968, 112
    %v2195 = vpop.permute.xlu0 %2194
    %2196 = vrot.lane.b32.xlu0 %v1968, 80
    %v2197 = vpop.permute.xlu0 %2196
    %v2199 = vsel %vm192, %v2195, 0
    %v2202 = vsel %vm192, %v2197, 0
    %2204 = vmatprep.subr.bf16.mxu0 0
    %2205 = vmatpush1.bf16.xpose.msra.mxu0 %v2202
    %2206 = vmatprep.subr.bf16.mxu0 0
    %2207 = vmatpush1.bf16.xpose.msra.mxu0 0
    %2208 = vmatprep.subr.bf16.mxu0 0
    %2209 = vmatpush1.bf16.xpose.msra.mxu0 0
    %2210 = vmatprep.subr.bf16.mxu0 0
    %2211 = vmatpush1.bf16.xpose.msra.mxu0 0
    %2212 = vmatprep.subr.bf16.mxu0 0
    %2213 = vmatpush1.bf16.xpose.msra.mxu0 0
    %2214 = vmatprep.subr.bf16.mxu0 0
    %2215 = vmatpush1.bf16.xpose.msra.mxu0 0
    %2216 = vmatprep.subr.bf16.mxu0 0
    %2217 = vmatpush1.bf16.xpose.msra.mxu0 0
    %2218 = vmatprep.subr.bf16.mxu0 0
    %2219 = vmatpush1.bf16.xpose.msra.mxu0 0
    %2220 = vmatprep.subr.bf16.mxu0 0
    %2221 = vmatpush1.bf16.xpose.msra.mxu0 0
    %2222 = vmatprep.subr.bf16.mxu0 0
    %2223 = vmatpush1.bf16.xpose.msra.mxu0 0
    %2224 = vmatprep.subr.bf16.mxu0 0
    %2225 = vmatpush1.bf16.xpose.msra.mxu0 0
    %2226 = vmatprep.subr.bf16.mxu0 0
    %2227 = vmatpush1.bf16.xpose.msra.mxu0 0
    %2228 = vmatprep.subr.bf16.mxu0 0
    %2229 = vmatpush1.bf16.xpose.msra.mxu0 0
    %2230 = vmatprep.subr.bf16.mxu0 0
    %2231 = vmatpush1.bf16.xpose.msra.mxu0 0
    %2232 = vmatprep.subr.bf16.mxu0 0
    %2233 = vmatpush1.bf16.xpose.msra.mxu0 0
    %2234 = vmatprep.subr.bf16.mxu0 0
    %2235 = vmatpush1.bf16.xpose.msra.mxu0 0
    %2236 = vmatprep.mubr.bf16.mxu0 0
    %2237 = vmatmul.mubr.bf16.gmra.mrb[0].mxu0 %v2199
    %v2238 = vpop.f32.mrb[0].mxu0
    %v2239 = vadd.f32 %v653, %v2238
    %v2240 = vpop.f32.mrb[0].mxu0
    %v2241 = vpop.f32.mrb[0].mxu0
    %v2242 = vpop.f32.mrb[0].mxu0
    %2243 = vdwg.mxu0
    %v2244 = vsel %vm192, %v2239, -inf
    %2245 = vmax.xlane.f32.xlu0 %v2244
    %v2246 = vpop.xlane.xlu0 %2245
    %v2247 = vsub.f32 %v2239, %v2246
    %v2248 = vmul.f32 %v2247, 1.442695
    %v2249 = vpow.pop %v2248
    %v2250 = vsel %vm192, %v2249, 0.0
    %2251 = vadd.xlane.f32.xlu0 %v2250
    %v2252 = vpop.xlane.xlu0 %2251
    %v2253 = vrcp.pop %v2252
    %v2254 = vmul.f32 %v2249, %v2253
    %v2255 = vpack.c.bf16 %v2254, %v2254
    %2256 = vrot.lane.b32.xlu0 %v1968, 48
    %v2257 = vpop.permute.xlu0 %2256
    %v2259 = vsel %vm192, %v2255, 0
    %v2262 = vsel %vm256, %v2257, 0
    %2264 = vmatprep.subr.bf16.mxu0 0
    %2265 = vmatpush1.bf16.msra.mxu0 %v2262
    %2266 = vmatprep.subr.bf16.mxu0 0
    %2267 = vmatpush1.bf16.msra.mxu0 0
    %2268 = vmatprep.subr.bf16.mxu0 0
    %2269 = vmatpush1.bf16.msra.mxu0 0
    %2270 = vmatprep.subr.bf16.mxu0 0
    %2271 = vmatpush1.bf16.msra.mxu0 0
    %2272 = vmatprep.subr.bf16.mxu0 0
    %2273 = vmatpush1.bf16.msra.mxu0 0
    %2274 = vmatprep.subr.bf16.mxu0 0
    %2275 = vmatpush1.bf16.msra.mxu0 0
    %2276 = vmatprep.subr.bf16.mxu0 0
    %2277 = vmatpush1.bf16.msra.mxu0 0
    %2278 = vmatprep.subr.bf16.mxu0 0
    %2279 = vmatpush1.bf16.msra.mxu0 0
    %2280 = vmatprep.subr.bf16.mxu0 0
    %2281 = vmatpush1.bf16.msra.mxu0 0
    %2282 = vmatprep.subr.bf16.mxu0 0
    %2283 = vmatpush1.bf16.msra.mxu0 0
    %2284 = vmatprep.subr.bf16.mxu0 0
    %2285 = vmatpush1.bf16.msra.mxu0 0
    %2286 = vmatprep.subr.bf16.mxu0 0
    %2287 = vmatpush1.bf16.msra.mxu0 0
    %2288 = vmatprep.subr.bf16.mxu0 0
    %2289 = vmatpush1.bf16.msra.mxu0 0
    %2290 = vmatprep.subr.bf16.mxu0 0
    %2291 = vmatpush1.bf16.msra.mxu0 0
    %2292 = vmatprep.subr.bf16.mxu0 0
    %2293 = vmatpush1.bf16.msra.mxu0 0
    %2294 = vmatprep.subr.bf16.mxu0 0
    %2295 = vmatpush1.bf16.msra.mxu0 0
    %2296 = vmatprep.mubr.bf16.mxu0 0
    %2297 = vmatmul.mubr.bf16.gmra.mrb[0].mxu0 %v2259
    %v2298 = vpop.f32.mrb[0].mxu0
    %v2299 = vadd.f32 0.0, %v2298
    %v2300 = vpop.f32.mrb[0].mxu0
    %v2301 = vpop.f32.mrb[0].mxu0
    %v2302 = vpop.f32.mrb[0].mxu0
    %2303 = vdwg.mxu0
    %2305 = vrot.lane.b32.xlu0 %v2299, 16
    %v2306 = vpop.permute.xlu0 %2305
    %2308 = vst.msk [vmem:[#allocation2 + $0x8] sm:$0xff] %vm531, %v2306
    %2309 = vrot.lane.b32.xlu0 %v1968, 104
    %v2310 = vpop.permute.xlu0 %2309
    %2311 = vrot.lane.b32.xlu0 %v1968, 72
    %v2312 = vpop.permute.xlu0 %2311
    %v2314 = vsel %vm192, %v2310, 0
    %v2317 = vsel %vm192, %v2312, 0
    %2319 = vmatprep.subr.bf16.mxu0 0
    %2320 = vmatpush1.bf16.xpose.msra.mxu0 %v2317
    %2321 = vmatprep.subr.bf16.mxu0 0
    %2322 = vmatpush1.bf16.xpose.msra.mxu0 0
    %2323 = vmatprep.subr.bf16.mxu0 0
    %2324 = vmatpush1.bf16.xpose.msra.mxu0 0
    %2325 = vmatprep.subr.bf16.mxu0 0
    %2326 = vmatpush1.bf16.xpose.msra.mxu0 0
    %2327 = vmatprep.subr.bf16.mxu0 0
    %2328 = vmatpush1.bf16.xpose.msra.mxu0 0
    %2329 = vmatprep.subr.bf16.mxu0 0
    %2330 = vmatpush1.bf16.xpose.msra.mxu0 0
    %2331 = vmatprep.subr.bf16.mxu0 0
    %2332 = vmatpush1.bf16.xpose.msra.mxu0 0
    %2333 = vmatprep.subr.bf16.mxu0 0
    %2334 = vmatpush1.bf16.xpose.msra.mxu0 0
    %2335 = vmatprep.subr.bf16.mxu0 0
    %2336 = vmatpush1.bf16.xpose.msra.mxu0 0
    %2337 = vmatprep.subr.bf16.mxu0 0
    %2338 = vmatpush1.bf16.xpose.msra.mxu0 0
    %2339 = vmatprep.subr.bf16.mxu0 0
    %2340 = vmatpush1.bf16.xpose.msra.mxu0 0
    %2341 = vmatprep.subr.bf16.mxu0 0
    %2342 = vmatpush1.bf16.xpose.msra.mxu0 0
    %2343 = vmatprep.subr.bf16.mxu0 0
    %2344 = vmatpush1.bf16.xpose.msra.mxu0 0
    %2345 = vmatprep.subr.bf16.mxu0 0
    %2346 = vmatpush1.bf16.xpose.msra.mxu0 0
    %2347 = vmatprep.subr.bf16.mxu0 0
    %2348 = vmatpush1.bf16.xpose.msra.mxu0 0
    %2349 = vmatprep.subr.bf16.mxu0 0
    %2350 = vmatpush1.bf16.xpose.msra.mxu0 0
    %2351 = vmatprep.mubr.bf16.mxu0 0
    %2352 = vmatmul.mubr.bf16.gmra.mrb[0].mxu0 %v2314
    %v2353 = vpop.f32.mrb[0].mxu0
    %v2354 = vadd.f32 %v653, %v2353
    %v2355 = vpop.f32.mrb[0].mxu0
    %v2356 = vpop.f32.mrb[0].mxu0
    %v2357 = vpop.f32.mrb[0].mxu0
    %2358 = vdwg.mxu0
    %v2359 = vsel %vm192, %v2354, -inf
    %2360 = vmax.xlane.f32.xlu0 %v2359
    %v2361 = vpop.xlane.xlu0 %2360
    %v2362 = vsub.f32 %v2354, %v2361
    %v2363 = vmul.f32 %v2362, 1.442695
    %v2364 = vpow.pop %v2363
    %v2365 = vsel %vm192, %v2364, 0.0
    %2366 = vadd.xlane.f32.xlu0 %v2365
    %v2367 = vpop.xlane.xlu0 %2366
    %v2368 = vrcp.pop %v2367
    %v2369 = vmul.f32 %v2364, %v2368
    %v2370 = vpack.c.bf16 %v2369, %v2369
    %2371 = vrot.lane.b32.xlu0 %v1968, 40
    %v2372 = vpop.permute.xlu0 %2371
    %v2374 = vsel %vm192, %v2370, 0
    %v2377 = vsel %vm256, %v2372, 0
    %2379 = vmatprep.subr.bf16.mxu0 0
    %2380 = vmatpush1.bf16.msra.mxu0 %v2377
    %2381 = vmatprep.subr.bf16.mxu0 0
    %2382 = vmatpush1.bf16.msra.mxu0 0
    %2383 = vmatprep.subr.bf16.mxu0 0
    %2384 = vmatpush1.bf16.msra.mxu0 0
    %2385 = vmatprep.subr.bf16.mxu0 0
    %2386 = vmatpush1.bf16.msra.mxu0 0
    %2387 = vmatprep.subr.bf16.mxu0 0
    %2388 = vmatpush1.bf16.msra.mxu0 0
    %2389 = vmatprep.subr.bf16.mxu0 0
    %2390 = vmatpush1.bf16.msra.mxu0 0
    %2391 = vmatprep.subr.bf16.mxu0 0
    %2392 = vmatpush1.bf16.msra.mxu0 0
    %2393 = vmatprep.subr.bf16.mxu0 0
    %2394 = vmatpush1.bf16.msra.mxu0 0
    %2395 = vmatprep.subr.bf16.mxu0 0
    %2396 = vmatpush1.bf16.msra.mxu0 0
    %2397 = vmatprep.subr.bf16.mxu0 0
    %2398 = vmatpush1.bf16.msra.mxu0 0
    %2399 = vmatprep.subr.bf16.mxu0 0
    %2400 = vmatpush1.bf16.msra.mxu0 0
    %2401 = vmatprep.subr.bf16.mxu0 0
    %2402 = vmatpush1.bf16.msra.mxu0 0
    %2403 = vmatprep.subr.bf16.mxu0 0
    %2404 = vmatpush1.bf16.msra.mxu0 0
    %2405 = vmatprep.subr.bf16.mxu0 0
    %2406 = vmatpush1.bf16.msra.mxu0 0
    %2407 = vmatprep.subr.bf16.mxu0 0
    %2408 = vmatpush1.bf16.msra.mxu0 0
    %2409 = vmatprep.subr.bf16.mxu0 0
    %2410 = vmatpush1.bf16.msra.mxu0 0
    %2411 = vmatprep.mubr.bf16.mxu0 0
    %2412 = vmatmul.mubr.bf16.gmra.mrb[0].mxu0 %v2374
    %v2413 = vpop.f32.mrb[0].mxu0
    %v2414 = vadd.f32 0.0, %v2413
    %v2415 = vpop.f32.mrb[0].mxu0
    %v2416 = vpop.f32.mrb[0].mxu0
    %v2417 = vpop.f32.mrb[0].mxu0
    %2418 = vdwg.mxu0
    %2420 = vrot.lane.b32.xlu0 %v2414, 24
    %v2421 = vpop.permute.xlu0 %2420
    %2423 = vst.msk [vmem:[#allocation2 + $0x8] sm:$0xff] %vm647, %v2421
    %v2424 = vld [vmem:[#allocation2] sm:$0xff]
    %v2425 = vld [vmem:[#allocation2 + $0x8] sm:$0xff]
    %s2426 = scalar_lea.vmem %s6, 16
    %v2427 = vld [vmem:[%s2426] sm:$0xf]
    %v2428 = vld [vmem:[%s2426 + $0x4] sm:$0xf]
    %v2429 = vld [vmem:[%s2426 + $0x8] sm:$0xf]
    %v2430 = vld [vmem:[%s2426 + $0xc] sm:$0xf]
    %v2431 = vpack.c.bf16 %v2425, %v2424
    %s2432 = scalar_lea.vmem %s7, 1
    %v2433 = vld [vmem:[%s2432] sm:$0x1]
    %v2435 = vlaneseq
    %v2436 = vshrl.u32 %v2435, 7
    %v2437 = vsub.s32 0, %v2436
    %v2438 = vrot.slane %v2433, %v2437
    %v2444 = vunpack.c.l.b16 %v2427
    %v2445 = vunpack.c.l.b16 %v2428
    %v2446 = vunpack.c.l.b16 %v2429
    %v2447 = vunpack.c.l.b16 %v2430
    %v2448 = vpack.c.b16 %v2445, %v2444
    %v2449 = vpack.c.b16 %v2447, %v2446
    %v2453 = vsel %vm71, %v2431, 0
    %2455 = vmatprep.subr.bf16.mxu0 0
    %2456 = vmatpush1.bf16.msra.mxu0 %v2448
    %2457 = vmatprep.subr.bf16.mxu0 0
    %2458 = vmatpush1.bf16.msra.mxu0 %v2449
    %2459 = vmatprep.subr.bf16.mxu0 0
    %2460 = vmatpush1.bf16.msra.mxu0 0
    %2461 = vmatprep.subr.bf16.mxu0 0
    %2462 = vmatpush1.bf16.msra.mxu0 0
    %2463 = vmatprep.subr.bf16.mxu0 0
    %2464 = vmatpush1.bf16.msra.mxu0 0
    %2465 = vmatprep.subr.bf16.mxu0 0
    %2466 = vmatpush1.bf16.msra.mxu0 0
    %2467 = vmatprep.subr.bf16.mxu0 0
    %2468 = vmatpush1.bf16.msra.mxu0 0
    %2469 = vmatprep.subr.bf16.mxu0 0
    %2470 = vmatpush1.bf16.msra.mxu0 0
    %2471 = vmatprep.subr.bf16.mxu0 0
    %2472 = vmatpush1.bf16.msra.mxu0 0
    %2473 = vmatprep.subr.bf16.mxu0 0
    %2474 = vmatpush1.bf16.msra.mxu0 0
    %2475 = vmatprep.subr.bf16.mxu0 0
    %2476 = vmatpush1.bf16.msra.mxu0 0
    %2477 = vmatprep.subr.bf16.mxu0 0
    %2478 = vmatpush1.bf16.msra.mxu0 0
    %2479 = vmatprep.subr.bf16.mxu0 0
    %2480 = vmatpush1.bf16.msra.mxu0 0
    %2481 = vmatprep.subr.bf16.mxu0 0
    %2482 = vmatpush1.bf16.msra.mxu0 0
    %2483 = vmatprep.subr.bf16.mxu0 0
    %2484 = vmatpush1.bf16.msra.mxu0 0
    %2485 = vmatprep.subr.bf16.mxu0 0
    %2486 = vmatpush1.bf16.msra.mxu0 0
    %2487 = vmatprep.mubr.bf16.mxu0 0
    %2488 = vmatmul.mubr.bf16.gmra.mrb[0].mxu0 %v2453
    %v2489 = vpop.f32.mrb[0].mxu0
    %v2490 = vadd.f32 %v2438, %v2489
    %v2491 = vpop.f32.mrb[0].mxu0
    %v2492 = vpop.f32.mrb[0].mxu0
    %v2493 = vadd.f32 %v2438, %v2492
    %v2494 = vpop.f32.mrb[0].mxu0
    %2495 = vdwg.mxu0
    %v2496 = vadd.f32 %v2490, %v1440
    %v2497 = vadd.f32 %v2493, %v1441
    %s2498 = scalar_lea.vmem %s8, 1
    %v2499 = vld [vmem:[%s2498] sm:$0x1]
    %s2500 = scalar_lea.vmem %s9, 1
    %v2501 = vld [vmem:[%s2500] sm:$0x1]
    %v2502 = vsel %vm71, %v2496, 0.0
    %2503 = vadd.xlane.f32.xlu0 %v2502
    %v2504 = vpop.xlane.xlu0 %2503
    %v2505 = vsel %vm71, %v2497, 0.0
    %2506 = vadd.xlane.f32.xlu0 %v2505
    %v2507 = vpop.xlane.xlu0 %2506
    %v2508 = vmul.f32 %v2504, %v78
    %v2509 = vmul.f32 %v2507, %v78
    %v2510 = vsub.f32 %v2496, %v2508
    %v2511 = vsub.f32 %v2497, %v2509
    %v2512 = vmul.f32 %v2510, %v2510
    %v2513 = vmul.f32 %v2511, %v2511
    %v2514 = vsel %vm71, %v2512, 0.0
    %2515 = vadd.xlane.f32.xlu0 %v2514
    %v2516 = vpop.xlane.xlu0 %2515
    %v2517 = vsel %vm71, %v2513, 0.0
    %2518 = vadd.xlane.f32.xlu0 %v2517
    %v2519 = vpop.xlane.xlu0 %2518
    %v2520 = vmul.f32 %v2516, %v78
    %v2521 = vmul.f32 %v2519, %v78
    %v2522 = vadd.f32 %v2520, 1e-12
    %v2523 = vadd.f32 %v2521, 1e-12
    %v2524 = vrsqrt.pop %v2522
    %v2525 = vrsqrt.pop %v2523
    %v2526 = vmul.f32 %v2510, %v2524
    %v2527 = vmul.f32 %v2511, %v2525
    %v2529 = vlaneseq
    %v2530 = vshrl.u32 %v2529, 7
    %v2531 = vsub.s32 0, %v2530
    %v2532 = vrot.slane %v2499, %v2531
    %v2534 = vmul.f32 %v2526, %v2532
    %v2535 = vmul.f32 %v2527, %v2532
    %v2537 = vlaneseq
    %v2538 = vshrl.u32 %v2537, 7
    %v2539 = vsub.s32 0, %v2538
    %v2540 = vrot.slane %v2501, %v2539
    %v2542 = vadd.f32 %v2534, %v2540
    %v2543 = vadd.f32 %v2535, %v2540
    %s2544 = scalar_lea.vmem %s10, 16
    %v2545 = vld [vmem:[%s2544] sm:$0xf]
    %v2546 = vld [vmem:[%s2544 + $0x4] sm:$0xf]
    %v2547 = vld [vmem:[%s2544 + $0x8] sm:$0xf]
    %v2548 = vld [vmem:[%s2544 + $0xc] sm:$0xf]
    %v2549 = vpack.c.bf16 %v2543, %v2542
    %s2550 = scalar_lea.vmem %s11, 1
    %v2551 = vld [vmem:[%s2550] sm:$0x1]
    %v2553 = vlaneseq
    %v2554 = vshrl.u32 %v2553, 7
    %v2555 = vsub.s32 0, %v2554
    %v2556 = vrot.slane %v2551, %v2555
    %v2562 = vunpack.c.l.b16 %v2545
    %v2563 = vunpack.c.l.b16 %v2546
    %v2564 = vunpack.c.l.b16 %v2547
    %v2565 = vunpack.c.l.b16 %v2548
    %v2566 = vpack.c.b16 %v2563, %v2562
    %v2567 = vpack.c.b16 %v2565, %v2564
    %v2571 = vsel %vm71, %v2549, 0
    %2573 = vmatprep.subr.bf16.mxu0 0
    %2574 = vmatpush1.bf16.msra.mxu0 %v2566
    %2575 = vmatprep.subr.bf16.mxu0 0
    %2576 = vmatpush1.bf16.msra.mxu0 %v2567
    %2577 = vmatprep.subr.bf16.mxu0 0
    %2578 = vmatpush1.bf16.msra.mxu0 0
    %2579 = vmatprep.subr.bf16.mxu0 0
    %2580 = vmatpush1.bf16.msra.mxu0 0
    %2581 = vmatprep.subr.bf16.mxu0 0
    %2582 = vmatpush1.bf16.msra.mxu0 0
    %2583 = vmatprep.subr.bf16.mxu0 0
    %2584 = vmatpush1.bf16.msra.mxu0 0
    %2585 = vmatprep.subr.bf16.mxu0 0
    %2586 = vmatpush1.bf16.msra.mxu0 0
    %2587 = vmatprep.subr.bf16.mxu0 0
    %2588 = vmatpush1.bf16.msra.mxu0 0
    %2589 = vmatprep.subr.bf16.mxu0 0
    %2590 = vmatpush1.bf16.msra.mxu0 0
    %2591 = vmatprep.subr.bf16.mxu0 0
    %2592 = vmatpush1.bf16.msra.mxu0 0
    %2593 = vmatprep.subr.bf16.mxu0 0
    %2594 = vmatpush1.bf16.msra.mxu0 0
    %2595 = vmatprep.subr.bf16.mxu0 0
    %2596 = vmatpush1.bf16.msra.mxu0 0
    %2597 = vmatprep.subr.bf16.mxu0 0
    %2598 = vmatpush1.bf16.msra.mxu0 0
    %2599 = vmatprep.subr.bf16.mxu0 0
    %2600 = vmatpush1.bf16.msra.mxu0 0
    %2601 = vmatprep.subr.bf16.mxu0 0
    %2602 = vmatpush1.bf16.msra.mxu0 0
    %2603 = vmatprep.subr.bf16.mxu0 0
    %2604 = vmatpush1.bf16.msra.mxu0 0
    %2605 = vmatprep.mubr.bf16.mxu0 0
    %2606 = vmatmul.mubr.bf16.gmra.mrb[0].mxu0 %v2571
    %v2607 = vpop.f32.mrb[0].mxu0
    %v2608 = vadd.f32 %v2556, %v2607
    %v2609 = vpop.f32.mrb[0].mxu0
    %v2610 = vpop.f32.mrb[0].mxu0
    %v2611 = vadd.f32 %v2556, %v2610
    %v2612 = vpop.f32.mrb[0].mxu0
    %2613 = vdwg.mxu0
    %v2614 = vmul.f32 %v2608, 0.5
    %v2615 = vmul.f32 %v2611, 0.5
    %v2616 = vmul.f32 %v2608, 0.044715
    %v2617 = vmul.f32 %v2611, 0.044715
    %v2618 = vmul.f32 %v2616, %v2608
    %v2619 = vmul.f32 %v2617, %v2611
    %v2620 = vmul.f32 %v2618, %v2608
    %v2621 = vmul.f32 %v2619, %v2611
    %v2622 = vadd.f32 %v2608, %v2620
    %v2623 = vadd.f32 %v2611, %v2621
    %v2624 = vmul.f32 %v2622, 0.7978846
    %v2625 = vmul.f32 %v2623, 0.7978846
    %v2626 = vtanh.pop %v2624
    %v2627 = vtanh.pop %v2625
    %v2628 = vadd.f32 %v2626, 1.0
    %v2629 = vadd.f32 %v2627, 1.0
    %v2630 = vmul.f32 %v2614, %v2628
    %v2631 = vmul.f32 %v2615, %v2629
    %s2632 = scalar_lea.vmem %s12, 32
    %v2633 = vld [vmem:[%s2632] sm:$0xf]
    %v2634 = vld [vmem:[%s2632 + $0x4] sm:$0xf]
    %v2635 = vld [vmem:[%s2632 + $0x8] sm:$0xf]
    %v2636 = vld [vmem:[%s2632 + $0xc] sm:$0xf]
    %v2637 = vld [vmem:[%s2632 + $0x10] sm:$0xf]
    %v2638 = vld [vmem:[%s2632 + $0x14] sm:$0xf]
    %v2639 = vld [vmem:[%s2632 + $0x18] sm:$0xf]
    %v2640 = vld [vmem:[%s2632 + $0x1c] sm:$0xf]
    %v2641 = vpack.c.bf16 %v2631, %v2630
    %s2642 = scalar_lea.vmem %s13, 1
    %v2643 = vld [vmem:[%s2642] sm:$0x1]
    %v2645 = vlaneseq
    %v2646 = vshrl.u32 %v2645, 7
    %v2647 = vsub.s32 0, %v2646
    %v2648 = vrot.slane %v2643, %v2647
    %v2658 = vunpack.c.l.b16 %v2633
    %v2659 = vunpack.c.l.b16 %v2634
    %v2660 = vunpack.c.l.b16 %v2635
    %v2661 = vunpack.c.l.b16 %v2636
    %v2662 = vunpack.c.l.b16 %v2637
    %v2663 = vunpack.c.l.b16 %v2638
    %v2664 = vunpack.c.l.b16 %v2639
    %v2665 = vunpack.c.l.b16 %v2640
    %v2666 = vpack.c.b16 %v2659, %v2658
    %v2667 = vpack.c.b16 %v2661, %v2660
    %v2668 = vpack.c.b16 %v2663, %v2662
    %v2669 = vpack.c.b16 %v2665, %v2664
    %v2675 = vsel %vm1351, %v2641, 0
    %2677 = vmatprep.subr.bf16.mxu0 0
    %2678 = vmatpush1.bf16.msra.mxu0 %v2666
    %2679 = vmatprep.subr.bf16.mxu0 0
    %2680 = vmatpush1.bf16.msra.mxu0 %v2667
    %2681 = vmatprep.subr.bf16.mxu0 0
    %2682 = vmatpush1.bf16.msra.mxu0 %v2668
    %2683 = vmatprep.subr.bf16.mxu0 0
    %2684 = vmatpush1.bf16.msra.mxu0 %v2669
    %2685 = vmatprep.subr.bf16.mxu0 0
    %2686 = vmatpush1.bf16.msra.mxu0 0
    %2687 = vmatprep.subr.bf16.mxu0 0
    %2688 = vmatpush1.bf16.msra.mxu0 0
    %2689 = vmatprep.subr.bf16.mxu0 0
    %2690 = vmatpush1.bf16.msra.mxu0 0
    %2691 = vmatprep.subr.bf16.mxu0 0
    %2692 = vmatpush1.bf16.msra.mxu0 0
    %2693 = vmatprep.subr.bf16.mxu0 0
    %2694 = vmatpush1.bf16.msra.mxu0 0
    %2695 = vmatprep.subr.bf16.mxu0 0
    %2696 = vmatpush1.bf16.msra.mxu0 0
    %2697 = vmatprep.subr.bf16.mxu0 0
    %2698 = vmatpush1.bf16.msra.mxu0 0
    %2699 = vmatprep.subr.bf16.mxu0 0
    %2700 = vmatpush1.bf16.msra.mxu0 0
    %2701 = vmatprep.subr.bf16.mxu0 0
    %2702 = vmatpush1.bf16.msra.mxu0 0
    %2703 = vmatprep.subr.bf16.mxu0 0
    %2704 = vmatpush1.bf16.msra.mxu0 0
    %2705 = vmatprep.subr.bf16.mxu0 0
    %2706 = vmatpush1.bf16.msra.mxu0 0
    %2707 = vmatprep.subr.bf16.mxu0 0
    %2708 = vmatpush1.bf16.msra.mxu0 0
    %2709 = vmatprep.mubr.bf16.mxu0 0
    %2710 = vmatmul.mubr.bf16.gmra.mrb[0].mxu0 %v2675
    %v2711 = vpop.f32.mrb[0].mxu0
    %v2712 = vadd.f32 %v2648, %v2711
    %v2713 = vpop.f32.mrb[0].mxu0
    %v2714 = vpop.f32.mrb[0].mxu0
    %v2715 = vadd.f32 %v2648, %v2714
    %v2716 = vpop.f32.mrb[0].mxu0
    %2717 = vdwg.mxu0
    %v2718 = vadd.f32 %v2712, %v2542
    %v2719 = vadd.f32 %v2715, %v2543
    %s2720 = scalar_lea.vmem %s14, 1
    %v2721 = vld [vmem:[%s2720] sm:$0x1]
    %s2722 = scalar_lea.vmem %s15, 1
    %v2723 = vld [vmem:[%s2722] sm:$0x1]
    %v2724 = vsel %vm71, %v2718, 0.0
    %2725 = vadd.xlane.f32.xlu0 %v2724
    %v2726 = vpop.xlane.xlu0 %2725
    %v2727 = vsel %vm71, %v2719, 0.0
    %2728 = vadd.xlane.f32.xlu0 %v2727
    %v2729 = vpop.xlane.xlu0 %2728
    %v2730 = vmul.f32 %v2726, %v78
    %v2731 = vmul.f32 %v2729, %v78
    %v2732 = vsub.f32 %v2718, %v2730
    %v2733 = vsub.f32 %v2719, %v2731
    %v2734 = vmul.f32 %v2732, %v2732
    %v2735 = vmul.f32 %v2733, %v2733
    %v2736 = vsel %vm71, %v2734, 0.0
    %2737 = vadd.xlane.f32.xlu0 %v2736
    %v2738 = vpop.xlane.xlu0 %2737
    %v2739 = vsel %vm71, %v2735, 0.0
    %2740 = vadd.xlane.f32.xlu0 %v2739
    %v2741 = vpop.xlane.xlu0 %2740
    %v2742 = vmul.f32 %v2738, %v78
    %v2743 = vmul.f32 %v2741, %v78
    %v2744 = vadd.f32 %v2742, 1e-12
    %v2745 = vadd.f32 %v2743, 1e-12
    %v2746 = vrsqrt.pop %v2744
    %v2747 = vrsqrt.pop %v2745
    %v2748 = vmul.f32 %v2732, %v2746
    %v2749 = vmul.f32 %v2733, %v2747
    %v2751 = vlaneseq
    %v2752 = vshrl.u32 %v2751, 7
    %v2753 = vsub.s32 0, %v2752
    %v2754 = vrot.slane %v2721, %v2753
    %v2756 = vmul.f32 %v2748, %v2754
    %v2757 = vmul.f32 %v2749, %v2754
    %v2759 = vlaneseq
    %v2760 = vshrl.u32 %v2759, 7
    %v2761 = vsub.s32 0, %v2760
    %v2762 = vrot.slane %v2723, %v2761
    %v2764 = vadd.f32 %v2756, %v2762
    %v2765 = vadd.f32 %v2757, %v2762
    %v2767 = vrot.slane %v2765, 7
    %vm2769 = vcmask 1040384
    %v2770 = vsel %vm2769, %v2764, %v2767
    %v2771 = vld [vmem:[%s16] sm:$0xf]
    %v2772 = vld [vmem:[%s16 + $0x4] sm:$0xf]
    %v2773 = vld [vmem:[%s16 + $0x8] sm:$0xf]
    %v2774 = vld [vmem:[%s16 + $0xc] sm:$0xf]
    %v2775 = vpack.c.bf16 %v2770, %v2770
    %v2776 = vld [vmem:[%s17] sm:$0x1]
    %v2778 = vlaneseq
    %v2779 = vshrl.u32 %v2778, 7
    %v2780 = vsub.s32 0, %v2779
    %v2781 = vrot.slane %v2776, %v2780
    %v2787 = vunpack.c.l.b16 %v2771
    %v2788 = vunpack.c.l.b16 %v2772
    %v2789 = vunpack.c.l.b16 %v2773
    %v2790 = vunpack.c.l.b16 %v2774
    %v2791 = vpack.c.b16 %v2788, %v2787
    %v2792 = vpack.c.b16 %v2790, %v2789
    %v2796 = vsel %vm71, %v2775, 0
    %2798 = vmatprep.subr.bf16.mxu0 0
    %2799 = vmatpush1.bf16.msra.mxu0 %v2791
    %2800 = vmatprep.subr.bf16.mxu0 0
    %2801 = vmatpush1.bf16.msra.mxu0 %v2792
    %2802 = vmatprep.subr.bf16.mxu0 0
    %2803 = vmatpush1.bf16.msra.mxu0 0
    %2804 = vmatprep.subr.bf16.mxu0 0
    %2805 = vmatpush1.bf16.msra.mxu0 0
    %2806 = vmatprep.subr.bf16.mxu0 0
    %2807 = vmatpush1.bf16.msra.mxu0 0
    %2808 = vmatprep.subr.bf16.mxu0 0
    %2809 = vmatpush1.bf16.msra.mxu0 0
    %2810 = vmatprep.subr.bf16.mxu0 0
    %2811 = vmatpush1.bf16.msra.mxu0 0
    %2812 = vmatprep.subr.bf16.mxu0 0
    %2813 = vmatpush1.bf16.msra.mxu0 0
    %2814 = vmatprep.subr.bf16.mxu0 0
    %2815 = vmatpush1.bf16.msra.mxu0 0
    %2816 = vmatprep.subr.bf16.mxu0 0
    %2817 = vmatpush1.bf16.msra.mxu0 0
    %2818 = vmatprep.subr.bf16.mxu0 0
    %2819 = vmatpush1.bf16.msra.mxu0 0
    %2820 = vmatprep.subr.bf16.mxu0 0
    %2821 = vmatpush1.bf16.msra.mxu0 0
    %2822 = vmatprep.subr.bf16.mxu0 0
    %2823 = vmatpush1.bf16.msra.mxu0 0
    %2824 = vmatprep.subr.bf16.mxu0 0
    %2825 = vmatpush1.bf16.msra.mxu0 0
    %2826 = vmatprep.subr.bf16.mxu0 0
    %2827 = vmatpush1.bf16.msra.mxu0 0
    %2828 = vmatprep.subr.bf16.mxu0 0
    %2829 = vmatpush1.bf16.msra.mxu0 0
    %2830 = vmatprep.mubr.bf16.mxu0 0
    %2831 = vmatmul.mubr.bf16.gmra.mrb[0].mxu0 %v2796
    %v2832 = vpop.f32.mrb[0].mxu0
    %v2833 = vadd.f32 %v2781, %v2832
    %v2834 = vpop.f32.mrb[0].mxu0
    %v2835 = vpop.f32.mrb[0].mxu0
    %v2836 = vpop.f32.mrb[0].mxu0
    %2837 = vdwg.mxu0
    %v2838 = vtanh.pop %v2833
    %v2839 = vld [vmem:[%s18] sm:$0xf]
    %v2840 = vld [vmem:[%s18 + $0x4] sm:$0xf]
    %v2841 = vld [vmem:[%s18 + $0x8] sm:$0xf]
    %v2842 = vld [vmem:[%s18 + $0xc] sm:$0xf]
    %v2843 = vpack.c.bf16 %v2838, %v2838
    %v2844 = vld [vmem:[%s19] sm:$0x1]
    %v2846 = vlaneseq
    %v2847 = vshrl.u32 %v2846, 7
    %v2848 = vsub.s32 0, %v2847
    %v2849 = vrot.slane %v2844, %v2848
    %v2855 = vunpack.c.l.b16 %v2839
    %v2856 = vunpack.c.l.b16 %v2840
    %v2857 = vunpack.c.l.b16 %v2841
    %v2858 = vunpack.c.l.b16 %v2842
    %v2859 = vpack.c.b16 %v2856, %v2855
    %v2860 = vpack.c.b16 %v2858, %v2857
    %v2864 = vsel %vm71, %v2843, 0
    %2866 = vmatprep.subr.bf16.mxu0 0
    %2867 = vmatpush1.bf16.msra.mxu0 %v2859
    %2868 = vmatprep.subr.bf16.mxu0 0
    %2869 = vmatpush1.bf16.msra.mxu0 %v2860
    %2870 = vmatprep.subr.bf16.mxu0 0
    %2871 = vmatpush1.bf16.msra.mxu0 0
    %2872 = vmatprep.subr.bf16.mxu0 0
    %2873 = vmatpush1.bf16.msra.mxu0 0
    %2874 = vmatprep.subr.bf16.mxu0 0
    %2875 = vmatpush1.bf16.msra.mxu0 0
    %2876 = vmatprep.subr.bf16.mxu0 0
    %2877 = vmatpush1.bf16.msra.mxu0 0
    %2878 = vmatprep.subr.bf16.mxu0 0
    %2879 = vmatpush1.bf16.msra.mxu0 0
    %2880 = vmatprep.subr.bf16.mxu0 0
    %2881 = vmatpush1.bf16.msra.mxu0 0
    %2882 = vmatprep.subr.bf16.mxu0 0
    %2883 = vmatpush1.bf16.msra.mxu0 0
    %2884 = vmatprep.subr.bf16.mxu0 0
    %2885 = vmatpush1.bf16.msra.mxu0 0
    %2886 = vmatprep.subr.bf16.mxu0 0
    %2887 = vmatpush1.bf16.msra.mxu0 0
    %2888 = vmatprep.subr.bf16.mxu0 0
    %2889 = vmatpush1.bf16.msra.mxu0 0
    %2890 = vmatprep.subr.bf16.mxu0 0
    %2891 = vmatpush1.bf16.msra.mxu0 0
    %2892 = vmatprep.subr.bf16.mxu0 0
    %2893 = vmatpush1.bf16.msra.mxu0 0
    %2894 = vmatprep.subr.bf16.mxu0 0
    %2895 = vmatpush1.bf16.msra.mxu0 0
    %2896 = vmatprep.subr.bf16.mxu0 0
    %2897 = vmatpush1.bf16.msra.mxu0 0
    %2898 = vmatprep.mubr.bf16.mxu0 0
    %2899 = vmatmul.mubr.bf16.gmra.mrb[0].mxu0 %v2864
    %v2900 = vpop.f32.mrb[0].mxu0
    %v2901 = vadd.f32 %v2849, %v2900
    %v2902 = vpop.f32.mrb[0].mxu0
    %v2903 = vpop.f32.mrb[0].mxu0
    %v2904 = vpop.f32.mrb[0].mxu0
    %2905 = vdwg.mxu0
    %2906 = vst [vmem:[#allocation3] sm:$0x3] %v2901
    // Predicated region
    $region82: #{dental_forward.1} parent=1 // pred_check
      _
    $region83: #{dental_forward.1} parent=1 // pred_check_branch
      %2908 = sbr.rel (0) target = $region85
    $region84: #{dental_forward.1} parent=1 // pred_region
      %s2910 = ssub.s32 32, 32
      %2911 = vsyncadd [#allocation4], %s2910
      %s2913 = sshll.u32 [#allocation3], 4
      %s2914 = int_to_ptr.vmem [resolvable:$true] %s2913
      %2916 = dma.vmem_to_hbm [thread:$0]  %s2914, 32, %s20, [#allocation4]
    $region85: #{dental_forward.1} parent=1 // pred_fallthru
      _
    // Predicated region
    $region86: #{dental_forward.1} parent=1 // pred_check
      _
    $region87: #{dental_forward.1} parent=1 // pred_check_branch
      %2918 = sbr.rel (0) target = $region89
    $region88: #{dental_forward.1} parent=1 // pred_region
      %2919 = dma.done [#allocation4], 32
    $region89: #{dental_forward.1} parent=1 // pred_fallthru
      _
    %2920 = vsyncpa [#allocation4], 1

</llo_original>
